<compile_context>
chip_gen: v6e
topology: v6e:2x2x1
jax: 0.10.0
libtpu: 0.0.40
codegen_flags: <defaults>
</compile_context>

<pallas_src>
import jax
import jax.numpy as jnp
import numpy as np
from jax.experimental import pallas as pl
from jax.experimental.pallas import tpu as pltpu

# ----------------------------- model dims -----------------------------------
LATENT_DIM = 32                  # opt.latent_dim (small, chosen for the demo)
ENC_DIM = 16                     # opt.enc_dim
IN_DIM = ENC_DIM + LATENT_DIM    # 48  (unpadded gen_input width)
IN_PAD = 128                     # lane-aligned, zero-padded input width
IMG_DIM = 100                    # int(np.prod(img_shape)), img_shape = (100,)
OUT_PAD = 128                    # lane-aligned, zero-padded output width
H1, H2, H3, H4 = 128, 256, 512, 1024
BN_EPS = 0.8                     # nn.BatchNorm1d(out_feat, 0.8) -> eps = 0.8
LEAKY_SLOPE = 0.2

# Set to jnp.bfloat16 on v6e/v7x at MXU-saturating batch sizes (loosen the
# numerical check accordingly); f32 keeps the tight reference comparison here.
MATMUL_IN_DTYPE = jnp.float32


# ------------------------------ Pallas kernel --------------------------------
def _leaky_relu(x):
    # max(x, a*x) valid since 0 < a < 1; cheaper than cmp+select on the VPU.
    return jnp.maximum(x, LEAKY_SLOPE * x)


def _mm(a, w_ref):
    return jnp.dot(a.astype(MATMUL_IN_DTYPE), w_ref[...].astype(MATMUL_IN_DTYPE),
                   preferred_element_type=jnp.float32)


def generator_kernel(
    x_ref,                                   # (B, IN_PAD)  zero-padded input
    w1_ref, b1_ref,                          # Linear(IN_PAD, 128)  (rows 48.. are 0)
    w2_ref, g2_ref, be2_ref,                 # Linear(128, 256) + BN  (bias cancelled)
    w3_ref, g3_ref, be3_ref,                 # Linear(256, 512) + BN  (bias cancelled)
    w4_ref, g4_ref, be4_ref,                 # Linear(512, 1024) + BN (bias cancelled)
    w5_ref, b5_ref,                          # Linear(1024, OUT_PAD) (cols 100.. are 0)
    out_ref,                                 # (B, OUT_PAD)
):
    def bn_block(h, w_ref, g_ref, be_ref):
        # Linear bias omitted: BatchNorm's mean subtraction cancels any
        # per-feature constant exactly, so the result is identical.
        h = _mm(h, w_ref)
        # One-pass training-mode batch stats (biased variance), fused into a
        # single per-feature scale/shift.
        mean = jnp.mean(h, axis=0, keepdims=True)
        var = jnp.mean(h * h, axis=0, keepdims=True) - mean * mean
        scale = g_ref[...] * jax.lax.rsqrt(var + BN_EPS)
        shift = be_ref[...] - mean * scale
        return _leaky_relu(h * scale + shift)

    x = x_ref[...]

    # block(in, 128, normalize=False): Linear -> LeakyReLU
    h = _leaky_relu(_mm(x, w1_ref) + b1_ref[...])

    # block(128, 256), block(256, 512), block(512, 1024)
    h = bn_block(h, w2_ref, g2_ref, be2_ref)
    h = bn_block(h, w3_ref, g3_ref, be3_ref)
    h = bn_block(h, w4_ref, g4_ref, be4_ref)

    # final Linear(1024, OUT_PAD) — lane-dense (128-wide) unmasked store
    out = _mm(h, w5_ref) + b5_ref[...]
    out_ref[...] = out.astype(out_ref.dtype)


@jax.jit
def generator_pallas(gen_input_padded, kernel_params):
    B = gen_input_padded.shape[0]
    args = (gen_input_padded,) + tuple(kernel_params)

    weight_bytes = 4 * sum(int(np.prod(p.shape)) for p in kernel_params)
    cost = pl.CostEstimate(
        flops=2 * B * (IN_PAD * H1 + H1 * H2 + H2 * H3 + H3 * H4 + H4 * OUT_PAD),
        transcendentals=H2 + H3 + H4,            # one rsqrt per BN feature
        bytes_accessed=4 * B * (IN_PAD + OUT_PAD) + weight_bytes,
    )

    # No grid: single invocation, whole arrays resident in VMEM, no pipelining
    # (and hence no pointless double-buffering of the weights).
    return pl.pallas_call(
        generator_kernel,
        out_shape=jax.ShapeDtypeStruct((B, OUT_PAD), jnp.float32),
        cost_estimate=cost,
        compiler_params=pltpu.CompilerParams(vmem_limit_bytes=32 << 20),
    )(*args)


# ------------------------------ glue / wrapper --------------------------------
def generator_forward(z, labels, kernel_params, dest_labels=None):
    """Mirrors Generator.forward semantics.

    z:           (B, latent_dim)
    labels:      (G, enc_dim)   with B % G == 0  (each label repeated B//G times)
    dest_labels: (G, enc_dim) or None
    """
    B = z.shape[0]
    G = labels.shape[0]
    rep = B // G

    def expand(l):
        # l.unsqueeze(1).expand(-1, rep, -1).reshape(B, -1)
        return jnp.broadcast_to(l[:, None, :], (G, rep, l.shape[-1])).reshape(B, -1)

    labels_e = expand(labels)
    if dest_labels is not None:
        enc = 0.5 * labels_e + 0.5 * expand(dest_labels)
        gen_input = jnp.concatenate([enc, z], axis=-1)
    else:
        gen_input = jnp.concatenate([labels_e, z], axis=-1)

    # Zero-pad features 48 -> 128 so all five matmuls are (8,128)-aligned.
    gen_input_p = jnp.pad(gen_input, ((0, 0), (0, IN_PAD - IN_DIM)))
    img = generator_pallas(gen_input_p, kernel_params)
    # Slice the zero-padded output columns back off; img.view(B, *img_shape).
    return img[:, :IMG_DIM].reshape(B, *(IMG_DIM,))


# ------------------------------ param init -----------------------------------
def init_params(key):
    """PyTorch-shaped (unpadded) parameters, reference layout."""
    dims = [(IN_DIM, H1), (H1, H2), (H2, H3), (H3, H4), (H4, IMG_DIM)]
    keys = jax.random.split(key, 2 * len(dims))
    params = []
    for li, (din, dout) in enumerate(dims):
        bound = 1.0 / np.sqrt(din)  # PyTorch Linear default init range
        w = jax.random.uniform(keys[2 * li], (din, dout), jnp.float32, -bound, bound)
        b = jax.random.uniform(keys[2 * li + 1], (1, dout), jnp.float32, -bound, bound)
        params += [w, b]
        if li in (1, 2, 3):  # layers followed by BatchNorm1d
            params += [jnp.ones((1, dout), jnp.float32),   # gamma
                       jnp.zeros((1, dout), jnp.float32)]  # beta
    return tuple(params)


def kernel_params_from(params):
    """Pad w1 rows (48->128) and w5/b5 cols (100->128); drop b2/b3/b4 (the
    Linear bias of any layer feeding training-mode BatchNorm cancels exactly)."""
    (w1, b1, w2, _b2, g2, be2, w3, _b3, g3, be3, w4, _b4, g4, be4, w5, b5) = params
    w1p = jnp.pad(w1, ((0, IN_PAD - IN_DIM), (0, 0)))
    w5p = jnp.pad(w5, ((0, 0), (0, OUT_PAD - IMG_DIM)))
    b5p = jnp.pad(b5, ((0, 0), (0, OUT_PAD - IMG_DIM)))
    return (w1p, b1, w2, g2, be2, w3, g3, be3, w4, g4, be4, w5p, b5p)


# ------------------------------ reference (plain JAX) -------------------------
def reference_forward(gen_input, params):
    """Independent formulation (two-pass BN variance, where-based LeakyReLU,
    biases included everywhere, exactly as the PyTorch module computes it)."""
    (w1, b1, w2, b2, g2, be2, w3, b3, g3, be3, w4, b4, g4, be4, w5, b5) = params

    def lrelu(x):
        return jnp.where(x > 0, x, LEAKY_SLOPE * x)

    def bn(h, g, be):
        mean = jnp.mean(h, axis=0, keepdims=True)
        var = jnp.mean(jnp.square(h - mean), axis=0, keepdims=True)
        return (h - mean) * jax.lax.rsqrt(var + BN_EPS) * g + be

    h = lrelu(gen_input @ w1 + b1)
    h = lrelu(bn(h @ w2 + b2, g2, be2))
    h = lrelu(bn(h @ w3 + b3, g3, be3))
    h = lrelu(bn(h @ w4 + b4, g4, be4))
    return h @ w5 + b5


# --------------------------------- main ---------------------------------------
if __name__ == "__main__":
    key = jax.random.PRNGKey(0)
    k_param, k_z, k_lab, k_dst = jax.random.split(key, 4)

    B, G = 8, 4  # batch of 8, 4 label groups -> each label repeated 2x
    params = init_params(k_param)
    kparams = kernel_params_from(params)
    z = jax.random.normal(k_z, (B, LATENT_DIM), jnp.float32)
    labels = jax.random.normal(k_lab, (G, ENC_DIM), jnp.float32)
    dest_labels = jax.random.normal(k_dst, (G, ENC_DIM), jnp.float32)

    # ---- path 1: labels only ----
    img = generator_forward(z, labels, kparams)
    img = jax.block_until_ready(img)
    assert img.shape == (B, IMG_DIM)

    labels_e = jnp.broadcast_to(labels[:, None, :], (G, B // G, ENC_DIM)).reshape(B, -1)
    gen_input = jnp.concatenate([labels_e, z], axis=-1)
    ref = reference_forward(gen_input, params)
    np.testing.assert_allclose(np.asarray(img), np.asarray(ref), rtol=1e-3, atol=1e-3)

    # ---- path 2: labels + dest_labels (enc = 0.5*labels + 0.5*dest) ----
    img2 = generator_forward(z, labels, kparams, dest_labels=dest_labels)
    img2 = jax.block_until_ready(img2)
    dest_e = jnp.broadcast_to(dest_labels[:, None, :], (G, B // G, ENC_DIM)).reshape(B, -1)
    gen_input2 = jnp.concatenate([0.5 * labels_e + 0.5 * dest_e, z], axis=-1)
    ref2 = reference_forward(gen_input2, params)
    np.testing.assert_allclose(np.asarray(img2), np.asarray(ref2), rtol=1e-3, atol=1e-3)

    print("KERNEL_OK")
</pallas_src>

<mosaic_0001>
module attributes {stable_mosaic.version = 11 : i64} {
  func.func @generator_kernel(%arg0: memref<8x128xf32, #tpu.memory_space<vmem>>, %arg1: memref<128x128xf32, #tpu.memory_space<vmem>>, %arg2: memref<1x128xf32, #tpu.memory_space<vmem>>, %arg3: memref<128x256xf32, #tpu.memory_space<vmem>>, %arg4: memref<1x256xf32, #tpu.memory_space<vmem>>, %arg5: memref<1x256xf32, #tpu.memory_space<vmem>>, %arg6: memref<256x512xf32, #tpu.memory_space<vmem>>, %arg7: memref<1x512xf32, #tpu.memory_space<vmem>>, %arg8: memref<1x512xf32, #tpu.memory_space<vmem>>, %arg9: memref<512x1024xf32, #tpu.memory_space<vmem>>, %arg10: memref<1x1024xf32, #tpu.memory_space<vmem>>, %arg11: memref<1x1024xf32, #tpu.memory_space<vmem>>, %arg12: memref<1024x128xf32, #tpu.memory_space<vmem>>, %arg13: memref<1x128xf32, #tpu.memory_space<vmem>>, %arg14: memref<8x128xf32, #tpu.memory_space<vmem>>) attributes {dimension_semantics = [], scalar_prefetch = 0 : i64, scratch_operands = 0 : i64, tpu.core_type = #tpu.core_type<tc>} {
    %c0 = arith.constant 0 : index
    %c0_0 = arith.constant 0 : index
    %0 = vector.load %arg0[%c0, %c0_0] : memref<8x128xf32, #tpu.memory_space<vmem>>, vector<8x128xf32>
    %c0_1 = arith.constant 0 : index
    %c0_2 = arith.constant 0 : index
    %1 = vector.load %arg1[%c0_1, %c0_2] : memref<128x128xf32, #tpu.memory_space<vmem>>, vector<128x128xf32>
    %cst = arith.constant dense<0.000000e+00> : vector<8x128xf32>
    %2 = tpu.matmul %0, %1, %cst {dimension_numbers = #tpu.dot_dimension_numbers<[1], [0], [0], [1], [0, 0, 1, 1], [], []>} : vector<8x128xf32>, vector<128x128xf32>, vector<8x128xf32> -> vector<8x128xf32>
    %c0_3 = arith.constant 0 : index
    %c0_4 = arith.constant 0 : index
    %3 = vector.load %arg2[%c0_3, %c0_4] : memref<1x128xf32, #tpu.memory_space<vmem>>, vector<1x128xf32>
    %4 = vector.broadcast %3 : vector<1x128xf32> to vector<8x128xf32>
    %5 = arith.addf %2, %4 : vector<8x128xf32>
    %cst_5 = arith.constant 2.000000e-01 : f32
    %6 = vector.broadcast %cst_5 : f32 to vector<8x128xf32>
    %7 = arith.mulf %6, %5 : vector<8x128xf32>
    %8 = arith.maximumf %5, %7 : vector<8x128xf32>
    %c0_6 = arith.constant 0 : index
    %c0_7 = arith.constant 0 : index
    %9 = vector.load %arg3[%c0_6, %c0_7] : memref<128x256xf32, #tpu.memory_space<vmem>>, vector<128x256xf32>
    %cst_8 = arith.constant dense<0.000000e+00> : vector<8x256xf32>
    %10 = tpu.matmul %8, %9, %cst_8 {dimension_numbers = #tpu.dot_dimension_numbers<[1], [0], [0], [1], [0, 0, 1, 1], [], []>} : vector<8x128xf32>, vector<128x256xf32>, vector<8x256xf32> -> vector<8x256xf32>
    %cst_9 = arith.constant dense<0.000000e+00> : vector<256xf32>
    %11 = vector.multi_reduction <add>, %10, %cst_9 [0] : vector<8x256xf32> to vector<256xf32>
    %12 = vector.shape_cast %11 : vector<256xf32> to vector<1x256xf32>
    %cst_10 = arith.constant 8.000000e+00 : f32
    %13 = vector.broadcast %cst_10 : f32 to vector<1x256xf32>
    %14 = arith.divf %12, %13 : vector<1x256xf32>
    %15 = arith.mulf %10, %10 : vector<8x256xf32>
    %cst_11 = arith.constant dense<0.000000e+00> : vector<256xf32>
    %16 = vector.multi_reduction <add>, %15, %cst_11 [0] : vector<8x256xf32> to vector<256xf32>
    %17 = vector.shape_cast %16 : vector<256xf32> to vector<1x256xf32>
    %cst_12 = arith.constant 8.000000e+00 : f32
    %18 = vector.broadcast %cst_12 : f32 to vector<1x256xf32>
    %19 = arith.divf %17, %18 : vector<1x256xf32>
    %20 = arith.mulf %14, %14 : vector<1x256xf32>
    %21 = arith.subf %19, %20 : vector<1x256xf32>
    %c0_13 = arith.constant 0 : index
    %c0_14 = arith.constant 0 : index
    %22 = vector.load %arg4[%c0_13, %c0_14] : memref<1x256xf32, #tpu.memory_space<vmem>>, vector<1x256xf32>
    %cst_15 = arith.constant 8.000000e-01 : f32
    %23 = vector.broadcast %cst_15 : f32 to vector<1x256xf32>
    %24 = arith.addf %21, %23 : vector<1x256xf32>
    %25 = math.rsqrt %24 : vector<1x256xf32>
    %26 = arith.mulf %22, %25 : vector<1x256xf32>
    %c0_16 = arith.constant 0 : index
    %c0_17 = arith.constant 0 : index
    %27 = vector.load %arg5[%c0_16, %c0_17] : memref<1x256xf32, #tpu.memory_space<vmem>>, vector<1x256xf32>
    %28 = arith.mulf %14, %26 : vector<1x256xf32>
    %29 = arith.subf %27, %28 : vector<1x256xf32>
    %30 = vector.broadcast %26 : vector<1x256xf32> to vector<8x256xf32>
    %31 = arith.mulf %10, %30 : vector<8x256xf32>
    %32 = vector.broadcast %29 : vector<1x256xf32> to vector<8x256xf32>
    %33 = arith.addf %31, %32 : vector<8x256xf32>
    %cst_18 = arith.constant 2.000000e-01 : f32
    %34 = vector.broadcast %cst_18 : f32 to vector<8x256xf32>
    %35 = arith.mulf %34, %33 : vector<8x256xf32>
    %36 = arith.maximumf %33, %35 : vector<8x256xf32>
    %c0_19 = arith.constant 0 : index
    %c0_20 = arith.constant 0 : index
    %37 = vector.load %arg6[%c0_19, %c0_20] : memref<256x512xf32, #tpu.memory_space<vmem>>, vector<256x512xf32>
    %cst_21 = arith.constant dense<0.000000e+00> : vector<8x512xf32>
    %38 = tpu.matmul %36, %37, %cst_21 {dimension_numbers = #tpu.dot_dimension_numbers<[1], [0], [0], [1], [0, 0, 1, 1], [], []>} : vector<8x256xf32>, vector<256x512xf32>, vector<8x512xf32> -> vector<8x512xf32>
    %cst_22 = arith.constant dense<0.000000e+00> : vector<512xf32>
    %39 = vector.multi_reduction <add>, %38, %cst_22 [0] : vector<8x512xf32> to vector<512xf32>
    %40 = vector.shape_cast %39 : vector<512xf32> to vector<1x512xf32>
    %cst_23 = arith.constant 8.000000e+00 : f32
    %41 = vector.broadcast %cst_23 : f32 to vector<1x512xf32>
    %42 = arith.divf %40, %41 : vector<1x512xf32>
    %43 = arith.mulf %38, %38 : vector<8x512xf32>
    %cst_24 = arith.constant dense<0.000000e+00> : vector<512xf32>
    %44 = vector.multi_reduction <add>, %43, %cst_24 [0] : vector<8x512xf32> to vector<512xf32>
    %45 = vector.shape_cast %44 : vector<512xf32> to vector<1x512xf32>
    %cst_25 = arith.constant 8.000000e+00 : f32
    %46 = vector.broadcast %cst_25 : f32 to vector<1x512xf32>
    %47 = arith.divf %45, %46 : vector<1x512xf32>
    %48 = arith.mulf %42, %42 : vector<1x512xf32>
    %49 = arith.subf %47, %48 : vector<1x512xf32>
    %c0_26 = arith.constant 0 : index
    %c0_27 = arith.constant 0 : index
    %50 = vector.load %arg7[%c0_26, %c0_27] : memref<1x512xf32, #tpu.memory_space<vmem>>, vector<1x512xf32>
    %cst_28 = arith.constant 8.000000e-01 : f32
    %51 = vector.broadcast %cst_28 : f32 to vector<1x512xf32>
    %52 = arith.addf %49, %51 : vector<1x512xf32>
    %53 = math.rsqrt %52 : vector<1x512xf32>
    %54 = arith.mulf %50, %53 : vector<1x512xf32>
    %c0_29 = arith.constant 0 : index
    %c0_30 = arith.constant 0 : index
    %55 = vector.load %arg8[%c0_29, %c0_30] : memref<1x512xf32, #tpu.memory_space<vmem>>, vector<1x512xf32>
    %56 = arith.mulf %42, %54 : vector<1x512xf32>
    %57 = arith.subf %55, %56 : vector<1x512xf32>
    %58 = vector.broadcast %54 : vector<1x512xf32> to vector<8x512xf32>
    %59 = arith.mulf %38, %58 : vector<8x512xf32>
    %60 = vector.broadcast %57 : vector<1x512xf32> to vector<8x512xf32>
    %61 = arith.addf %59, %60 : vector<8x512xf32>
    %cst_31 = arith.constant 2.000000e-01 : f32
    %62 = vector.broadcast %cst_31 : f32 to vector<8x512xf32>
    %63 = arith.mulf %62, %61 : vector<8x512xf32>
    %64 = arith.maximumf %61, %63 : vector<8x512xf32>
    %c0_32 = arith.constant 0 : index
    %c0_33 = arith.constant 0 : index
    %65 = vector.load %arg9[%c0_32, %c0_33] : memref<512x1024xf32, #tpu.memory_space<vmem>>, vector<512x1024xf32>
    %cst_34 = arith.constant dense<0.000000e+00> : vector<8x1024xf32>
    %66 = tpu.matmul %64, %65, %cst_34 {dimension_numbers = #tpu.dot_dimension_numbers<[1], [0], [0], [1], [0, 0, 1, 1], [], []>} : vector<8x512xf32>, vector<512x1024xf32>, vector<8x1024xf32> -> vector<8x1024xf32>
    %cst_35 = arith.constant dense<0.000000e+00> : vector<1024xf32>
    %67 = vector.multi_reduction <add>, %66, %cst_35 [0] : vector<8x1024xf32> to vector<1024xf32>
    %68 = vector.shape_cast %67 : vector<1024xf32> to vector<1x1024xf32>
    %cst_36 = arith.constant 8.000000e+00 : f32
    %69 = vector.broadcast %cst_36 : f32 to vector<1x1024xf32>
    %70 = arith.divf %68, %69 : vector<1x1024xf32>
    %71 = arith.mulf %66, %66 : vector<8x1024xf32>
    %cst_37 = arith.constant dense<0.000000e+00> : vector<1024xf32>
    %72 = vector.multi_reduction <add>, %71, %cst_37 [0] : vector<8x1024xf32> to vector<1024xf32>
    %73 = vector.shape_cast %72 : vector<1024xf32> to vector<1x1024xf32>
    %cst_38 = arith.constant 8.000000e+00 : f32
    %74 = vector.broadcast %cst_38 : f32 to vector<1x1024xf32>
    %75 = arith.divf %73, %74 : vector<1x1024xf32>
    %76 = arith.mulf %70, %70 : vector<1x1024xf32>
    %77 = arith.subf %75, %76 : vector<1x1024xf32>
    %c0_39 = arith.constant 0 : index
    %c0_40 = arith.constant 0 : index
    %78 = vector.load %arg10[%c0_39, %c0_40] : memref<1x1024xf32, #tpu.memory_space<vmem>>, vector<1x1024xf32>
    %cst_41 = arith.constant 8.000000e-01 : f32
    %79 = vector.broadcast %cst_41 : f32 to vector<1x1024xf32>
    %80 = arith.addf %77, %79 : vector<1x1024xf32>
    %81 = math.rsqrt %80 : vector<1x1024xf32>
    %82 = arith.mulf %78, %81 : vector<1x1024xf32>
    %c0_42 = arith.constant 0 : index
    %c0_43 = arith.constant 0 : index
    %83 = vector.load %arg11[%c0_42, %c0_43] : memref<1x1024xf32, #tpu.memory_space<vmem>>, vector<1x1024xf32>
    %84 = arith.mulf %70, %82 : vector<1x1024xf32>
    %85 = arith.subf %83, %84 : vector<1x1024xf32>
    %86 = vector.broadcast %82 : vector<1x1024xf32> to vector<8x1024xf32>
    %87 = arith.mulf %66, %86 : vector<8x1024xf32>
    %88 = vector.broadcast %85 : vector<1x1024xf32> to vector<8x1024xf32>
    %89 = arith.addf %87, %88 : vector<8x1024xf32>
    %cst_44 = arith.constant 2.000000e-01 : f32
    %90 = vector.broadcast %cst_44 : f32 to vector<8x1024xf32>
    %91 = arith.mulf %90, %89 : vector<8x1024xf32>
    %92 = arith.maximumf %89, %91 : vector<8x1024xf32>
    %c0_45 = arith.constant 0 : index
    %c0_46 = arith.constant 0 : index
    %93 = vector.load %arg12[%c0_45, %c0_46] : memref<1024x128xf32, #tpu.memory_space<vmem>>, vector<1024x128xf32>
    %cst_47 = arith.constant dense<0.000000e+00> : vector<8x128xf32>
    %94 = tpu.matmul %92, %93, %cst_47 {dimension_numbers = #tpu.dot_dimension_numbers<[1], [0], [0], [1], [0, 0, 1, 1], [], []>} : vector<8x1024xf32>, vector<1024x128xf32>, vector<8x128xf32> -> vector<8x128xf32>
    %c0_48 = arith.constant 0 : index
    %c0_49 = arith.constant 0 : index
    %95 = vector.load %arg13[%c0_48, %c0_49] : memref<1x128xf32, #tpu.memory_space<vmem>>, vector<1x128xf32>
    %96 = vector.broadcast %95 : vector<1x128xf32> to vector<8x128xf32>
    %97 = arith.addf %94, %96 : vector<8x128xf32>
    %c0_50 = arith.constant 0 : index
    %c0_51 = arith.constant 0 : index
    %98 = vector.load %arg14[%c0_50, %c0_51] : memref<8x128xf32, #tpu.memory_space<vmem>>, vector<8x128xf32>
    tpu.vector_store %arg14[%c0_50, %c0_51], %97 {strides = array<i32>} : memref<8x128xf32, #tpu.memory_space<vmem>>, vector<8x128xf32>,
    return
  }
}

</mosaic_0001>

<llo_original>
// kernel: generator_pallas.1
$region0: #{generator_pallas.1}
  #allocation0 [shape = 'u32[]', space=smem, size = 0x4, offset = 0x4, fixed_abs, tag = 'smem constant byte address 0x4 - core index']
  #allocation1 [shape = 'u32[144,128]{1,0:T(1,128)}', space=vmem, size = 0x12000, scoped, tag = 'internal scratch']
  %s0 = inlined_call_operand.hbm [shape: f32[8,128], index: 0, kind: input, shape index: {}]
  %s1 = inlined_call_operand.hbm [shape: f32[128,128], index: 1, kind: input, shape index: {}]
  %s2 = inlined_call_operand.hbm [shape: f32[1,128], index: 2, kind: input, shape index: {}]
  %s3 = inlined_call_operand.hbm [shape: f32[128,256], index: 3, kind: input, shape index: {}]
  %s4 = inlined_call_operand.hbm [shape: f32[1,256], index: 4, kind: input, shape index: {}]
  %s5 = inlined_call_operand.hbm [shape: f32[1,256], index: 5, kind: input, shape index: {}]
  %s6 = inlined_call_operand.hbm [shape: f32[256,512], index: 6, kind: input, shape index: {}]
  %s7 = inlined_call_operand.hbm [shape: f32[1,512], index: 7, kind: input, shape index: {}]
  %s8 = inlined_call_operand.hbm [shape: f32[1,512], index: 8, kind: input, shape index: {}]
  %s9 = inlined_call_operand.hbm [shape: f32[512,1024], index: 9, kind: input, shape index: {}]
  %s10 = inlined_call_operand.hbm [shape: f32[1,1024], index: 10, kind: input, shape index: {}]
  %s11 = inlined_call_operand.hbm [shape: f32[1,1024], index: 11, kind: input, shape index: {}]
  %s12 = inlined_call_operand.hbm [shape: f32[1024,128], index: 12, kind: input, shape index: {}]
  %s13 = inlined_call_operand.hbm [shape: f32[1,128], index: 13, kind: input, shape index: {}]
  %s14 = inlined_call_operand.hbm [shape: f32[8,128], index: 14, kind: output, shape index: {}]
  %s15 = sld [smem:[#allocation0]]
  $region122: #{generator_pallas.1} parent=0
    _
  %s17 = ssub.s32 1, %s15
  %s18 = scalar_select 0, %s17, %s15
  $region1: #{generator_pallas.1} parent=0
    #allocation2 [shape = 'u8[4096]{0}', space=vmem, size = 0x1000, scoped, tag = 'input window, operand 0, single buffered']
    #allocation3 [shape = 's32[1]{0}', space=sflag, size = 0x4, scoped, tag = 'scoped memory for generator_pallas.1']
    #allocation4 [shape = 's32[1]{0}', space=sflag, size = 0x4, scoped, tag = 'scoped memory for generator_pallas.1']
    #allocation5 [shape = 'u8[65536]{0}', space=vmem, size = 0x10000, scoped, tag = 'input window, operand 1, single buffered']
    #allocation6 [shape = 's32[1]{0}', space=sflag, size = 0x4, scoped, tag = 'scoped memory for generator_pallas.1']
    #allocation7 [shape = 'u8[512]{0}', space=vmem, size = 0x400, scoped, tag = 'input window, operand 2, single buffered']
    #allocation8 [shape = 'u8[131072]{0}', space=vmem, size = 0x20000, scoped, tag = 'input window, operand 3, single buffered']
    #allocation9 [shape = 's32[1]{0}', space=sflag, size = 0x4, scoped, tag = 'scoped memory for generator_pallas.1']
    #allocation10 [shape = 'u8[1024]{0}', space=vmem, size = 0x400, scoped, tag = 'input window, operand 4, single buffered']
    #allocation11 [shape = 'u8[1024]{0}', space=vmem, size = 0x400, scoped, tag = 'input window, operand 5, single buffered']
    #allocation12 [shape = 's32[1]{0}', space=sflag, size = 0x4, scoped, tag = 'scoped memory for generator_pallas.1']
    #allocation13 [shape = 'u8[524288]{0}', space=vmem, size = 0x80000, scoped, tag = 'input window, operand 6, single buffered']
    #allocation14 [shape = 'u8[2048]{0}', space=vmem, size = 0x800, scoped, tag = 'input window, operand 7, single buffered']
    #allocation15 [shape = 's32[1]{0}', space=sflag, size = 0x4, scoped, tag = 'scoped memory for generator_pallas.1']
    #allocation16 [shape = 'u8[2048]{0}', space=vmem, size = 0x800, scoped, tag = 'input window, operand 8, single buffered']
    #allocation17 [shape = 'u8[2097152]{0}', space=vmem, size = 0x200000, scoped, tag = 'input window, operand 9, single buffered']
    #allocation18 [shape = 's32[1]{0}', space=sflag, size = 0x4, scoped, tag = 'scoped memory for generator_pallas.1']
    #allocation19 [shape = 'u8[4096]{0}', space=vmem, size = 0x1000, scoped, tag = 'input window, operand 10, single buffered']
    #allocation20 [shape = 'u8[4096]{0}', space=vmem, size = 0x1000, scoped, tag = 'input window, operand 11, single buffered']
    #allocation21 [shape = 's32[1]{0}', space=sflag, size = 0x4, scoped, tag = 'scoped memory for generator_pallas.1']
    #allocation22 [shape = 'u8[524288]{0}', space=vmem, size = 0x80000, scoped, tag = 'input window, operand 12, single buffered']
    #allocation23 [shape = 'u8[512]{0}', space=vmem, size = 0x400, scoped, tag = 'input window, operand 13, single buffered']
    #allocation24 [shape = 's32[1]{0}', space=sflag, size = 0x4, scoped, tag = 'scoped memory for generator_pallas.1']
    #allocation25 [shape = 'u8[4096]{0}', space=vmem, size = 0x1000, scoped, tag = 'output window, operand 0, single buffered']
    %19 = vsyncpa [#allocation3], 0
    %20 = vsyncpa [#allocation6], 0
    %21 = vsyncpa [#allocation9], 0
    %22 = vsyncpa [#allocation12], 0
    %23 = vsyncpa [#allocation15], 0
    %24 = vsyncpa [#allocation18], 0
    %25 = vsyncpa [#allocation21], 0
    %26 = vsyncpa [#allocation24], 0
    %27 = vsyncpa [#allocation4], 0
    // Predicated region
    $region2: #{generator_pallas.1} parent=1 // pred_check
      _
    $region3: #{generator_pallas.1} parent=1 // pred_check_branch
      %29 = sbr.rel (0) target = $region5
    $region4: #{generator_pallas.1} parent=1 // pred_region
      %s31 = ssub.s32 128, 128
      %32 = vsyncadd [#allocation3], %s31
      %s34 = sshll.u32 [#allocation2], 4
      %s35 = int_to_ptr.vmem [resolvable:$true] %s34
      %37 = dma.hbm_to_vmem [thread:$0]  %s0, 128, %s35, [#allocation3]
    $region5: #{generator_pallas.1} parent=1 // pred_fallthru
      _
    // Predicated region
    $region6: #{generator_pallas.1} parent=1 // pred_check
      _
    $region7: #{generator_pallas.1} parent=1 // pred_check_branch
      %39 = sbr.rel (0) target = $region9
    $region8: #{generator_pallas.1} parent=1 // pred_region
      %s41 = ssub.s32 2048, 2048
      %42 = vsyncadd [#allocation6], %s41
      %s43 = sshll.u32 [#allocation5], 4
      %s44 = int_to_ptr.vmem [resolvable:$true] %s43
      %49 = dma.hbm_to_vmem [thread:$0]  %s1, 2048, %s44, [#allocation6], 128, 128, 8
    $region9: #{generator_pallas.1} parent=1 // pred_fallthru
      _
    // Predicated region
    $region10: #{generator_pallas.1} parent=1 // pred_check
      _
    $region11: #{generator_pallas.1} parent=1 // pred_check_branch
      %51 = sbr.rel (0) target = $region13
    $region12: #{generator_pallas.1} parent=1 // pred_region
      %s53 = ssub.s32 16, 16
      %54 = vsyncadd [#allocation6], %s53
      %s56 = sshll.u32 [#allocation7], 4
      %s57 = int_to_ptr.vmem [resolvable:$true] %s56
      %59 = dma.hbm_to_vmem [thread:$0]  %s2, 16, %s57, [#allocation6]
    $region13: #{generator_pallas.1} parent=1 // pred_fallthru
      _
    // Predicated region
    $region14: #{generator_pallas.1} parent=1 // pred_check
      _
    $region15: #{generator_pallas.1} parent=1 // pred_check_branch
      %61 = sbr.rel (0) target = $region17
    $region16: #{generator_pallas.1} parent=1 // pred_region
      %s63 = ssub.s32 4096, 4096
      %64 = vsyncadd [#allocation9], %s63
      %s65 = sshll.u32 [#allocation8], 4
      %s66 = int_to_ptr.vmem [resolvable:$true] %s65
      %71 = dma.hbm_to_vmem [thread:$0]  %s3, 4096, %s66, [#allocation9], 256, 256, 16
    $region17: #{generator_pallas.1} parent=1 // pred_fallthru
      _
    // Predicated region
    $region18: #{generator_pallas.1} parent=1 // pred_check
      _
    $region19: #{generator_pallas.1} parent=1 // pred_check_branch
      %73 = sbr.rel (0) target = $region21
    $region20: #{generator_pallas.1} parent=1 // pred_region
      %s75 = ssub.s32 32, 32
      %76 = vsyncadd [#allocation9], %s75
      %s78 = sshll.u32 [#allocation10], 4
      %s79 = int_to_ptr.vmem [resolvable:$true] %s78
      %81 = dma.hbm_to_vmem [thread:$0]  %s4, 32, %s79, [#allocation9]
    $region21: #{generator_pallas.1} parent=1 // pred_fallthru
      _
    // Predicated region
    $region22: #{generator_pallas.1} parent=1 // pred_check
      _
    $region23: #{generator_pallas.1} parent=1 // pred_check_branch
      %83 = sbr.rel (0) target = $region25
    $region24: #{generator_pallas.1} parent=1 // pred_region
      %s85 = ssub.s32 32, 32
      %86 = vsyncadd [#allocation12], %s85
      %s88 = sshll.u32 [#allocation11], 4
      %s89 = int_to_ptr.vmem [resolvable:$true] %s88
      %91 = dma.hbm_to_vmem [thread:$0]  %s5, 32, %s89, [#allocation12]
    $region25: #{generator_pallas.1} parent=1 // pred_fallthru
      _
    // Predicated region
    $region26: #{generator_pallas.1} parent=1 // pred_check
      _
    $region27: #{generator_pallas.1} parent=1 // pred_check_branch
      %93 = sbr.rel (0) target = $region29
    $region28: #{generator_pallas.1} parent=1 // pred_region
      %s95 = ssub.s32 16384, 16384
      %96 = vsyncadd [#allocation12], %s95
      %s97 = sshll.u32 [#allocation13], 4
      %s98 = int_to_ptr.vmem [resolvable:$true] %s97
      %103 = dma.hbm_to_vmem [thread:$0]  %s6, 16384, %s98, [#allocation12], 512, 512, 32
    $region29: #{generator_pallas.1} parent=1 // pred_fallthru
      _
    // Predicated region
    $region30: #{generator_pallas.1} parent=1 // pred_check
      _
    $region31: #{generator_pallas.1} parent=1 // pred_check_branch
      %105 = sbr.rel (0) target = $region33
    $region32: #{generator_pallas.1} parent=1 // pred_region
      %s107 = ssub.s32 64, 64
      %108 = vsyncadd [#allocation15], %s107
      %s110 = sshll.u32 [#allocation14], 4
      %s111 = int_to_ptr.vmem [resolvable:$true] %s110
      %113 = dma.hbm_to_vmem [thread:$0]  %s7, 64, %s111, [#allocation15]
    $region33: #{generator_pallas.1} parent=1 // pred_fallthru
      _
    // Predicated region
    $region34: #{generator_pallas.1} parent=1 // pred_check
      _
    $region35: #{generator_pallas.1} parent=1 // pred_check_branch
      %115 = sbr.rel (0) target = $region37
    $region36: #{generator_pallas.1} parent=1 // pred_region
      %s117 = ssub.s32 64, 64
      %118 = vsyncadd [#allocation15], %s117
      %s120 = sshll.u32 [#allocation16], 4
      %s121 = int_to_ptr.vmem [resolvable:$true] %s120
      %123 = dma.hbm_to_vmem [thread:$0]  %s8, 64, %s121, [#allocation15]
    $region37: #{generator_pallas.1} parent=1 // pred_fallthru
      _
    // Predicated region
    $region38: #{generator_pallas.1} parent=1 // pred_check
      _
    $region39: #{generator_pallas.1} parent=1 // pred_check_branch
      %125 = sbr.rel (0) target = $region41
    $region40: #{generator_pallas.1} parent=1 // pred_region
      %s127 = ssub.s32 65536, 65536
      %128 = vsyncadd [#allocation18], %s127
      %s129 = sshll.u32 [#allocation17], 4
      %s130 = int_to_ptr.vmem [resolvable:$true] %s129
      %135 = dma.hbm_to_vmem [thread:$0]  %s9, 65536, %s130, [#allocation18], 1024, 1024, 64
    $region41: #{generator_pallas.1} parent=1 // pred_fallthru
      _
    // Predicated region
    $region42: #{generator_pallas.1} parent=1 // pred_check
      _
    $region43: #{generator_pallas.1} parent=1 // pred_check_branch
      %137 = sbr.rel (0) target = $region45
    $region44: #{generator_pallas.1} parent=1 // pred_region
      %s139 = ssub.s32 128, 128
      %140 = vsyncadd [#allocation18], %s139
      %s142 = sshll.u32 [#allocation19], 4
      %s143 = int_to_ptr.vmem [resolvable:$true] %s142
      %145 = dma.hbm_to_vmem [thread:$0]  %s10, 128, %s143, [#allocation18]
    $region45: #{generator_pallas.1} parent=1 // pred_fallthru
      _
    // Predicated region
    $region46: #{generator_pallas.1} parent=1 // pred_check
      _
    $region47: #{generator_pallas.1} parent=1 // pred_check_branch
      %147 = sbr.rel (0) target = $region49
    $region48: #{generator_pallas.1} parent=1 // pred_region
      %s149 = ssub.s32 128, 128
      %150 = vsyncadd [#allocation21], %s149
      %s152 = sshll.u32 [#allocation20], 4
      %s153 = int_to_ptr.vmem [resolvable:$true] %s152
      %155 = dma.hbm_to_vmem [thread:$0]  %s11, 128, %s153, [#allocation21]
    $region49: #{generator_pallas.1} parent=1 // pred_fallthru
      _
    // Predicated region
    $region50: #{generator_pallas.1} parent=1 // pred_check
      _
    $region51: #{generator_pallas.1} parent=1 // pred_check_branch
      %157 = sbr.rel (0) target = $region53
    $region52: #{generator_pallas.1} parent=1 // pred_region
      %s159 = ssub.s32 16384, 16384
      %160 = vsyncadd [#allocation21], %s159
      %s161 = sshll.u32 [#allocation22], 4
      %s162 = int_to_ptr.vmem [resolvable:$true] %s161
      %167 = dma.hbm_to_vmem [thread:$0]  %s12, 16384, %s162, [#allocation21], 128, 128, 8
    $region53: #{generator_pallas.1} parent=1 // pred_fallthru
      _
    // Predicated region
    $region54: #{generator_pallas.1} parent=1 // pred_check
      _
    $region55: #{generator_pallas.1} parent=1 // pred_check_branch
      %169 = sbr.rel (0) target = $region57
    $region56: #{generator_pallas.1} parent=1 // pred_region
      %s171 = ssub.s32 16, 16
      %172 = vsyncadd [#allocation24], %s171
      %s174 = sshll.u32 [#allocation23], 4
      %s175 = int_to_ptr.vmem [resolvable:$true] %s174
      %177 = dma.hbm_to_vmem [thread:$0]  %s13, 16, %s175, [#allocation24]
    $region57: #{generator_pallas.1} parent=1 // pred_fallthru
      _
    // Predicated region
    $region58: #{generator_pallas.1} parent=1 // pred_check
      _
    $region59: #{generator_pallas.1} parent=1 // pred_check_branch
      %179 = sbr.rel (0) target = $region61
    $region60: #{generator_pallas.1} parent=1 // pred_region
      %180 = dma.done [#allocation3], 128
    $region61: #{generator_pallas.1} parent=1 // pred_fallthru
      _
    // Predicated region
    $region62: #{generator_pallas.1} parent=1 // pred_check
      _
    $region63: #{generator_pallas.1} parent=1 // pred_check_branch
      %182 = sbr.rel (0) target = $region65
    $region64: #{generator_pallas.1} parent=1 // pred_region
      %183 = dma.done [#allocation6], 2048
    $region65: #{generator_pallas.1} parent=1 // pred_fallthru
      _
    // Predicated region
    $region66: #{generator_pallas.1} parent=1 // pred_check
      _
    $region67: #{generator_pallas.1} parent=1 // pred_check_branch
      %185 = sbr.rel (0) target = $region69
    $region68: #{generator_pallas.1} parent=1 // pred_region
      %186 = dma.done [#allocation6], 16
    $region69: #{generator_pallas.1} parent=1 // pred_fallthru
      _
    // Predicated region
    $region70: #{generator_pallas.1} parent=1 // pred_check
      _
    $region71: #{generator_pallas.1} parent=1 // pred_check_branch
      %188 = sbr.rel (0) target = $region73
    $region72: #{generator_pallas.1} parent=1 // pred_region
      %189 = dma.done [#allocation9], 4096
    $region73: #{generator_pallas.1} parent=1 // pred_fallthru
      _
    // Predicated region
    $region74: #{generator_pallas.1} parent=1 // pred_check
      _
    $region75: #{generator_pallas.1} parent=1 // pred_check_branch
      %191 = sbr.rel (0) target = $region77
    $region76: #{generator_pallas.1} parent=1 // pred_region
      %192 = dma.done [#allocation9], 32
    $region77: #{generator_pallas.1} parent=1 // pred_fallthru
      _
    // Predicated region
    $region78: #{generator_pallas.1} parent=1 // pred_check
      _
    $region79: #{generator_pallas.1} parent=1 // pred_check_branch
      %194 = sbr.rel (0) target = $region81
    $region80: #{generator_pallas.1} parent=1 // pred_region
      %195 = dma.done [#allocation12], 32
    $region81: #{generator_pallas.1} parent=1 // pred_fallthru
      _
    // Predicated region
    $region82: #{generator_pallas.1} parent=1 // pred_check
      _
    $region83: #{generator_pallas.1} parent=1 // pred_check_branch
      %197 = sbr.rel (0) target = $region85
    $region84: #{generator_pallas.1} parent=1 // pred_region
      %198 = dma.done [#allocation12], 16384
    $region85: #{generator_pallas.1} parent=1 // pred_fallthru
      _
    // Predicated region
    $region86: #{generator_pallas.1} parent=1 // pred_check
      _
    $region87: #{generator_pallas.1} parent=1 // pred_check_branch
      %200 = sbr.rel (0) target = $region89
    $region88: #{generator_pallas.1} parent=1 // pred_region
      %201 = dma.done [#allocation15], 64
    $region89: #{generator_pallas.1} parent=1 // pred_fallthru
      _
    // Predicated region
    $region90: #{generator_pallas.1} parent=1 // pred_check
      _
    $region91: #{generator_pallas.1} parent=1 // pred_check_branch
      %203 = sbr.rel (0) target = $region93
    $region92: #{generator_pallas.1} parent=1 // pred_region
      %204 = dma.done [#allocation15], 64
    $region93: #{generator_pallas.1} parent=1 // pred_fallthru
      _
    // Predicated region
    $region94: #{generator_pallas.1} parent=1 // pred_check
      _
    $region95: #{generator_pallas.1} parent=1 // pred_check_branch
      %206 = sbr.rel (0) target = $region97
    $region96: #{generator_pallas.1} parent=1 // pred_region
      %207 = dma.done [#allocation18], 65536
    $region97: #{generator_pallas.1} parent=1 // pred_fallthru
      _
    // Predicated region
    $region98: #{generator_pallas.1} parent=1 // pred_check
      _
    $region99: #{generator_pallas.1} parent=1 // pred_check_branch
      %209 = sbr.rel (0) target = $region101
    $region100: #{generator_pallas.1} parent=1 // pred_region
      %210 = dma.done [#allocation18], 128
    $region101: #{generator_pallas.1} parent=1 // pred_fallthru
      _
    // Predicated region
    $region102: #{generator_pallas.1} parent=1 // pred_check
      _
    $region103: #{generator_pallas.1} parent=1 // pred_check_branch
      %212 = sbr.rel (0) target = $region105
    $region104: #{generator_pallas.1} parent=1 // pred_region
      %213 = dma.done [#allocation21], 128
    $region105: #{generator_pallas.1} parent=1 // pred_fallthru
      _
    // Predicated region
    $region106: #{generator_pallas.1} parent=1 // pred_check
      _
    $region107: #{generator_pallas.1} parent=1 // pred_check_branch
      %215 = sbr.rel (0) target = $region109
    $region108: #{generator_pallas.1} parent=1 // pred_region
      %216 = dma.done [#allocation21], 16384
    $region109: #{generator_pallas.1} parent=1 // pred_fallthru
      _
    // Predicated region
    $region110: #{generator_pallas.1} parent=1 // pred_check
      _
    $region111: #{generator_pallas.1} parent=1 // pred_check_branch
      %218 = sbr.rel (0) target = $region113
    $region112: #{generator_pallas.1} parent=1 // pred_region
      %219 = dma.done [#allocation24], 16
    $region113: #{generator_pallas.1} parent=1 // pred_fallthru
      _
    %v220 = vld [vmem:[#allocation2] sm:$0xff]
    %v221 = vld [vmem:[#allocation5] sm:$0xff]
    %v222 = vld [vmem:[#allocation5 + $0x8] sm:$0xff]
    %v223 = vld [vmem:[#allocation5 + $0x10] sm:$0xff]
    %v224 = vld [vmem:[#allocation5 + $0x18] sm:$0xff]
    %v225 = vld [vmem:[#allocation5 + $0x20] sm:$0xff]
    %v226 = vld [vmem:[#allocation5 + $0x28] sm:$0xff]
    %v227 = vld [vmem:[#allocation5 + $0x30] sm:$0xff]
    %v228 = vld [vmem:[#allocation5 + $0x38] sm:$0xff]
    %v229 = vld [vmem:[#allocation5 + $0x40] sm:$0xff]
    %v230 = vld [vmem:[#allocation5 + $0x48] sm:$0xff]
    %v231 = vld [vmem:[#allocation5 + $0x50] sm:$0xff]
    %v232 = vld [vmem:[#allocation5 + $0x58] sm:$0xff]
    %v233 = vld [vmem:[#allocation5 + $0x60] sm:$0xff]
    %v234 = vld [vmem:[#allocation5 + $0x68] sm:$0xff]
    %v235 = vld [vmem:[#allocation5 + $0x70] sm:$0xff]
    %v236 = vld [vmem:[#allocation5 + $0x78] sm:$0xff]
    %v237 = vld [vmem:[#allocation7] sm:$0x1]
    %v239 = vlaneseq
    %v240 = vshrl.u32 %v239, 7
    %v241 = vsub.s32 0, %v240
    %v242 = vrot.slane %v237, %v241
    %244 = vmatprep.subr.mxu0 0.0
    %245 = vmatpush1.msra.mxu0 %v236
    %246 = vmatprep.subr.mxu0 0.0
    %247 = vmatpush1.msra.mxu0 %v235
    %248 = vmatprep.subr.mxu0 0.0
    %249 = vmatpush1.msra.mxu0 %v234
    %250 = vmatprep.subr.mxu0 0.0
    %251 = vmatpush1.msra.mxu0 %v233
    %252 = vmatprep.subr.mxu0 0.0
    %253 = vmatpush1.msra.mxu0 %v232
    %254 = vmatprep.subr.mxu0 0.0
    %255 = vmatpush1.msra.mxu0 %v231
    %256 = vmatprep.subr.mxu0 0.0
    %257 = vmatpush1.msra.mxu0 %v230
    %258 = vmatprep.subr.mxu0 0.0
    %259 = vmatpush1.msra.mxu0 %v229
    %260 = vmatprep.subr.mxu0 0.0
    %261 = vmatpush1.msra.mxu0 %v228
    %262 = vmatprep.subr.mxu0 0.0
    %263 = vmatpush1.msra.mxu0 %v227
    %264 = vmatprep.subr.mxu0 0.0
    %265 = vmatpush1.msra.mxu0 %v226
    %266 = vmatprep.subr.mxu0 0.0
    %267 = vmatpush1.msra.mxu0 %v225
    %268 = vmatprep.subr.mxu0 0.0
    %269 = vmatpush1.msra.mxu0 %v224
    %270 = vmatprep.subr.mxu0 0.0
    %271 = vmatpush1.msra.mxu0 %v223
    %272 = vmatprep.subr.mxu0 0.0
    %273 = vmatpush1.msra.mxu0 %v222
    %274 = vmatprep.subr.mxu0 0.0
    %275 = vmatpush1.msra.mxu0 %v221
    %276 = vmatprep.subr.mxu0 0.0
    %277 = vmatpush2.msra.mxu0 0.0
    %278 = vmatprep.subr.mxu0 0.0
    %279 = vmatpush2.msra.mxu0 0.0
    %280 = vmatprep.subr.mxu0 0.0
    %281 = vmatpush2.msra.mxu0 0.0
    %282 = vmatprep.subr.mxu0 0.0
    %283 = vmatpush2.msra.mxu0 0.0
    %284 = vmatprep.subr.mxu0 0.0
    %285 = vmatpush2.msra.mxu0 0.0
    %286 = vmatprep.subr.mxu0 0.0
    %287 = vmatpush2.msra.mxu0 0.0
    %288 = vmatprep.subr.mxu0 0.0
    %289 = vmatpush2.msra.mxu0 0.0
    %290 = vmatprep.subr.mxu0 0.0
    %291 = vmatpush2.msra.mxu0 0.0
    %292 = vmatprep.subr.mxu0 0.0
    %293 = vmatpush2.msra.mxu0 0.0
    %294 = vmatprep.subr.mxu0 0.0
    %295 = vmatpush2.msra.mxu0 0.0
    %296 = vmatprep.subr.mxu0 0.0
    %297 = vmatpush2.msra.mxu0 0.0
    %298 = vmatprep.subr.mxu0 0.0
    %299 = vmatpush2.msra.mxu0 0.0
    %300 = vmatprep.subr.mxu0 0.0
    %301 = vmatpush2.msra.mxu0 0.0
    %302 = vmatprep.subr.mxu0 0.0
    %303 = vmatpush2.msra.mxu0 0.0
    %304 = vmatprep.subr.mxu0 0.0
    %305 = vmatpush2.msra.mxu0 0.0
    %306 = vmatprep.subr.mxu0 0.0
    %307 = vmatpush2.msra.mxu0 0.0
    %308 = vmatprep.mubr.f32.mxu0 0.0
    %309 = vmatmul.mubr.f32.gmra.mxu0 %v220
    %v310 = vpop.f32.mrf.mxu0
    %v311 = vadd.f32 %v242, %v310
    %v312 = vpop.f32.mrf.mxu0
    %313 = vdwg.mxu0
    %v314 = vmul.f32 %v311, 0.2
    %v315 = vmax.f32 %v311, %v314
    %v316 = vld [vmem:[#allocation8] sm:$0xff]
    %v317 = vld [vmem:[#allocation8 + $0x8] sm:$0xff]
    %v318 = vld [vmem:[#allocation8 + $0x10] sm:$0xff]
    %v319 = vld [vmem:[#allocation8 + $0x18] sm:$0xff]
    %v320 = vld [vmem:[#allocation8 + $0x20] sm:$0xff]
    %v321 = vld [vmem:[#allocation8 + $0x28] sm:$0xff]
    %v322 = vld [vmem:[#allocation8 + $0x30] sm:$0xff]
    %v323 = vld [vmem:[#allocation8 + $0x38] sm:$0xff]
    %v324 = vld [vmem:[#allocation8 + $0x40] sm:$0xff]
    %v325 = vld [vmem:[#allocation8 + $0x48] sm:$0xff]
    %v326 = vld [vmem:[#allocation8 + $0x50] sm:$0xff]
    %v327 = vld [vmem:[#allocation8 + $0x58] sm:$0xff]
    %v328 = vld [vmem:[#allocation8 + $0x60] sm:$0xff]
    %v329 = vld [vmem:[#allocation8 + $0x68] sm:$0xff]
    %v330 = vld [vmem:[#allocation8 + $0x70] sm:$0xff]
    %v331 = vld [vmem:[#allocation8 + $0x78] sm:$0xff]
    %v332 = vld [vmem:[#allocation8 + $0x80] sm:$0xff]
    %v333 = vld [vmem:[#allocation8 + $0x88] sm:$0xff]
    %v334 = vld [vmem:[#allocation8 + $0x90] sm:$0xff]
    %v335 = vld [vmem:[#allocation8 + $0x98] sm:$0xff]
    %v336 = vld [vmem:[#allocation8 + $0xa0] sm:$0xff]
    %v337 = vld [vmem:[#allocation8 + $0xa8] sm:$0xff]
    %v338 = vld [vmem:[#allocation8 + $0xb0] sm:$0xff]
    %v339 = vld [vmem:[#allocation8 + $0xb8] sm:$0xff]
    %v340 = vld [vmem:[#allocation8 + $0xc0] sm:$0xff]
    %v341 = vld [vmem:[#allocation8 + $0xc8] sm:$0xff]
    %v342 = vld [vmem:[#allocation8 + $0xd0] sm:$0xff]
    %v343 = vld [vmem:[#allocation8 + $0xd8] sm:$0xff]
    %v344 = vld [vmem:[#allocation8 + $0xe0] sm:$0xff]
    %v345 = vld [vmem:[#allocation8 + $0xe8] sm:$0xff]
    %v346 = vld [vmem:[#allocation8 + $0xf0] sm:$0xff]
    %v347 = vld [vmem:[#allocation8 + $0xf8] sm:$0xff]
    %348 = vmatprep.subr.mxu0 %v347
    %349 = vmatpush1.msra.mxu0 %v346
    %350 = vmatprep.subr.mxu0 %v345
    %351 = vmatpush1.msra.mxu0 %v344
    %352 = vmatprep.subr.mxu0 %v343
    %353 = vmatpush1.msra.mxu0 %v342
    %354 = vmatprep.subr.mxu0 %v341
    %355 = vmatpush1.msra.mxu0 %v340
    %356 = vmatprep.subr.mxu0 %v339
    %357 = vmatpush1.msra.mxu0 %v338
    %358 = vmatprep.subr.mxu0 %v337
    %359 = vmatpush1.msra.mxu0 %v336
    %360 = vmatprep.subr.mxu0 %v335
    %361 = vmatpush1.msra.mxu0 %v334
    %362 = vmatprep.subr.mxu0 %v333
    %363 = vmatpush1.msra.mxu0 %v332
    %364 = vmatprep.subr.mxu0 %v331
    %365 = vmatpush1.msra.mxu0 %v330
    %366 = vmatprep.subr.mxu0 %v329
    %367 = vmatpush1.msra.mxu0 %v328
    %368 = vmatprep.subr.mxu0 %v327
    %369 = vmatpush1.msra.mxu0 %v326
    %370 = vmatprep.subr.mxu0 %v325
    %371 = vmatpush1.msra.mxu0 %v324
    %372 = vmatprep.subr.mxu0 %v323
    %373 = vmatpush1.msra.mxu0 %v322
    %374 = vmatprep.subr.mxu0 %v321
    %375 = vmatpush1.msra.mxu0 %v320
    %376 = vmatprep.subr.mxu0 %v319
    %377 = vmatpush1.msra.mxu0 %v318
    %378 = vmatprep.subr.mxu0 %v317
    %379 = vmatpush1.msra.mxu0 %v316
    %380 = vmatprep.subr.mxu0 0.0
    %381 = vmatpush2.msra.mxu0 0.0
    %382 = vmatprep.subr.mxu0 0.0
    %383 = vmatpush2.msra.mxu0 0.0
    %384 = vmatprep.subr.mxu0 0.0
    %385 = vmatpush2.msra.mxu0 0.0
    %386 = vmatprep.subr.mxu0 0.0
    %387 = vmatpush2.msra.mxu0 0.0
    %388 = vmatprep.subr.mxu0 0.0
    %389 = vmatpush2.msra.mxu0 0.0
    %390 = vmatprep.subr.mxu0 0.0
    %391 = vmatpush2.msra.mxu0 0.0
    %392 = vmatprep.subr.mxu0 0.0
    %393 = vmatpush2.msra.mxu0 0.0
    %394 = vmatprep.subr.mxu0 0.0
    %395 = vmatpush2.msra.mxu0 0.0
    %396 = vmatprep.subr.mxu0 0.0
    %397 = vmatpush2.msra.mxu0 0.0
    %398 = vmatprep.subr.mxu0 0.0
    %399 = vmatpush2.msra.mxu0 0.0
    %400 = vmatprep.subr.mxu0 0.0
    %401 = vmatpush2.msra.mxu0 0.0
    %402 = vmatprep.subr.mxu0 0.0
    %403 = vmatpush2.msra.mxu0 0.0
    %404 = vmatprep.subr.mxu0 0.0
    %405 = vmatpush2.msra.mxu0 0.0
    %406 = vmatprep.subr.mxu0 0.0
    %407 = vmatpush2.msra.mxu0 0.0
    %408 = vmatprep.subr.mxu0 0.0
    %409 = vmatpush2.msra.mxu0 0.0
    %410 = vmatprep.subr.mxu0 0.0
    %411 = vmatpush2.msra.mxu0 0.0
    %412 = vmatprep.mubr.f32.mxu0 0.0
    %413 = vmatmul.mubr.f32.gmra.mxu0 %v315
    %v414 = vpop.f32.mrf.mxu0
    %v415 = vadd.f32 0.0, %v414
    %v416 = vpop.f32.mrf.mxu0
    %v417 = vadd.f32 0.0, %v416
    %418 = vdwg.mxu0
    %v419 = vrot.slane %v415, 4
    %v420 = vadd.f32 %v415, %v419
    %v421 = vrot.slane %v420, 2
    %v422 = vadd.f32 %v420, %v421
    %v423 = vrot.slane %v422, 1
    %v424 = vadd.f32 %v422, %v423
    %v425 = vrot.slane %v417, 4
    %v426 = vadd.f32 %v417, %v425
    %v427 = vrot.slane %v426, 2
    %v428 = vadd.f32 %v426, %v427
    %v429 = vrot.slane %v428, 1
    %v430 = vadd.f32 %v428, %v429
    %v431 = vrcp.pop 8.0
    %v432 = vmul.f32 %v424, %v431
    %v433 = vmul.f32 %v430, %v431
    %v434 = vmul.f32 %v415, %v415
    %v435 = vmul.f32 %v417, %v417
    %v436 = vrot.slane %v434, 4
    %v437 = vadd.f32 %v434, %v436
    %v438 = vrot.slane %v437, 2
    %v439 = vadd.f32 %v437, %v438
    %v440 = vrot.slane %v439, 1
    %v441 = vadd.f32 %v439, %v440
    %v442 = vrot.slane %v435, 4
    %v443 = vadd.f32 %v435, %v442
    %v444 = vrot.slane %v443, 2
    %v445 = vadd.f32 %v443, %v444
    %v446 = vrot.slane %v445, 1
    %v447 = vadd.f32 %v445, %v446
    %v448 = vmul.f32 %v441, %v431
    %v449 = vmul.f32 %v447, %v431
    %v450 = vmul.f32 %v432, %v432
    %v451 = vmul.f32 %v433, %v433
    %v452 = vsub.f32 %v448, %v450
    %v453 = vsub.f32 %v449, %v451
    %v454 = vld [vmem:[#allocation10] sm:$0x3]
    %v455 = vadd.f32 %v452, 0.8
    %v456 = vadd.f32 %v453, 0.8
    %v457 = vrsqrt.pop %v455
    %v458 = vrsqrt.pop %v456
    %v461 = vcombine.low %v457, %v458
    %v463 = vunpack.c.l.s4 1966171168
    %v464 = vunpack.c.0.s8 %v463
    %v465 = vlaneseq
    %v466 = vshrl.u32 %v465, 7
    %v467 = vsub.s32 %v464, %v466
    %v468 = vrot.slane %v461, %v467
    %v470 = vunpack.c.l.s4 1966171168
    %v471 = vunpack.c.0.s8 %v470
    %v472 = vlaneseq
    %v473 = vshrl.u32 %v472, 7
    %v474 = vsub.s32 %v471, %v473
    %v475 = vrot.slane %v468, %v474
    %v477 = vmul.f32 %v454, %v475
    %v478 = vld [vmem:[#allocation11] sm:$0x3]
    %v480 = vlaneseq
    %v481 = vshrl.u32 %v480, 7
    %v482 = vsub.s32 0, %v481
    %v483 = vrot.slane %v477, %v482
    %v484 = vlaneseq
    %v485 = vshrl.u32 %v484, 7
    %v486 = vsub.s32 1, %v485
    %v487 = vrot.slane %v477, %v486
    %v490 = vmul.f32 %v432, %v483
    %v491 = vmul.f32 %v433, %v487
    %v494 = vcombine.low %v490, %v491
    %v496 = vunpack.c.l.s4 1966171168
    %v497 = vunpack.c.0.s8 %v496
    %v498 = vlaneseq
    %v499 = vshrl.u32 %v498, 7
    %v500 = vsub.s32 %v497, %v499
    %v501 = vrot.slane %v494, %v500
    %v503 = vunpack.c.l.s4 1966171168
    %v504 = vunpack.c.0.s8 %v503
    %v505 = vlaneseq
    %v506 = vshrl.u32 %v505, 7
    %v507 = vsub.s32 %v504, %v506
    %v508 = vrot.slane %v501, %v507
    %v510 = vsub.f32 %v478, %v508
    %v511 = vmul.f32 %v415, %v483
    %v512 = vmul.f32 %v417, %v487
    %v514 = vlaneseq
    %v515 = vshrl.u32 %v514, 7
    %v516 = vsub.s32 0, %v515
    %v517 = vrot.slane %v510, %v516
    %v518 = vlaneseq
    %v519 = vshrl.u32 %v518, 7
    %v520 = vsub.s32 1, %v519
    %v521 = vrot.slane %v510, %v520
    %v524 = vadd.f32 %v511, %v517
    %v525 = vadd.f32 %v512, %v521
    %v526 = vmul.f32 %v524, 0.2
    %v527 = vmul.f32 %v525, 0.2
    %v528 = vmax.f32 %v524, %v526
    %v529 = vmax.f32 %v525, %v527
    %v530 = vld [vmem:[#allocation13] sm:$0xff]
    %v531 = vld [vmem:[#allocation13 + $0x8] sm:$0xff]
    %v532 = vld [vmem:[#allocation13 + $0x10] sm:$0xff]
    %v533 = vld [vmem:[#allocation13 + $0x18] sm:$0xff]
    %v534 = vld [vmem:[#allocation13 + $0x20] sm:$0xff]
    %v535 = vld [vmem:[#allocation13 + $0x28] sm:$0xff]
    %v536 = vld [vmem:[#allocation13 + $0x30] sm:$0xff]
    %v537 = vld [vmem:[#allocation13 + $0x38] sm:$0xff]
    %v538 = vld [vmem:[#allocation13 + $0x40] sm:$0xff]
    %v539 = vld [vmem:[#allocation13 + $0x48] sm:$0xff]
    %v540 = vld [vmem:[#allocation13 + $0x50] sm:$0xff]
    %v541 = vld [vmem:[#allocation13 + $0x58] sm:$0xff]
    %v542 = vld [vmem:[#allocation13 + $0x60] sm:$0xff]
    %v543 = vld [vmem:[#allocation13 + $0x68] sm:$0xff]
    %v544 = vld [vmem:[#allocation13 + $0x70] sm:$0xff]
    %v545 = vld [vmem:[#allocation13 + $0x78] sm:$0xff]
    %v546 = vld [vmem:[#allocation13 + $0x80] sm:$0xff]
    %v547 = vld [vmem:[#allocation13 + $0x88] sm:$0xff]
    %v548 = vld [vmem:[#allocation13 + $0x90] sm:$0xff]
    %v549 = vld [vmem:[#allocation13 + $0x98] sm:$0xff]
    %v550 = vld [vmem:[#allocation13 + $0xa0] sm:$0xff]
    %v551 = vld [vmem:[#allocation13 + $0xa8] sm:$0xff]
    %v552 = vld [vmem:[#allocation13 + $0xb0] sm:$0xff]
    %v553 = vld [vmem:[#allocation13 + $0xb8] sm:$0xff]
    %v554 = vld [vmem:[#allocation13 + $0xc0] sm:$0xff]
    %v555 = vld [vmem:[#allocation13 + $0xc8] sm:$0xff]
    %v556 = vld [vmem:[#allocation13 + $0xd0] sm:$0xff]
    %v557 = vld [vmem:[#allocation13 + $0xd8] sm:$0xff]
    %v558 = vld [vmem:[#allocation13 + $0xe0] sm:$0xff]
    %v559 = vld [vmem:[#allocation13 + $0xe8] sm:$0xff]
    %v560 = vld [vmem:[#allocation13 + $0xf0] sm:$0xff]
    %v561 = vld [vmem:[#allocation13 + $0xf8] sm:$0xff]
    %v562 = vld [vmem:[#allocation13 + $0x100] sm:$0xff]
    %v563 = vld [vmem:[#allocation13 + $0x108] sm:$0xff]
    %v564 = vld [vmem:[#allocation13 + $0x110] sm:$0xff]
    %v565 = vld [vmem:[#allocation13 + $0x118] sm:$0xff]
    %v566 = vld [vmem:[#allocation13 + $0x120] sm:$0xff]
    %v567 = vld [vmem:[#allocation13 + $0x128] sm:$0xff]
    %v568 = vld [vmem:[#allocation13 + $0x130] sm:$0xff]
    %v569 = vld [vmem:[#allocation13 + $0x138] sm:$0xff]
    %v570 = vld [vmem:[#allocation13 + $0x140] sm:$0xff]
    %v571 = vld [vmem:[#allocation13 + $0x148] sm:$0xff]
    %v572 = vld [vmem:[#allocation13 + $0x150] sm:$0xff]
    %v573 = vld [vmem:[#allocation13 + $0x158] sm:$0xff]
    %v574 = vld [vmem:[#allocation13 + $0x160] sm:$0xff]
    %v575 = vld [vmem:[#allocation13 + $0x168] sm:$0xff]
    %v576 = vld [vmem:[#allocation13 + $0x170] sm:$0xff]
    %v577 = vld [vmem:[#allocation13 + $0x178] sm:$0xff]
    %v578 = vld [vmem:[#allocation13 + $0x180] sm:$0xff]
    %v579 = vld [vmem:[#allocation13 + $0x188] sm:$0xff]
    %v580 = vld [vmem:[#allocation13 + $0x190] sm:$0xff]
    %v581 = vld [vmem:[#allocation13 + $0x198] sm:$0xff]
    %v582 = vld [vmem:[#allocation13 + $0x1a0] sm:$0xff]
    %v583 = vld [vmem:[#allocation13 + $0x1a8] sm:$0xff]
    %v584 = vld [vmem:[#allocation13 + $0x1b0] sm:$0xff]
    %v585 = vld [vmem:[#allocation13 + $0x1b8] sm:$0xff]
    %v586 = vld [vmem:[#allocation13 + $0x1c0] sm:$0xff]
    %v587 = vld [vmem:[#allocation13 + $0x1c8] sm:$0xff]
    %v588 = vld [vmem:[#allocation13 + $0x1d0] sm:$0xff]
    %v589 = vld [vmem:[#allocation13 + $0x1d8] sm:$0xff]
    %v590 = vld [vmem:[#allocation13 + $0x1e0] sm:$0xff]
    %v591 = vld [vmem:[#allocation13 + $0x1e8] sm:$0xff]
    %v592 = vld [vmem:[#allocation13 + $0x1f0] sm:$0xff]
    %v593 = vld [vmem:[#allocation13 + $0x1f8] sm:$0xff]
    %v594 = vld [vmem:[#allocation13 + $0x200] sm:$0xff]
    %v595 = vld [vmem:[#allocation13 + $0x208] sm:$0xff]
    %v596 = vld [vmem:[#allocation13 + $0x210] sm:$0xff]
    %v597 = vld [vmem:[#allocation13 + $0x218] sm:$0xff]
    %v598 = vld [vmem:[#allocation13 + $0x220] sm:$0xff]
    %v599 = vld [vmem:[#allocation13 + $0x228] sm:$0xff]
    %v600 = vld [vmem:[#allocation13 + $0x230] sm:$0xff]
    %v601 = vld [vmem:[#allocation13 + $0x238] sm:$0xff]
    %v602 = vld [vmem:[#allocation13 + $0x240] sm:$0xff]
    %v603 = vld [vmem:[#allocation13 + $0x248] sm:$0xff]
    %v604 = vld [vmem:[#allocation13 + $0x250] sm:$0xff]
    %v605 = vld [vmem:[#allocation13 + $0x258] sm:$0xff]
    %v606 = vld [vmem:[#allocation13 + $0x260] sm:$0xff]
    %v607 = vld [vmem:[#allocation13 + $0x268] sm:$0xff]
    %v608 = vld [vmem:[#allocation13 + $0x270] sm:$0xff]
    %v609 = vld [vmem:[#allocation13 + $0x278] sm:$0xff]
    %v610 = vld [vmem:[#allocation13 + $0x280] sm:$0xff]
    %v611 = vld [vmem:[#allocation13 + $0x288] sm:$0xff]
    %v612 = vld [vmem:[#allocation13 + $0x290] sm:$0xff]
    %v613 = vld [vmem:[#allocation13 + $0x298] sm:$0xff]
    %v614 = vld [vmem:[#allocation13 + $0x2a0] sm:$0xff]
    %v615 = vld [vmem:[#allocation13 + $0x2a8] sm:$0xff]
    %v616 = vld [vmem:[#allocation13 + $0x2b0] sm:$0xff]
    %v617 = vld [vmem:[#allocation13 + $0x2b8] sm:$0xff]
    %v618 = vld [vmem:[#allocation13 + $0x2c0] sm:$0xff]
    %v619 = vld [vmem:[#allocation13 + $0x2c8] sm:$0xff]
    %v620 = vld [vmem:[#allocation13 + $0x2d0] sm:$0xff]
    %v621 = vld [vmem:[#allocation13 + $0x2d8] sm:$0xff]
    %v622 = vld [vmem:[#allocation13 + $0x2e0] sm:$0xff]
    %v623 = vld [vmem:[#allocation13 + $0x2e8] sm:$0xff]
    %v624 = vld [vmem:[#allocation13 + $0x2f0] sm:$0xff]
    %v625 = vld [vmem:[#allocation13 + $0x2f8] sm:$0xff]
    %v626 = vld [vmem:[#allocation13 + $0x300] sm:$0xff]
    %v627 = vld [vmem:[#allocation13 + $0x308] sm:$0xff]
    %v628 = vld [vmem:[#allocation13 + $0x310] sm:$0xff]
    %v629 = vld [vmem:[#allocation13 + $0x318] sm:$0xff]
    %v630 = vld [vmem:[#allocation13 + $0x320] sm:$0xff]
    %v631 = vld [vmem:[#allocation13 + $0x328] sm:$0xff]
    %v632 = vld [vmem:[#allocation13 + $0x330] sm:$0xff]
    %v633 = vld [vmem:[#allocation13 + $0x338] sm:$0xff]
    %v634 = vld [vmem:[#allocation13 + $0x340] sm:$0xff]
    %v635 = vld [vmem:[#allocation13 + $0x348] sm:$0xff]
    %v636 = vld [vmem:[#allocation13 + $0x350] sm:$0xff]
    %v637 = vld [vmem:[#allocation13 + $0x358] sm:$0xff]
    %v638 = vld [vmem:[#allocation13 + $0x360] sm:$0xff]
    %v639 = vld [vmem:[#allocation13 + $0x368] sm:$0xff]
    %v640 = vld [vmem:[#allocation13 + $0x370] sm:$0xff]
    %v641 = vld [vmem:[#allocation13 + $0x378] sm:$0xff]
    %v642 = vld [vmem:[#allocation13 + $0x380] sm:$0xff]
    %v643 = vld [vmem:[#allocation13 + $0x388] sm:$0xff]
    %v644 = vld [vmem:[#allocation13 + $0x390] sm:$0xff]
    %v645 = vld [vmem:[#allocation13 + $0x398] sm:$0xff]
    %v646 = vld [vmem:[#allocation13 + $0x3a0] sm:$0xff]
    %v647 = vld [vmem:[#allocation13 + $0x3a8] sm:$0xff]
    %v648 = vld [vmem:[#allocation13 + $0x3b0] sm:$0xff]
    %v649 = vld [vmem:[#allocation13 + $0x3b8] sm:$0xff]
    %v650 = vld [vmem:[#allocation13 + $0x3c0] sm:$0xff]
    %v651 = vld [vmem:[#allocation13 + $0x3c8] sm:$0xff]
    %v652 = vld [vmem:[#allocation13 + $0x3d0] sm:$0xff]
    %v653 = vld [vmem:[#allocation13 + $0x3d8] sm:$0xff]
    %v654 = vld [vmem:[#allocation13 + $0x3e0] sm:$0xff]
    %v655 = vld [vmem:[#allocation13 + $0x3e8] sm:$0xff]
    %v656 = vld [vmem:[#allocation13 + $0x3f0] sm:$0xff]
    %v657 = vld [vmem:[#allocation13 + $0x3f8] sm:$0xff]
    %658 = vmatprep.subr.mxu0 %v591
    %659 = vmatpush1.msra.mxu0 %v590
    %660 = vmatprep.subr.mxu0 %v587
    %661 = vmatpush1.msra.mxu0 %v586
    %662 = vmatprep.subr.mxu0 %v583
    %663 = vmatpush1.msra.mxu0 %v582
    %664 = vmatprep.subr.mxu0 %v579
    %665 = vmatpush1.msra.mxu0 %v578
    %666 = vmatprep.subr.mxu0 %v575
    %667 = vmatpush1.msra.mxu0 %v574
    %668 = vmatprep.subr.mxu0 %v571
    %669 = vmatpush1.msra.mxu0 %v570
    %670 = vmatprep.subr.mxu0 %v567
    %671 = vmatpush1.msra.mxu0 %v566
    %672 = vmatprep.subr.mxu0 %v563
    %673 = vmatpush1.msra.mxu0 %v562
    %674 = vmatprep.subr.mxu0 %v559
    %675 = vmatpush1.msra.mxu0 %v558
    %676 = vmatprep.subr.mxu0 %v555
    %677 = vmatpush1.msra.mxu0 %v554
    %678 = vmatprep.subr.mxu0 %v551
    %679 = vmatpush1.msra.mxu0 %v550
    %680 = vmatprep.subr.mxu0 %v547
    %681 = vmatpush1.msra.mxu0 %v546
    %682 = vmatprep.subr.mxu0 %v543
    %683 = vmatpush1.msra.mxu0 %v542
    %684 = vmatprep.subr.mxu0 %v539
    %685 = vmatpush1.msra.mxu0 %v538
    %686 = vmatprep.subr.mxu0 %v535
    %687 = vmatpush1.msra.mxu0 %v534
    %688 = vmatprep.subr.mxu0 %v531
    %689 = vmatpush1.msra.mxu0 %v530
    %690 = vmatprep.subr.mxu0 %v655
    %691 = vmatpush2.msra.mxu0 %v654
    %692 = vmatprep.subr.mxu0 %v651
    %693 = vmatpush2.msra.mxu0 %v650
    %694 = vmatprep.subr.mxu0 %v647
    %695 = vmatpush2.msra.mxu0 %v646
    %696 = vmatprep.subr.mxu0 %v643
    %697 = vmatpush2.msra.mxu0 %v642
    %698 = vmatprep.subr.mxu0 %v639
    %699 = vmatpush2.msra.mxu0 %v638
    %700 = vmatprep.subr.mxu0 %v635
    %701 = vmatpush2.msra.mxu0 %v634
    %702 = vmatprep.subr.mxu0 %v631
    %703 = vmatpush2.msra.mxu0 %v630
    %704 = vmatprep.subr.mxu0 %v627
    %705 = vmatpush2.msra.mxu0 %v626
    %706 = vmatprep.subr.mxu0 %v623
    %707 = vmatpush2.msra.mxu0 %v622
    %708 = vmatprep.subr.mxu0 %v619
    %709 = vmatpush2.msra.mxu0 %v618
    %710 = vmatprep.subr.mxu0 %v615
    %711 = vmatpush2.msra.mxu0 %v614
    %712 = vmatprep.subr.mxu0 %v611
    %713 = vmatpush2.msra.mxu0 %v610
    %714 = vmatprep.subr.mxu0 %v607
    %715 = vmatpush2.msra.mxu0 %v606
    %716 = vmatprep.subr.mxu0 %v603
    %717 = vmatpush2.msra.mxu0 %v602
    %718 = vmatprep.subr.mxu0 %v599
    %719 = vmatpush2.msra.mxu0 %v598
    %720 = vmatprep.subr.mxu0 %v595
    %721 = vmatpush2.msra.mxu0 %v594
    %722 = vmatprep.mubr.f32.mxu0 %v529
    %723 = vmatmul.mubr.f32.gmra.mxu0 %v528
    %v724 = vpop.f32.mrf.mxu0
    %v725 = vadd.f32 0.0, %v724
    %v726 = vpop.f32.mrf.mxu0
    %v727 = vadd.f32 0.0, %v726
    %728 = vdwg.mxu0
    %729 = vmatprep.subr.mxu0 %v593
    %730 = vmatpush1.msra.mxu0 %v592
    %731 = vmatprep.subr.mxu0 %v589
    %732 = vmatpush1.msra.mxu0 %v588
    %733 = vmatprep.subr.mxu0 %v585
    %734 = vmatpush1.msra.mxu0 %v584
    %735 = vmatprep.subr.mxu0 %v581
    %736 = vmatpush1.msra.mxu0 %v580
    %737 = vmatprep.subr.mxu0 %v577
    %738 = vmatpush1.msra.mxu0 %v576
    %739 = vmatprep.subr.mxu0 %v573
    %740 = vmatpush1.msra.mxu0 %v572
    %741 = vmatprep.subr.mxu0 %v569
    %742 = vmatpush1.msra.mxu0 %v568
    %743 = vmatprep.subr.mxu0 %v565
    %744 = vmatpush1.msra.mxu0 %v564
    %745 = vmatprep.subr.mxu0 %v561
    %746 = vmatpush1.msra.mxu0 %v560
    %747 = vmatprep.subr.mxu0 %v557
    %748 = vmatpush1.msra.mxu0 %v556
    %749 = vmatprep.subr.mxu0 %v553
    %750 = vmatpush1.msra.mxu0 %v552
    %751 = vmatprep.subr.mxu0 %v549
    %752 = vmatpush1.msra.mxu0 %v548
    %753 = vmatprep.subr.mxu0 %v545
    %754 = vmatpush1.msra.mxu0 %v544
    %755 = vmatprep.subr.mxu0 %v541
    %756 = vmatpush1.msra.mxu0 %v540
    %757 = vmatprep.subr.mxu0 %v537
    %758 = vmatpush1.msra.mxu0 %v536
    %759 = vmatprep.subr.mxu0 %v533
    %760 = vmatpush1.msra.mxu0 %v532
    %761 = vmatprep.subr.mxu0 %v657
    %762 = vmatpush2.msra.mxu0 %v656
    %763 = vmatprep.subr.mxu0 %v653
    %764 = vmatpush2.msra.mxu0 %v652
    %765 = vmatprep.subr.mxu0 %v649
    %766 = vmatpush2.msra.mxu0 %v648
    %767 = vmatprep.subr.mxu0 %v645
    %768 = vmatpush2.msra.mxu0 %v644
    %769 = vmatprep.subr.mxu0 %v641
    %770 = vmatpush2.msra.mxu0 %v640
    %771 = vmatprep.subr.mxu0 %v637
    %772 = vmatpush2.msra.mxu0 %v636
    %773 = vmatprep.subr.mxu0 %v633
    %774 = vmatpush2.msra.mxu0 %v632
    %775 = vmatprep.subr.mxu0 %v629
    %776 = vmatpush2.msra.mxu0 %v628
    %777 = vmatprep.subr.mxu0 %v625
    %778 = vmatpush2.msra.mxu0 %v624
    %779 = vmatprep.subr.mxu0 %v621
    %780 = vmatpush2.msra.mxu0 %v620
    %781 = vmatprep.subr.mxu0 %v617
    %782 = vmatpush2.msra.mxu0 %v616
    %783 = vmatprep.subr.mxu0 %v613
    %784 = vmatpush2.msra.mxu0 %v612
    %785 = vmatprep.subr.mxu0 %v609
    %786 = vmatpush2.msra.mxu0 %v608
    %787 = vmatprep.subr.mxu0 %v605
    %788 = vmatpush2.msra.mxu0 %v604
    %789 = vmatprep.subr.mxu0 %v601
    %790 = vmatpush2.msra.mxu0 %v600
    %791 = vmatprep.subr.mxu0 %v597
    %792 = vmatpush2.msra.mxu0 %v596
    %793 = vmatprep.mubr.f32.mxu0 %v529
    %794 = vmatmul.mubr.f32.gmra.mxu0 %v528
    %v795 = vpop.f32.mrf.mxu0
    %v796 = vadd.f32 0.0, %v795
    %v797 = vpop.f32.mrf.mxu0
    %v798 = vadd.f32 0.0, %v797
    %799 = vdwg.mxu0
    %v800 = vrot.slane %v725, 4
    %v801 = vadd.f32 %v725, %v800
    %v802 = vrot.slane %v801, 2
    %v803 = vadd.f32 %v801, %v802
    %v804 = vrot.slane %v803, 1
    %v805 = vadd.f32 %v803, %v804
    %v806 = vrot.slane %v727, 4
    %v807 = vadd.f32 %v727, %v806
    %v808 = vrot.slane %v807, 2
    %v809 = vadd.f32 %v807, %v808
    %v810 = vrot.slane %v809, 1
    %v811 = vadd.f32 %v809, %v810
    %v812 = vrot.slane %v796, 4
    %v813 = vadd.f32 %v796, %v812
    %v814 = vrot.slane %v813, 2
    %v815 = vadd.f32 %v813, %v814
    %v816 = vrot.slane %v815, 1
    %v817 = vadd.f32 %v815, %v816
    %v818 = vrot.slane %v798, 4
    %v819 = vadd.f32 %v798, %v818
    %v820 = vrot.slane %v819, 2
    %v821 = vadd.f32 %v819, %v820
    %v822 = vrot.slane %v821, 1
    %v823 = vadd.f32 %v821, %v822
    %v824 = vmul.f32 %v805, %v431
    %v825 = vmul.f32 %v811, %v431
    %v826 = vmul.f32 %v817, %v431
    %v827 = vmul.f32 %v823, %v431
    %v828 = vmul.f32 %v725, %v725
    %v829 = vmul.f32 %v727, %v727
    %v830 = vmul.f32 %v796, %v796
    %v831 = vmul.f32 %v798, %v798
    %v832 = vrot.slane %v828, 4
    %v833 = vadd.f32 %v828, %v832
    %v834 = vrot.slane %v833, 2
    %v835 = vadd.f32 %v833, %v834
    %v836 = vrot.slane %v835, 1
    %v837 = vadd.f32 %v835, %v836
    %v838 = vrot.slane %v829, 4
    %v839 = vadd.f32 %v829, %v838
    %v840 = vrot.slane %v839, 2
    %v841 = vadd.f32 %v839, %v840
    %v842 = vrot.slane %v841, 1
    %v843 = vadd.f32 %v841, %v842
    %v844 = vrot.slane %v830, 4
    %v845 = vadd.f32 %v830, %v844
    %v846 = vrot.slane %v845, 2
    %v847 = vadd.f32 %v845, %v846
    %v848 = vrot.slane %v847, 1
    %v849 = vadd.f32 %v847, %v848
    %v850 = vrot.slane %v831, 4
    %v851 = vadd.f32 %v831, %v850
    %v852 = vrot.slane %v851, 2
    %v853 = vadd.f32 %v851, %v852
    %v854 = vrot.slane %v853, 1
    %v855 = vadd.f32 %v853, %v854
    %v856 = vmul.f32 %v837, %v431
    %v857 = vmul.f32 %v843, %v431
    %v858 = vmul.f32 %v849, %v431
    %v859 = vmul.f32 %v855, %v431
    %v860 = vmul.f32 %v824, %v824
    %v861 = vmul.f32 %v825, %v825
    %v862 = vmul.f32 %v826, %v826
    %v863 = vmul.f32 %v827, %v827
    %v864 = vsub.f32 %v856, %v860
    %v865 = vsub.f32 %v857, %v861
    %v866 = vsub.f32 %v858, %v862
    %v867 = vsub.f32 %v859, %v863
    %v868 = vld [vmem:[#allocation14] sm:$0xf]
    %v869 = vadd.f32 %v864, 0.8
    %v870 = vadd.f32 %v865, 0.8
    %v871 = vadd.f32 %v866, 0.8
    %v872 = vadd.f32 %v867, 0.8
    %v873 = vrsqrt.pop %v869
    %v874 = vrsqrt.pop %v870
    %v875 = vrsqrt.pop %v871
    %v876 = vrsqrt.pop %v872
    %v881 = vcombine.low %v873, %v874
    %v882 = vcombine.low %v875, %v876
    %v884 = vunpack.c.l.s4 1966171168
    %v885 = vunpack.c.0.s8 %v884
    %v886 = vlaneseq
    %v887 = vshrl.u32 %v886, 7
    %v888 = vsub.s32 %v885, %v887
    %v889 = vrot.slane %v881, %v888
    %v891 = vunpack.c.l.s4 1966171168
    %v892 = vunpack.c.0.s8 %v891
    %v893 = vlaneseq
    %v894 = vshrl.u32 %v893, 7
    %v895 = vsub.s32 %v892, %v894
    %v896 = vrot.slane %v882, %v895
    %v897 = vcombine.low %v889, %v896
    %v899 = vunpack.c.l.s4 1966171168
    %v900 = vunpack.c.0.s8 %v899
    %v901 = vlaneseq
    %v902 = vshrl.u32 %v901, 7
    %v903 = vsub.s32 %v900, %v902
    %v904 = vrot.slane %v897, %v903
    %v906 = vmul.f32 %v868, %v904
    %v907 = vld [vmem:[#allocation16] sm:$0xf]
    %v909 = vlaneseq
    %v910 = vshrl.u32 %v909, 7
    %v911 = vsub.s32 0, %v910
    %v912 = vrot.slane %v906, %v911
    %v913 = vlaneseq
    %v914 = vshrl.u32 %v913, 7
    %v915 = vsub.s32 1, %v914
    %v916 = vrot.slane %v906, %v915
    %v917 = vlaneseq
    %v918 = vshrl.u32 %v917, 7
    %v919 = vsub.s32 2, %v918
    %v920 = vrot.slane %v906, %v919
    %v921 = vlaneseq
    %v922 = vshrl.u32 %v921, 7
    %v923 = vsub.s32 3, %v922
    %v924 = vrot.slane %v906, %v923
    %v929 = vmul.f32 %v824, %v912
    %v930 = vmul.f32 %v825, %v916
    %v931 = vmul.f32 %v826, %v920
    %v932 = vmul.f32 %v827, %v924
    %v937 = vcombine.low %v929, %v930
    %v938 = vcombine.low %v931, %v932
    %v940 = vunpack.c.l.s4 1966171168
    %v941 = vunpack.c.0.s8 %v940
    %v942 = vlaneseq
    %v943 = vshrl.u32 %v942, 7
    %v944 = vsub.s32 %v941, %v943
    %v945 = vrot.slane %v937, %v944
    %v947 = vunpack.c.l.s4 1966171168
    %v948 = vunpack.c.0.s8 %v947
    %v949 = vlaneseq
    %v950 = vshrl.u32 %v949, 7
    %v951 = vsub.s32 %v948, %v950
    %v952 = vrot.slane %v938, %v951
    %v953 = vcombine.low %v945, %v952
    %v955 = vunpack.c.l.s4 1966171168
    %v956 = vunpack.c.0.s8 %v955
    %v957 = vlaneseq
    %v958 = vshrl.u32 %v957, 7
    %v959 = vsub.s32 %v956, %v958
    %v960 = vrot.slane %v953, %v959
    %v962 = vsub.f32 %v907, %v960
    %v963 = vmul.f32 %v725, %v912
    %v964 = vmul.f32 %v727, %v916
    %v965 = vmul.f32 %v796, %v920
    %v966 = vmul.f32 %v798, %v924
    %v968 = vlaneseq
    %v969 = vshrl.u32 %v968, 7
    %v970 = vsub.s32 0, %v969
    %v971 = vrot.slane %v962, %v970
    %v972 = vlaneseq
    %v973 = vshrl.u32 %v972, 7
    %v974 = vsub.s32 1, %v973
    %v975 = vrot.slane %v962, %v974
    %v976 = vlaneseq
    %v977 = vshrl.u32 %v976, 7
    %v978 = vsub.s32 2, %v977
    %v979 = vrot.slane %v962, %v978
    %v980 = vlaneseq
    %v981 = vshrl.u32 %v980, 7
    %v982 = vsub.s32 3, %v981
    %v983 = vrot.slane %v962, %v982
    %v988 = vadd.f32 %v963, %v971
    %v989 = vadd.f32 %v964, %v975
    %v990 = vadd.f32 %v965, %v979
    %v991 = vadd.f32 %v966, %v983
    %v992 = vmul.f32 %v988, 0.2
    %v993 = vmul.f32 %v989, 0.2
    %v994 = vmul.f32 %v990, 0.2
    %v995 = vmul.f32 %v991, 0.2
    %v996 = vmax.f32 %v988, %v992
    %v997 = vmax.f32 %v989, %v993
    %v998 = vmax.f32 %v990, %v994
    %v999 = vmax.f32 %v991, %v995
    %v1000 = vld [vmem:[#allocation17] sm:$0xff]
    %v1001 = vld [vmem:[#allocation17 + $0x8] sm:$0xff]
    %v1002 = vld [vmem:[#allocation17 + $0x10] sm:$0xff]
    %v1003 = vld [vmem:[#allocation17 + $0x18] sm:$0xff]
    %v1004 = vld [vmem:[#allocation17 + $0x20] sm:$0xff]
    %v1005 = vld [vmem:[#allocation17 + $0x28] sm:$0xff]
    %v1006 = vld [vmem:[#allocation17 + $0x30] sm:$0xff]
    %v1007 = vld [vmem:[#allocation17 + $0x38] sm:$0xff]
    %v1008 = vld [vmem:[#allocation17 + $0x40] sm:$0xff]
    %v1009 = vld [vmem:[#allocation17 + $0x48] sm:$0xff]
    %v1010 = vld [vmem:[#allocation17 + $0x50] sm:$0xff]
    %v1011 = vld [vmem:[#allocation17 + $0x58] sm:$0xff]
    %v1012 = vld [vmem:[#allocation17 + $0x60] sm:$0xff]
    %v1013 = vld [vmem:[#allocation17 + $0x68] sm:$0xff]
    %v1014 = vld [vmem:[#allocation17 + $0x70] sm:$0xff]
    %v1015 = vld [vmem:[#allocation17 + $0x78] sm:$0xff]
    %v1016 = vld [vmem:[#allocation17 + $0x80] sm:$0xff]
    %v1017 = vld [vmem:[#allocation17 + $0x88] sm:$0xff]
    %v1018 = vld [vmem:[#allocation17 + $0x90] sm:$0xff]
    %v1019 = vld [vmem:[#allocation17 + $0x98] sm:$0xff]
    %v1020 = vld [vmem:[#allocation17 + $0xa0] sm:$0xff]
    %v1021 = vld [vmem:[#allocation17 + $0xa8] sm:$0xff]
    %v1022 = vld [vmem:[#allocation17 + $0xb0] sm:$0xff]
    %v1023 = vld [vmem:[#allocation17 + $0xb8] sm:$0xff]
    %v1024 = vld [vmem:[#allocation17 + $0xc0] sm:$0xff]
    %v1025 = vld [vmem:[#allocation17 + $0xc8] sm:$0xff]
    %v1026 = vld [vmem:[#allocation17 + $0xd0] sm:$0xff]
    %v1027 = vld [vmem:[#allocation17 + $0xd8] sm:$0xff]
    %v1028 = vld [vmem:[#allocation17 + $0xe0] sm:$0xff]
    %v1029 = vld [vmem:[#allocation17 + $0xe8] sm:$0xff]
    %v1030 = vld [vmem:[#allocation17 + $0xf0] sm:$0xff]
    %v1031 = vld [vmem:[#allocation17 + $0xf8] sm:$0xff]
    %v1032 = vld [vmem:[#allocation17 + $0x100] sm:$0xff]
    %v1033 = vld [vmem:[#allocation17 + $0x108] sm:$0xff]
    %v1034 = vld [vmem:[#allocation17 + $0x110] sm:$0xff]
    %v1035 = vld [vmem:[#allocation17 + $0x118] sm:$0xff]
    %v1036 = vld [vmem:[#allocation17 + $0x120] sm:$0xff]
    %v1037 = vld [vmem:[#allocation17 + $0x128] sm:$0xff]
    %v1038 = vld [vmem:[#allocation17 + $0x130] sm:$0xff]
    %v1039 = vld [vmem:[#allocation17 + $0x138] sm:$0xff]
    %v1040 = vld [vmem:[#allocation17 + $0x140] sm:$0xff]
    %v1041 = vld [vmem:[#allocation17 + $0x148] sm:$0xff]
    %v1042 = vld [vmem:[#allocation17 + $0x150] sm:$0xff]
    %v1043 = vld [vmem:[#allocation17 + $0x158] sm:$0xff]
    %v1044 = vld [vmem:[#allocation17 + $0x160] sm:$0xff]
    %v1045 = vld [vmem:[#allocation17 + $0x168] sm:$0xff]
    %v1046 = vld [vmem:[#allocation17 + $0x170] sm:$0xff]
    %v1047 = vld [vmem:[#allocation17 + $0x178] sm:$0xff]
    %v1048 = vld [vmem:[#allocation17 + $0x180] sm:$0xff]
    %v1049 = vld [vmem:[#allocation17 + $0x188] sm:$0xff]
    %v1050 = vld [vmem:[#allocation17 + $0x190] sm:$0xff]
    %v1051 = vld [vmem:[#allocation17 + $0x198] sm:$0xff]
    %v1052 = vld [vmem:[#allocation17 + $0x1a0] sm:$0xff]
    %v1053 = vld [vmem:[#allocation17 + $0x1a8] sm:$0xff]
    %v1054 = vld [vmem:[#allocation17 + $0x1b0] sm:$0xff]
    %v1055 = vld [vmem:[#allocation17 + $0x1b8] sm:$0xff]
    %v1056 = vld [vmem:[#allocation17 + $0x1c0] sm:$0xff]
    %v1057 = vld [vmem:[#allocation17 + $0x1c8] sm:$0xff]
    %v1058 = vld [vmem:[#allocation17 + $0x1d0] sm:$0xff]
    %v1059 = vld [vmem:[#allocation17 + $0x1d8] sm:$0xff]
    %v1060 = vld [vmem:[#allocation17 + $0x1e0] sm:$0xff]
    %v1061 = vld [vmem:[#allocation17 + $0x1e8] sm:$0xff]
    %v1062 = vld [vmem:[#allocation17 + $0x1f0] sm:$0xff]
    %v1063 = vld [vmem:[#allocation17 + $0x1f8] sm:$0xff]
    %v1064 = vld [vmem:[#allocation17 + $0x200] sm:$0xff]
    %v1065 = vld [vmem:[#allocation17 + $0x208] sm:$0xff]
    %v1066 = vld [vmem:[#allocation17 + $0x210] sm:$0xff]
    %v1067 = vld [vmem:[#allocation17 + $0x218] sm:$0xff]
    %v1068 = vld [vmem:[#allocation17 + $0x220] sm:$0xff]
    %v1069 = vld [vmem:[#allocation17 + $0x228] sm:$0xff]
    %v1070 = vld [vmem:[#allocation17 + $0x230] sm:$0xff]
    %v1071 = vld [vmem:[#allocation17 + $0x238] sm:$0xff]
    %v1072 = vld [vmem:[#allocation17 + $0x240] sm:$0xff]
    %v1073 = vld [vmem:[#allocation17 + $0x248] sm:$0xff]
    %v1074 = vld [vmem:[#allocation17 + $0x250] sm:$0xff]
    %v1075 = vld [vmem:[#allocation17 + $0x258] sm:$0xff]
    %v1076 = vld [vmem:[#allocation17 + $0x260] sm:$0xff]
    %v1077 = vld [vmem:[#allocation17 + $0x268] sm:$0xff]
    %v1078 = vld [vmem:[#allocation17 + $0x270] sm:$0xff]
    %v1079 = vld [vmem:[#allocation17 + $0x278] sm:$0xff]
    %v1080 = vld [vmem:[#allocation17 + $0x280] sm:$0xff]
    %v1081 = vld [vmem:[#allocation17 + $0x288] sm:$0xff]
    %v1082 = vld [vmem:[#allocation17 + $0x290] sm:$0xff]
    %v1083 = vld [vmem:[#allocation17 + $0x298] sm:$0xff]
    %v1084 = vld [vmem:[#allocation17 + $0x2a0] sm:$0xff]
    %v1085 = vld [vmem:[#allocation17 + $0x2a8] sm:$0xff]
    %v1086 = vld [vmem:[#allocation17 + $0x2b0] sm:$0xff]
    %v1087 = vld [vmem:[#allocation17 + $0x2b8] sm:$0xff]
    %v1088 = vld [vmem:[#allocation17 + $0x2c0] sm:$0xff]
    %v1089 = vld [vmem:[#allocation17 + $0x2c8] sm:$0xff]
    %v1090 = vld [vmem:[#allocation17 + $0x2d0] sm:$0xff]
    %v1091 = vld [vmem:[#allocation17 + $0x2d8] sm:$0xff]
    %v1092 = vld [vmem:[#allocation17 + $0x2e0] sm:$0xff]
    %v1093 = vld [vmem:[#allocation17 + $0x2e8] sm:$0xff]
    %v1094 = vld [vmem:[#allocation17 + $0x2f0] sm:$0xff]
    %v1095 = vld [vmem:[#allocation17 + $0x2f8] sm:$0xff]
    %v1096 = vld [vmem:[#allocation17 + $0x300] sm:$0xff]
    %v1097 = vld [vmem:[#allocation17 + $0x308] sm:$0xff]
    %v1098 = vld [vmem:[#allocation17 + $0x310] sm:$0xff]
    %v1099 = vld [vmem:[#allocation17 + $0x318] sm:$0xff]
    %v1100 = vld [vmem:[#allocation17 + $0x320] sm:$0xff]
    %v1101 = vld [vmem:[#allocation17 + $0x328] sm:$0xff]
    %v1102 = vld [vmem:[#allocation17 + $0x330] sm:$0xff]
    %v1103 = vld [vmem:[#allocation17 + $0x338] sm:$0xff]
    %v1104 = vld [vmem:[#allocation17 + $0x340] sm:$0xff]
    %v1105 = vld [vmem:[#allocation17 + $0x348] sm:$0xff]
    %v1106 = vld [vmem:[#allocation17 + $0x350] sm:$0xff]
    %v1107 = vld [vmem:[#allocation17 + $0x358] sm:$0xff]
    %v1108 = vld [vmem:[#allocation17 + $0x360] sm:$0xff]
    %v1109 = vld [vmem:[#allocation17 + $0x368] sm:$0xff]
    %v1110 = vld [vmem:[#allocation17 + $0x370] sm:$0xff]
    %v1111 = vld [vmem:[#allocation17 + $0x378] sm:$0xff]
    %v1112 = vld [vmem:[#allocation17 + $0x380] sm:$0xff]
    %v1113 = vld [vmem:[#allocation17 + $0x388] sm:$0xff]
    %v1114 = vld [vmem:[#allocation17 + $0x390] sm:$0xff]
    %v1115 = vld [vmem:[#allocation17 + $0x398] sm:$0xff]
    %v1116 = vld [vmem:[#allocation17 + $0x3a0] sm:$0xff]
    %v1117 = vld [vmem:[#allocation17 + $0x3a8] sm:$0xff]
    %v1118 = vld [vmem:[#allocation17 + $0x3b0] sm:$0xff]
    %v1119 = vld [vmem:[#allocation17 + $0x3b8] sm:$0xff]
    %v1120 = vld [vmem:[#allocation17 + $0x3c0] sm:$0xff]
    %v1121 = vld [vmem:[#allocation17 + $0x3c8] sm:$0xff]
    %v1122 = vld [vmem:[#allocation17 + $0x3d0] sm:$0xff]
    %v1123 = vld [vmem:[#allocation17 + $0x3d8] sm:$0xff]
    %v1124 = vld [vmem:[#allocation17 + $0x3e0] sm:$0xff]
    %v1125 = vld [vmem:[#allocation17 + $0x3e8] sm:$0xff]
    %v1126 = vld [vmem:[#allocation17 + $0x3f0] sm:$0xff]
    %v1127 = vld [vmem:[#allocation17 + $0x3f8] sm:$0xff]
    %v1128 = vld [vmem:[#allocation17 + $0x400] sm:$0xff]
    %v1129 = vld [vmem:[#allocation17 + $0x408] sm:$0xff]
    %v1130 = vld [vmem:[#allocation17 + $0x410] sm:$0xff]
    %v1131 = vld [vmem:[#allocation17 + $0x418] sm:$0xff]
    %v1132 = vld [vmem:[#allocation17 + $0x420] sm:$0xff]
    %v1133 = vld [vmem:[#allocation17 + $0x428] sm:$0xff]
    %v1134 = vld [vmem:[#allocation17 + $0x430] sm:$0xff]
    %v1135 = vld [vmem:[#allocation17 + $0x438] sm:$0xff]
    %v1136 = vld [vmem:[#allocation17 + $0x440] sm:$0xff]
    %v1137 = vld [vmem:[#allocation17 + $0x448] sm:$0xff]
    %v1138 = vld [vmem:[#allocation17 + $0x450] sm:$0xff]
    %v1139 = vld [vmem:[#allocation17 + $0x458] sm:$0xff]
    %v1140 = vld [vmem:[#allocation17 + $0x460] sm:$0xff]
    %v1141 = vld [vmem:[#allocation17 + $0x468] sm:$0xff]
    %v1142 = vld [vmem:[#allocation17 + $0x470] sm:$0xff]
    %v1143 = vld [vmem:[#allocation17 + $0x478] sm:$0xff]
    %v1144 = vld [vmem:[#allocation17 + $0x480] sm:$0xff]
    %v1145 = vld [vmem:[#allocation17 + $0x488] sm:$0xff]
    %v1146 = vld [vmem:[#allocation17 + $0x490] sm:$0xff]
    %v1147 = vld [vmem:[#allocation17 + $0x498] sm:$0xff]
    %v1148 = vld [vmem:[#allocation17 + $0x4a0] sm:$0xff]
    %v1149 = vld [vmem:[#allocation17 + $0x4a8] sm:$0xff]
    %v1150 = vld [vmem:[#allocation17 + $0x4b0] sm:$0xff]
    %v1151 = vld [vmem:[#allocation17 + $0x4b8] sm:$0xff]
    %v1152 = vld [vmem:[#allocation17 + $0x4c0] sm:$0xff]
    %v1153 = vld [vmem:[#allocation17 + $0x4c8] sm:$0xff]
    %v1154 = vld [vmem:[#allocation17 + $0x4d0] sm:$0xff]
    %v1155 = vld [vmem:[#allocation17 + $0x4d8] sm:$0xff]
    %v1156 = vld [vmem:[#allocation17 + $0x4e0] sm:$0xff]
    %v1157 = vld [vmem:[#allocation17 + $0x4e8] sm:$0xff]
    %v1158 = vld [vmem:[#allocation17 + $0x4f0] sm:$0xff]
    %v1159 = vld [vmem:[#allocation17 + $0x4f8] sm:$0xff]
    %v1160 = vld [vmem:[#allocation17 + $0x500] sm:$0xff]
    %v1161 = vld [vmem:[#allocation17 + $0x508] sm:$0xff]
    %v1162 = vld [vmem:[#allocation17 + $0x510] sm:$0xff]
    %v1163 = vld [vmem:[#allocation17 + $0x518] sm:$0xff]
    %v1164 = vld [vmem:[#allocation17 + $0x520] sm:$0xff]
    %v1165 = vld [vmem:[#allocation17 + $0x528] sm:$0xff]
    %v1166 = vld [vmem:[#allocation17 + $0x530] sm:$0xff]
    %v1167 = vld [vmem:[#allocation17 + $0x538] sm:$0xff]
    %v1168 = vld [vmem:[#allocation17 + $0x540] sm:$0xff]
    %v1169 = vld [vmem:[#allocation17 + $0x548] sm:$0xff]
    %v1170 = vld [vmem:[#allocation17 + $0x550] sm:$0xff]
    %v1171 = vld [vmem:[#allocation17 + $0x558] sm:$0xff]
    %v1172 = vld [vmem:[#allocation17 + $0x560] sm:$0xff]
    %v1173 = vld [vmem:[#allocation17 + $0x568] sm:$0xff]
    %v1174 = vld [vmem:[#allocation17 + $0x570] sm:$0xff]
    %v1175 = vld [vmem:[#allocation17 + $0x578] sm:$0xff]
    %v1176 = vld [vmem:[#allocation17 + $0x580] sm:$0xff]
    %v1177 = vld [vmem:[#allocation17 + $0x588] sm:$0xff]
    %v1178 = vld [vmem:[#allocation17 + $0x590] sm:$0xff]
    %v1179 = vld [vmem:[#allocation17 + $0x598] sm:$0xff]
    %v1180 = vld [vmem:[#allocation17 + $0x5a0] sm:$0xff]
    %v1181 = vld [vmem:[#allocation17 + $0x5a8] sm:$0xff]
    %v1182 = vld [vmem:[#allocation17 + $0x5b0] sm:$0xff]
    %v1183 = vld [vmem:[#allocation17 + $0x5b8] sm:$0xff]
    %v1184 = vld [vmem:[#allocation17 + $0x5c0] sm:$0xff]
    %v1185 = vld [vmem:[#allocation17 + $0x5c8] sm:$0xff]
    %v1186 = vld [vmem:[#allocation17 + $0x5d0] sm:$0xff]
    %v1187 = vld [vmem:[#allocation17 + $0x5d8] sm:$0xff]
    %v1188 = vld [vmem:[#allocation17 + $0x5e0] sm:$0xff]
    %v1189 = vld [vmem:[#allocation17 + $0x5e8] sm:$0xff]
    %v1190 = vld [vmem:[#allocation17 + $0x5f0] sm:$0xff]
    %v1191 = vld [vmem:[#allocation17 + $0x5f8] sm:$0xff]
    %v1192 = vld [vmem:[#allocation17 + $0x600] sm:$0xff]
    %v1193 = vld [vmem:[#allocation17 + $0x608] sm:$0xff]
    %v1194 = vld [vmem:[#allocation17 + $0x610] sm:$0xff]
    %v1195 = vld [vmem:[#allocation17 + $0x618] sm:$0xff]
    %v1196 = vld [vmem:[#allocation17 + $0x620] sm:$0xff]
    %v1197 = vld [vmem:[#allocation17 + $0x628] sm:$0xff]
    %v1198 = vld [vmem:[#allocation17 + $0x630] sm:$0xff]
    %v1199 = vld [vmem:[#allocation17 + $0x638] sm:$0xff]
    %v1200 = vld [vmem:[#allocation17 + $0x640] sm:$0xff]
    %v1201 = vld [vmem:[#allocation17 + $0x648] sm:$0xff]
    %v1202 = vld [vmem:[#allocation17 + $0x650] sm:$0xff]
    %v1203 = vld [vmem:[#allocation17 + $0x658] sm:$0xff]
    %v1204 = vld [vmem:[#allocation17 + $0x660] sm:$0xff]
    %v1205 = vld [vmem:[#allocation17 + $0x668] sm:$0xff]
    %v1206 = vld [vmem:[#allocation17 + $0x670] sm:$0xff]
    %v1207 = vld [vmem:[#allocation17 + $0x678] sm:$0xff]
    %v1208 = vld [vmem:[#allocation17 + $0x680] sm:$0xff]
    %v1209 = vld [vmem:[#allocation17 + $0x688] sm:$0xff]
    %v1210 = vld [vmem:[#allocation17 + $0x690] sm:$0xff]
    %v1211 = vld [vmem:[#allocation17 + $0x698] sm:$0xff]
    %v1212 = vld [vmem:[#allocation17 + $0x6a0] sm:$0xff]
    %v1213 = vld [vmem:[#allocation17 + $0x6a8] sm:$0xff]
    %v1214 = vld [vmem:[#allocation17 + $0x6b0] sm:$0xff]
    %v1215 = vld [vmem:[#allocation17 + $0x6b8] sm:$0xff]
    %v1216 = vld [vmem:[#allocation17 + $0x6c0] sm:$0xff]
    %v1217 = vld [vmem:[#allocation17 + $0x6c8] sm:$0xff]
    %v1218 = vld [vmem:[#allocation17 + $0x6d0] sm:$0xff]
    %v1219 = vld [vmem:[#allocation17 + $0x6d8] sm:$0xff]
    %v1220 = vld [vmem:[#allocation17 + $0x6e0] sm:$0xff]
    %v1221 = vld [vmem:[#allocation17 + $0x6e8] sm:$0xff]
    %v1222 = vld [vmem:[#allocation17 + $0x6f0] sm:$0xff]
    %v1223 = vld [vmem:[#allocation17 + $0x6f8] sm:$0xff]
    %v1224 = vld [vmem:[#allocation17 + $0x700] sm:$0xff]
    %v1225 = vld [vmem:[#allocation17 + $0x708] sm:$0xff]
    %v1226 = vld [vmem:[#allocation17 + $0x710] sm:$0xff]
    %v1227 = vld [vmem:[#allocation17 + $0x718] sm:$0xff]
    %v1228 = vld [vmem:[#allocation17 + $0x720] sm:$0xff]
    %v1229 = vld [vmem:[#allocation17 + $0x728] sm:$0xff]
    %v1230 = vld [vmem:[#allocation17 + $0x730] sm:$0xff]
    %v1231 = vld [vmem:[#allocation17 + $0x738] sm:$0xff]
    %v1232 = vld [vmem:[#allocation17 + $0x740] sm:$0xff]
    %v1233 = vld [vmem:[#allocation17 + $0x748] sm:$0xff]
    %v1234 = vld [vmem:[#allocation17 + $0x750] sm:$0xff]
    %v1235 = vld [vmem:[#allocation17 + $0x758] sm:$0xff]
    %v1236 = vld [vmem:[#allocation17 + $0x760] sm:$0xff]
    %v1237 = vld [vmem:[#allocation17 + $0x768] sm:$0xff]
    %v1238 = vld [vmem:[#allocation17 + $0x770] sm:$0xff]
    %v1239 = vld [vmem:[#allocation17 + $0x778] sm:$0xff]
    %v1240 = vld [vmem:[#allocation17 + $0x780] sm:$0xff]
    %v1241 = vld [vmem:[#allocation17 + $0x788] sm:$0xff]
    %v1242 = vld [vmem:[#allocation17 + $0x790] sm:$0xff]
    %v1243 = vld [vmem:[#allocation17 + $0x798] sm:$0xff]
    %v1244 = vld [vmem:[#allocation17 + $0x7a0] sm:$0xff]
    %v1245 = vld [vmem:[#allocation17 + $0x7a8] sm:$0xff]
    %v1246 = vld [vmem:[#allocation17 + $0x7b0] sm:$0xff]
    %v1247 = vld [vmem:[#allocation17 + $0x7b8] sm:$0xff]
    %v1248 = vld [vmem:[#allocation17 + $0x7c0] sm:$0xff]
    %v1249 = vld [vmem:[#allocation17 + $0x7c8] sm:$0xff]
    %v1250 = vld [vmem:[#allocation17 + $0x7d0] sm:$0xff]
    %v1251 = vld [vmem:[#allocation17 + $0x7d8] sm:$0xff]
    %v1252 = vld [vmem:[#allocation17 + $0x7e0] sm:$0xff]
    %v1253 = vld [vmem:[#allocation17 + $0x7e8] sm:$0xff]
    %v1254 = vld [vmem:[#allocation17 + $0x7f0] sm:$0xff]
    %v1255 = vld [vmem:[#allocation17 + $0x7f8] sm:$0xff]
    %v1256 = vld [vmem:[#allocation17 + $0x800] sm:$0xff]
    %v1257 = vld [vmem:[#allocation17 + $0x808] sm:$0xff]
    %v1258 = vld [vmem:[#allocation17 + $0x810] sm:$0xff]
    %v1259 = vld [vmem:[#allocation17 + $0x818] sm:$0xff]
    %v1260 = vld [vmem:[#allocation17 + $0x820] sm:$0xff]
    %v1261 = vld [vmem:[#allocation17 + $0x828] sm:$0xff]
    %v1262 = vld [vmem:[#allocation17 + $0x830] sm:$0xff]
    %v1263 = vld [vmem:[#allocation17 + $0x838] sm:$0xff]
    %v1264 = vld [vmem:[#allocation17 + $0x840] sm:$0xff]
    %v1265 = vld [vmem:[#allocation17 + $0x848] sm:$0xff]
    %v1266 = vld [vmem:[#allocation17 + $0x850] sm:$0xff]
    %v1267 = vld [vmem:[#allocation17 + $0x858] sm:$0xff]
    %v1268 = vld [vmem:[#allocation17 + $0x860] sm:$0xff]
    %v1269 = vld [vmem:[#allocation17 + $0x868] sm:$0xff]
    %v1270 = vld [vmem:[#allocation17 + $0x870] sm:$0xff]
    %v1271 = vld [vmem:[#allocation17 + $0x878] sm:$0xff]
    %v1272 = vld [vmem:[#allocation17 + $0x880] sm:$0xff]
    %v1273 = vld [vmem:[#allocation17 + $0x888] sm:$0xff]
    %v1274 = vld [vmem:[#allocation17 + $0x890] sm:$0xff]
    %v1275 = vld [vmem:[#allocation17 + $0x898] sm:$0xff]
    %v1276 = vld [vmem:[#allocation17 + $0x8a0] sm:$0xff]
    %v1277 = vld [vmem:[#allocation17 + $0x8a8] sm:$0xff]
    %v1278 = vld [vmem:[#allocation17 + $0x8b0] sm:$0xff]
    %v1279 = vld [vmem:[#allocation17 + $0x8b8] sm:$0xff]
    %v1280 = vld [vmem:[#allocation17 + $0x8c0] sm:$0xff]
    %v1281 = vld [vmem:[#allocation17 + $0x8c8] sm:$0xff]
    %v1282 = vld [vmem:[#allocation17 + $0x8d0] sm:$0xff]
    %v1283 = vld [vmem:[#allocation17 + $0x8d8] sm:$0xff]
    %v1284 = vld [vmem:[#allocation17 + $0x8e0] sm:$0xff]
    %v1285 = vld [vmem:[#allocation17 + $0x8e8] sm:$0xff]
    %v1286 = vld [vmem:[#allocation17 + $0x8f0] sm:$0xff]
    %v1287 = vld [vmem:[#allocation17 + $0x8f8] sm:$0xff]
    %v1288 = vld [vmem:[#allocation17 + $0x900] sm:$0xff]
    %v1289 = vld [vmem:[#allocation17 + $0x908] sm:$0xff]
    %v1290 = vld [vmem:[#allocation17 + $0x910] sm:$0xff]
    %v1291 = vld [vmem:[#allocation17 + $0x918] sm:$0xff]
    %v1292 = vld [vmem:[#allocation17 + $0x920] sm:$0xff]
    %v1293 = vld [vmem:[#allocation17 + $0x928] sm:$0xff]
    %v1294 = vld [vmem:[#allocation17 + $0x930] sm:$0xff]
    %v1295 = vld [vmem:[#allocation17 + $0x938] sm:$0xff]
    %v1296 = vld [vmem:[#allocation17 + $0x940] sm:$0xff]
    %v1297 = vld [vmem:[#allocation17 + $0x948] sm:$0xff]
    %v1298 = vld [vmem:[#allocation17 + $0x950] sm:$0xff]
    %v1299 = vld [vmem:[#allocation17 + $0x958] sm:$0xff]
    %v1300 = vld [vmem:[#allocation17 + $0x960] sm:$0xff]
    %v1301 = vld [vmem:[#allocation17 + $0x968] sm:$0xff]
    %v1302 = vld [vmem:[#allocation17 + $0x970] sm:$0xff]
    %v1303 = vld [vmem:[#allocation17 + $0x978] sm:$0xff]
    %v1304 = vld [vmem:[#allocation17 + $0x980] sm:$0xff]
    %v1305 = vld [vmem:[#allocation17 + $0x988] sm:$0xff]
    %v1306 = vld [vmem:[#allocation17 + $0x990] sm:$0xff]
    %v1307 = vld [vmem:[#allocation17 + $0x998] sm:$0xff]
    %v1308 = vld [vmem:[#allocation17 + $0x9a0] sm:$0xff]
    %v1309 = vld [vmem:[#allocation17 + $0x9a8] sm:$0xff]
    %v1310 = vld [vmem:[#allocation17 + $0x9b0] sm:$0xff]
    %v1311 = vld [vmem:[#allocation17 + $0x9b8] sm:$0xff]
    %v1312 = vld [vmem:[#allocation17 + $0x9c0] sm:$0xff]
    %v1313 = vld [vmem:[#allocation17 + $0x9c8] sm:$0xff]
    %v1314 = vld [vmem:[#allocation17 + $0x9d0] sm:$0xff]
    %v1315 = vld [vmem:[#allocation17 + $0x9d8] sm:$0xff]
    %v1316 = vld [vmem:[#allocation17 + $0x9e0] sm:$0xff]
    %v1317 = vld [vmem:[#allocation17 + $0x9e8] sm:$0xff]
    %v1318 = vld [vmem:[#allocation17 + $0x9f0] sm:$0xff]
    %v1319 = vld [vmem:[#allocation17 + $0x9f8] sm:$0xff]
    %v1320 = vld [vmem:[#allocation17 + $0xa00] sm:$0xff]
    %v1321 = vld [vmem:[#allocation17 + $0xa08] sm:$0xff]
    %v1322 = vld [vmem:[#allocation17 + $0xa10] sm:$0xff]
    %v1323 = vld [vmem:[#allocation17 + $0xa18] sm:$0xff]
    %v1324 = vld [vmem:[#allocation17 + $0xa20] sm:$0xff]
    %v1325 = vld [vmem:[#allocation17 + $0xa28] sm:$0xff]
    %v1326 = vld [vmem:[#allocation17 + $0xa30] sm:$0xff]
    %v1327 = vld [vmem:[#allocation17 + $0xa38] sm:$0xff]
    %v1328 = vld [vmem:[#allocation17 + $0xa40] sm:$0xff]
    %v1329 = vld [vmem:[#allocation17 + $0xa48] sm:$0xff]
    %v1330 = vld [vmem:[#allocation17 + $0xa50] sm:$0xff]
    %v1331 = vld [vmem:[#allocation17 + $0xa58] sm:$0xff]
    %v1332 = vld [vmem:[#allocation17 + $0xa60] sm:$0xff]
    %v1333 = vld [vmem:[#allocation17 + $0xa68] sm:$0xff]
    %v1334 = vld [vmem:[#allocation17 + $0xa70] sm:$0xff]
    %v1335 = vld [vmem:[#allocation17 + $0xa78] sm:$0xff]
    %v1336 = vld [vmem:[#allocation17 + $0xa80] sm:$0xff]
    %v1337 = vld [vmem:[#allocation17 + $0xa88] sm:$0xff]
    %v1338 = vld [vmem:[#allocation17 + $0xa90] sm:$0xff]
    %v1339 = vld [vmem:[#allocation17 + $0xa98] sm:$0xff]
    %v1340 = vld [vmem:[#allocation17 + $0xaa0] sm:$0xff]
    %v1341 = vld [vmem:[#allocation17 + $0xaa8] sm:$0xff]
    %v1342 = vld [vmem:[#allocation17 + $0xab0] sm:$0xff]
    %v1343 = vld [vmem:[#allocation17 + $0xab8] sm:$0xff]
    %v1344 = vld [vmem:[#allocation17 + $0xac0] sm:$0xff]
    %v1345 = vld [vmem:[#allocation17 + $0xac8] sm:$0xff]
    %v1346 = vld [vmem:[#allocation17 + $0xad0] sm:$0xff]
    %v1347 = vld [vmem:[#allocation17 + $0xad8] sm:$0xff]
    %v1348 = vld [vmem:[#allocation17 + $0xae0] sm:$0xff]
    %v1349 = vld [vmem:[#allocation17 + $0xae8] sm:$0xff]
    %v1350 = vld [vmem:[#allocation17 + $0xaf0] sm:$0xff]
    %v1351 = vld [vmem:[#allocation17 + $0xaf8] sm:$0xff]
    %v1352 = vld [vmem:[#allocation17 + $0xb00] sm:$0xff]
    %v1353 = vld [vmem:[#allocation17 + $0xb08] sm:$0xff]
    %v1354 = vld [vmem:[#allocation17 + $0xb10] sm:$0xff]
    %v1355 = vld [vmem:[#allocation17 + $0xb18] sm:$0xff]
    %v1356 = vld [vmem:[#allocation17 + $0xb20] sm:$0xff]
    %v1357 = vld [vmem:[#allocation17 + $0xb28] sm:$0xff]
    %v1358 = vld [vmem:[#allocation17 + $0xb30] sm:$0xff]
    %v1359 = vld [vmem:[#allocation17 + $0xb38] sm:$0xff]
    %v1360 = vld [vmem:[#allocation17 + $0xb40] sm:$0xff]
    %v1361 = vld [vmem:[#allocation17 + $0xb48] sm:$0xff]
    %v1362 = vld [vmem:[#allocation17 + $0xb50] sm:$0xff]
    %v1363 = vld [vmem:[#allocation17 + $0xb58] sm:$0xff]
    %v1364 = vld [vmem:[#allocation17 + $0xb60] sm:$0xff]
    %v1365 = vld [vmem:[#allocation17 + $0xb68] sm:$0xff]
    %v1366 = vld [vmem:[#allocation17 + $0xb70] sm:$0xff]
    %v1367 = vld [vmem:[#allocation17 + $0xb78] sm:$0xff]
    %v1368 = vld [vmem:[#allocation17 + $0xb80] sm:$0xff]
    %v1369 = vld [vmem:[#allocation17 + $0xb88] sm:$0xff]
    %v1370 = vld [vmem:[#allocation17 + $0xb90] sm:$0xff]
    %v1371 = vld [vmem:[#allocation17 + $0xb98] sm:$0xff]
    %v1372 = vld [vmem:[#allocation17 + $0xba0] sm:$0xff]
    %v1373 = vld [vmem:[#allocation17 + $0xba8] sm:$0xff]
    %v1374 = vld [vmem:[#allocation17 + $0xbb0] sm:$0xff]
    %v1375 = vld [vmem:[#allocation17 + $0xbb8] sm:$0xff]
    %v1376 = vld [vmem:[#allocation17 + $0xbc0] sm:$0xff]
    %v1377 = vld [vmem:[#allocation17 + $0xbc8] sm:$0xff]
    %v1378 = vld [vmem:[#allocation17 + $0xbd0] sm:$0xff]
    %v1379 = vld [vmem:[#allocation17 + $0xbd8] sm:$0xff]
    %v1380 = vld [vmem:[#allocation17 + $0xbe0] sm:$0xff]
    %v1381 = vld [vmem:[#allocation17 + $0xbe8] sm:$0xff]
    %v1382 = vld [vmem:[#allocation17 + $0xbf0] sm:$0xff]
    %v1383 = vld [vmem:[#allocation17 + $0xbf8] sm:$0xff]
    %v1384 = vld [vmem:[#allocation17 + $0xc00] sm:$0xff]
    %v1385 = vld [vmem:[#allocation17 + $0xc08] sm:$0xff]
    %v1386 = vld [vmem:[#allocation17 + $0xc10] sm:$0xff]
    %v1387 = vld [vmem:[#allocation17 + $0xc18] sm:$0xff]
    %v1388 = vld [vmem:[#allocation17 + $0xc20] sm:$0xff]
    %v1389 = vld [vmem:[#allocation17 + $0xc28] sm:$0xff]
    %v1390 = vld [vmem:[#allocation17 + $0xc30] sm:$0xff]
    %v1391 = vld [vmem:[#allocation17 + $0xc38] sm:$0xff]
    %v1392 = vld [vmem:[#allocation17 + $0xc40] sm:$0xff]
    %v1393 = vld [vmem:[#allocation17 + $0xc48] sm:$0xff]
    %v1394 = vld [vmem:[#allocation17 + $0xc50] sm:$0xff]
    %v1395 = vld [vmem:[#allocation17 + $0xc58] sm:$0xff]
    %v1396 = vld [vmem:[#allocation17 + $0xc60] sm:$0xff]
    %v1397 = vld [vmem:[#allocation17 + $0xc68] sm:$0xff]
    %v1398 = vld [vmem:[#allocation17 + $0xc70] sm:$0xff]
    %v1399 = vld [vmem:[#allocation17 + $0xc78] sm:$0xff]
    %v1400 = vld [vmem:[#allocation17 + $0xc80] sm:$0xff]
    %v1401 = vld [vmem:[#allocation17 + $0xc88] sm:$0xff]
    %v1402 = vld [vmem:[#allocation17 + $0xc90] sm:$0xff]
    %v1403 = vld [vmem:[#allocation17 + $0xc98] sm:$0xff]
    %v1404 = vld [vmem:[#allocation17 + $0xca0] sm:$0xff]
    %v1405 = vld [vmem:[#allocation17 + $0xca8] sm:$0xff]
    %v1406 = vld [vmem:[#allocation17 + $0xcb0] sm:$0xff]
    %v1407 = vld [vmem:[#allocation17 + $0xcb8] sm:$0xff]
    %v1408 = vld [vmem:[#allocation17 + $0xcc0] sm:$0xff]
    %v1409 = vld [vmem:[#allocation17 + $0xcc8] sm:$0xff]
    %v1410 = vld [vmem:[#allocation17 + $0xcd0] sm:$0xff]
    %v1411 = vld [vmem:[#allocation17 + $0xcd8] sm:$0xff]
    %v1412 = vld [vmem:[#allocation17 + $0xce0] sm:$0xff]
    %v1413 = vld [vmem:[#allocation17 + $0xce8] sm:$0xff]
    %v1414 = vld [vmem:[#allocation17 + $0xcf0] sm:$0xff]
    %v1415 = vld [vmem:[#allocation17 + $0xcf8] sm:$0xff]
    %v1416 = vld [vmem:[#allocation17 + $0xd00] sm:$0xff]
    %v1417 = vld [vmem:[#allocation17 + $0xd08] sm:$0xff]
    %v1418 = vld [vmem:[#allocation17 + $0xd10] sm:$0xff]
    %v1419 = vld [vmem:[#allocation17 + $0xd18] sm:$0xff]
    %v1420 = vld [vmem:[#allocation17 + $0xd20] sm:$0xff]
    %v1421 = vld [vmem:[#allocation17 + $0xd28] sm:$0xff]
    %v1422 = vld [vmem:[#allocation17 + $0xd30] sm:$0xff]
    %v1423 = vld [vmem:[#allocation17 + $0xd38] sm:$0xff]
    %v1424 = vld [vmem:[#allocation17 + $0xd40] sm:$0xff]
    %v1425 = vld [vmem:[#allocation17 + $0xd48] sm:$0xff]
    %v1426 = vld [vmem:[#allocation17 + $0xd50] sm:$0xff]
    %v1427 = vld [vmem:[#allocation17 + $0xd58] sm:$0xff]
    %v1428 = vld [vmem:[#allocation17 + $0xd60] sm:$0xff]
    %v1429 = vld [vmem:[#allocation17 + $0xd68] sm:$0xff]
    %v1430 = vld [vmem:[#allocation17 + $0xd70] sm:$0xff]
    %v1431 = vld [vmem:[#allocation17 + $0xd78] sm:$0xff]
    %v1432 = vld [vmem:[#allocation17 + $0xd80] sm:$0xff]
    %v1433 = vld [vmem:[#allocation17 + $0xd88] sm:$0xff]
    %v1434 = vld [vmem:[#allocation17 + $0xd90] sm:$0xff]
    %v1435 = vld [vmem:[#allocation17 + $0xd98] sm:$0xff]
    %v1436 = vld [vmem:[#allocation17 + $0xda0] sm:$0xff]
    %v1437 = vld [vmem:[#allocation17 + $0xda8] sm:$0xff]
    %v1438 = vld [vmem:[#allocation17 + $0xdb0] sm:$0xff]
    %v1439 = vld [vmem:[#allocation17 + $0xdb8] sm:$0xff]
    %v1440 = vld [vmem:[#allocation17 + $0xdc0] sm:$0xff]
    %v1441 = vld [vmem:[#allocation17 + $0xdc8] sm:$0xff]
    %v1442 = vld [vmem:[#allocation17 + $0xdd0] sm:$0xff]
    %v1443 = vld [vmem:[#allocation17 + $0xdd8] sm:$0xff]
    %v1444 = vld [vmem:[#allocation17 + $0xde0] sm:$0xff]
    %v1445 = vld [vmem:[#allocation17 + $0xde8] sm:$0xff]
    %v1446 = vld [vmem:[#allocation17 + $0xdf0] sm:$0xff]
    %v1447 = vld [vmem:[#allocation17 + $0xdf8] sm:$0xff]
    %v1448 = vld [vmem:[#allocation17 + $0xe00] sm:$0xff]
    %v1449 = vld [vmem:[#allocation17 + $0xe08] sm:$0xff]
    %v1450 = vld [vmem:[#allocation17 + $0xe10] sm:$0xff]
    %v1451 = vld [vmem:[#allocation17 + $0xe18] sm:$0xff]
    %v1452 = vld [vmem:[#allocation17 + $0xe20] sm:$0xff]
    %v1453 = vld [vmem:[#allocation17 + $0xe28] sm:$0xff]
    %v1454 = vld [vmem:[#allocation17 + $0xe30] sm:$0xff]
    %v1455 = vld [vmem:[#allocation17 + $0xe38] sm:$0xff]
    %v1456 = vld [vmem:[#allocation17 + $0xe40] sm:$0xff]
    %v1457 = vld [vmem:[#allocation17 + $0xe48] sm:$0xff]
    %v1458 = vld [vmem:[#allocation17 + $0xe50] sm:$0xff]
    %v1459 = vld [vmem:[#allocation17 + $0xe58] sm:$0xff]
    %v1460 = vld [vmem:[#allocation17 + $0xe60] sm:$0xff]
    %v1461 = vld [vmem:[#allocation17 + $0xe68] sm:$0xff]
    %v1462 = vld [vmem:[#allocation17 + $0xe70] sm:$0xff]
    %v1463 = vld [vmem:[#allocation17 + $0xe78] sm:$0xff]
    %v1464 = vld [vmem:[#allocation17 + $0xe80] sm:$0xff]
    %v1465 = vld [vmem:[#allocation17 + $0xe88] sm:$0xff]
    %v1466 = vld [vmem:[#allocation17 + $0xe90] sm:$0xff]
    %v1467 = vld [vmem:[#allocation17 + $0xe98] sm:$0xff]
    %v1468 = vld [vmem:[#allocation17 + $0xea0] sm:$0xff]
    %v1469 = vld [vmem:[#allocation17 + $0xea8] sm:$0xff]
    %v1470 = vld [vmem:[#allocation17 + $0xeb0] sm:$0xff]
    %v1471 = vld [vmem:[#allocation17 + $0xeb8] sm:$0xff]
    %v1472 = vld [vmem:[#allocation17 + $0xec0] sm:$0xff]
    %v1473 = vld [vmem:[#allocation17 + $0xec8] sm:$0xff]
    %v1474 = vld [vmem:[#allocation17 + $0xed0] sm:$0xff]
    %v1475 = vld [vmem:[#allocation17 + $0xed8] sm:$0xff]
    %v1476 = vld [vmem:[#allocation17 + $0xee0] sm:$0xff]
    %v1477 = vld [vmem:[#allocation17 + $0xee8] sm:$0xff]
    %v1478 = vld [vmem:[#allocation17 + $0xef0] sm:$0xff]
    %v1479 = vld [vmem:[#allocation17 + $0xef8] sm:$0xff]
    %v1480 = vld [vmem:[#allocation17 + $0xf00] sm:$0xff]
    %v1481 = vld [vmem:[#allocation17 + $0xf08] sm:$0xff]
    %v1482 = vld [vmem:[#allocation17 + $0xf10] sm:$0xff]
    %v1483 = vld [vmem:[#allocation17 + $0xf18] sm:$0xff]
    %v1484 = vld [vmem:[#allocation17 + $0xf20] sm:$0xff]
    %v1485 = vld [vmem:[#allocation17 + $0xf28] sm:$0xff]
    %v1486 = vld [vmem:[#allocation17 + $0xf30] sm:$0xff]
    %v1487 = vld [vmem:[#allocation17 + $0xf38] sm:$0xff]
    %v1488 = vld [vmem:[#allocation17 + $0xf40] sm:$0xff]
    %v1489 = vld [vmem:[#allocation17 + $0xf48] sm:$0xff]
    %v1490 = vld [vmem:[#allocation17 + $0xf50] sm:$0xff]
    %v1491 = vld [vmem:[#allocation17 + $0xf58] sm:$0xff]
    %v1492 = vld [vmem:[#allocation17 + $0xf60] sm:$0xff]
    %v1493 = vld [vmem:[#allocation17 + $0xf68] sm:$0xff]
    %v1494 = vld [vmem:[#allocation17 + $0xf70] sm:$0xff]
    %v1495 = vld [vmem:[#allocation17 + $0xf78] sm:$0xff]
    %v1496 = vld [vmem:[#allocation17 + $0xf80] sm:$0xff]
    %v1497 = vld [vmem:[#allocation17 + $0xf88] sm:$0xff]
    %v1498 = vld [vmem:[#allocation17 + $0xf90] sm:$0xff]
    %v1499 = vld [vmem:[#allocation17 + $0xf98] sm:$0xff]
    %v1500 = vld [vmem:[#allocation17 + $0xfa0] sm:$0xff]
    %v1501 = vld [vmem:[#allocation17 + $0xfa8] sm:$0xff]
    %v1502 = vld [vmem:[#allocation17 + $0xfb0] sm:$0xff]
    %v1503 = vld [vmem:[#allocation17 + $0xfb8] sm:$0xff]
    %v1504 = vld [vmem:[#allocation17 + $0xfc0] sm:$0xff]
    %v1505 = vld [vmem:[#allocation17 + $0xfc8] sm:$0xff]
    %v1506 = vld [vmem:[#allocation17 + $0xfd0] sm:$0xff]
    %v1507 = vld [vmem:[#allocation17 + $0xfd8] sm:$0xff]
    %v1508 = vld [vmem:[#allocation17 + $0xfe0] sm:$0xff]
    %v1509 = vld [vmem:[#allocation17 + $0xfe8] sm:$0xff]
    %v1510 = vld [vmem:[#allocation17 + $0xff0] sm:$0xff]
    %v1511 = vld [vmem:[#allocation17 + $0xff8] sm:$0xff]
    %1512 = vmatprep.subr.mxu0 %v1121
    %1513 = vmatpush1.msra.mxu0 %v1120
    %1514 = vmatprep.subr.mxu0 %v1113
    %1515 = vmatpush1.msra.mxu0 %v1112
    %1516 = vmatprep.subr.mxu0 %v1105
    %1517 = vmatpush1.msra.mxu0 %v1104
    %1518 = vmatprep.subr.mxu0 %v1097
    %1519 = vmatpush1.msra.mxu0 %v1096
    %1520 = vmatprep.subr.mxu0 %v1089
    %1521 = vmatpush1.msra.mxu0 %v1088
    %1522 = vmatprep.subr.mxu0 %v1081
    %1523 = vmatpush1.msra.mxu0 %v1080
    %1524 = vmatprep.subr.mxu0 %v1073
    %1525 = vmatpush1.msra.mxu0 %v1072
    %1526 = vmatprep.subr.mxu0 %v1065
    %1527 = vmatpush1.msra.mxu0 %v1064
    %1528 = vmatprep.subr.mxu0 %v1057
    %1529 = vmatpush1.msra.mxu0 %v1056
    %1530 = vmatprep.subr.mxu0 %v1049
    %1531 = vmatpush1.msra.mxu0 %v1048
    %1532 = vmatprep.subr.mxu0 %v1041
    %1533 = vmatpush1.msra.mxu0 %v1040
    %1534 = vmatprep.subr.mxu0 %v1033
    %1535 = vmatpush1.msra.mxu0 %v1032
    %1536 = vmatprep.subr.mxu0 %v1025
    %1537 = vmatpush1.msra.mxu0 %v1024
    %1538 = vmatprep.subr.mxu0 %v1017
    %1539 = vmatpush1.msra.mxu0 %v1016
    %1540 = vmatprep.subr.mxu0 %v1009
    %1541 = vmatpush1.msra.mxu0 %v1008
    %1542 = vmatprep.subr.mxu0 %v1001
    %1543 = vmatpush1.msra.mxu0 %v1000
    %1544 = vmatprep.subr.mxu0 %v1249
    %1545 = vmatpush2.msra.mxu0 %v1248
    %1546 = vmatprep.subr.mxu0 %v1241
    %1547 = vmatpush2.msra.mxu0 %v1240
    %1548 = vmatprep.subr.mxu0 %v1233
    %1549 = vmatpush2.msra.mxu0 %v1232
    %1550 = vmatprep.subr.mxu0 %v1225
    %1551 = vmatpush2.msra.mxu0 %v1224
    %1552 = vmatprep.subr.mxu0 %v1217
    %1553 = vmatpush2.msra.mxu0 %v1216
    %1554 = vmatprep.subr.mxu0 %v1209
    %1555 = vmatpush2.msra.mxu0 %v1208
    %1556 = vmatprep.subr.mxu0 %v1201
    %1557 = vmatpush2.msra.mxu0 %v1200
    %1558 = vmatprep.subr.mxu0 %v1193
    %1559 = vmatpush2.msra.mxu0 %v1192
    %1560 = vmatprep.subr.mxu0 %v1185
    %1561 = vmatpush2.msra.mxu0 %v1184
    %1562 = vmatprep.subr.mxu0 %v1177
    %1563 = vmatpush2.msra.mxu0 %v1176
    %1564 = vmatprep.subr.mxu0 %v1169
    %1565 = vmatpush2.msra.mxu0 %v1168
    %1566 = vmatprep.subr.mxu0 %v1161
    %1567 = vmatpush2.msra.mxu0 %v1160
    %1568 = vmatprep.subr.mxu0 %v1153
    %1569 = vmatpush2.msra.mxu0 %v1152
    %1570 = vmatprep.subr.mxu0 %v1145
    %1571 = vmatpush2.msra.mxu0 %v1144
    %1572 = vmatprep.subr.mxu0 %v1137
    %1573 = vmatpush2.msra.mxu0 %v1136
    %1574 = vmatprep.subr.mxu0 %v1129
    %1575 = vmatpush2.msra.mxu0 %v1128
    %1576 = vmatprep.mubr.f32.mxu0 %v997
    %1577 = vmatmul.mubr.f32.gmra.mxu0 %v996
    %v1578 = vpop.f32.mrf.mxu0
    %v1579 = vadd.f32 0.0, %v1578
    %v1580 = vpop.f32.mrf.mxu0
    %v1581 = vadd.f32 0.0, %v1580
    %1582 = vdwg.mxu0
    %1583 = vmatprep.subr.mxu0 %v1377
    %1584 = vmatpush1.msra.mxu0 %v1376
    %1585 = vmatprep.subr.mxu0 %v1369
    %1586 = vmatpush1.msra.mxu0 %v1368
    %1587 = vmatprep.subr.mxu0 %v1361
    %1588 = vmatpush1.msra.mxu0 %v1360
    %1589 = vmatprep.subr.mxu0 %v1353
    %1590 = vmatpush1.msra.mxu0 %v1352
    %1591 = vmatprep.subr.mxu0 %v1345
    %1592 = vmatpush1.msra.mxu0 %v1344
    %1593 = vmatprep.subr.mxu0 %v1337
    %1594 = vmatpush1.msra.mxu0 %v1336
    %1595 = vmatprep.subr.mxu0 %v1329
    %1596 = vmatpush1.msra.mxu0 %v1328
    %1597 = vmatprep.subr.mxu0 %v1321
    %1598 = vmatpush1.msra.mxu0 %v1320
    %1599 = vmatprep.subr.mxu0 %v1313
    %1600 = vmatpush1.msra.mxu0 %v1312
    %1601 = vmatprep.subr.mxu0 %v1305
    %1602 = vmatpush1.msra.mxu0 %v1304
    %1603 = vmatprep.subr.mxu0 %v1297
    %1604 = vmatpush1.msra.mxu0 %v1296
    %1605 = vmatprep.subr.mxu0 %v1289
    %1606 = vmatpush1.msra.mxu0 %v1288
    %1607 = vmatprep.subr.mxu0 %v1281
    %1608 = vmatpush1.msra.mxu0 %v1280
    %1609 = vmatprep.subr.mxu0 %v1273
    %1610 = vmatpush1.msra.mxu0 %v1272
    %1611 = vmatprep.subr.mxu0 %v1265
    %1612 = vmatpush1.msra.mxu0 %v1264
    %1613 = vmatprep.subr.mxu0 %v1257
    %1614 = vmatpush1.msra.mxu0 %v1256
    %1615 = vmatprep.subr.mxu0 %v1505
    %1616 = vmatpush2.msra.mxu0 %v1504
    %1617 = vmatprep.subr.mxu0 %v1497
    %1618 = vmatpush2.msra.mxu0 %v1496
    %1619 = vmatprep.subr.mxu0 %v1489
    %1620 = vmatpush2.msra.mxu0 %v1488
    %1621 = vmatprep.subr.mxu0 %v1481
    %1622 = vmatpush2.msra.mxu0 %v1480
    %1623 = vmatprep.subr.mxu0 %v1473
    %1624 = vmatpush2.msra.mxu0 %v1472
    %1625 = vmatprep.subr.mxu0 %v1465
    %1626 = vmatpush2.msra.mxu0 %v1464
    %1627 = vmatprep.subr.mxu0 %v1457
    %1628 = vmatpush2.msra.mxu0 %v1456
    %1629 = vmatprep.subr.mxu0 %v1449
    %1630 = vmatpush2.msra.mxu0 %v1448
    %1631 = vmatprep.subr.mxu0 %v1441
    %1632 = vmatpush2.msra.mxu0 %v1440
    %1633 = vmatprep.subr.mxu0 %v1433
    %1634 = vmatpush2.msra.mxu0 %v1432
    %1635 = vmatprep.subr.mxu0 %v1425
    %1636 = vmatpush2.msra.mxu0 %v1424
    %1637 = vmatprep.subr.mxu0 %v1417
    %1638 = vmatpush2.msra.mxu0 %v1416
    %1639 = vmatprep.subr.mxu0 %v1409
    %1640 = vmatpush2.msra.mxu0 %v1408
    %1641 = vmatprep.subr.mxu0 %v1401
    %1642 = vmatpush2.msra.mxu0 %v1400
    %1643 = vmatprep.subr.mxu0 %v1393
    %1644 = vmatpush2.msra.mxu0 %v1392
    %1645 = vmatprep.subr.mxu0 %v1385
    %1646 = vmatpush2.msra.mxu0 %v1384
    %1647 = vmatprep.mubr.f32.mxu0 %v999
    %1648 = vmatmul.mubr.f32.gmra.mxu0 %v998
    %v1649 = vpop.f32.mrf.mxu0
    %v1650 = vadd.f32 %v1579, %v1649
    %v1651 = vpop.f32.mrf.mxu0
    %v1652 = vadd.f32 %v1581, %v1651
    %1653 = vdwg.mxu0
    %1654 = vmatprep.subr.mxu0 %v1123
    %1655 = vmatpush1.msra.mxu0 %v1122
    %1656 = vmatprep.subr.mxu0 %v1115
    %1657 = vmatpush1.msra.mxu0 %v1114
    %1658 = vmatprep.subr.mxu0 %v1107
    %1659 = vmatpush1.msra.mxu0 %v1106
    %1660 = vmatprep.subr.mxu0 %v1099
    %1661 = vmatpush1.msra.mxu0 %v1098
    %1662 = vmatprep.subr.mxu0 %v1091
    %1663 = vmatpush1.msra.mxu0 %v1090
    %1664 = vmatprep.subr.mxu0 %v1083
    %1665 = vmatpush1.msra.mxu0 %v1082
    %1666 = vmatprep.subr.mxu0 %v1075
    %1667 = vmatpush1.msra.mxu0 %v1074
    %1668 = vmatprep.subr.mxu0 %v1067
    %1669 = vmatpush1.msra.mxu0 %v1066
    %1670 = vmatprep.subr.mxu0 %v1059
    %1671 = vmatpush1.msra.mxu0 %v1058
    %1672 = vmatprep.subr.mxu0 %v1051
    %1673 = vmatpush1.msra.mxu0 %v1050
    %1674 = vmatprep.subr.mxu0 %v1043
    %1675 = vmatpush1.msra.mxu0 %v1042
    %1676 = vmatprep.subr.mxu0 %v1035
    %1677 = vmatpush1.msra.mxu0 %v1034
    %1678 = vmatprep.subr.mxu0 %v1027
    %1679 = vmatpush1.msra.mxu0 %v1026
    %1680 = vmatprep.subr.mxu0 %v1019
    %1681 = vmatpush1.msra.mxu0 %v1018
    %1682 = vmatprep.subr.mxu0 %v1011
    %1683 = vmatpush1.msra.mxu0 %v1010
    %1684 = vmatprep.subr.mxu0 %v1003
    %1685 = vmatpush1.msra.mxu0 %v1002
    %1686 = vmatprep.subr.mxu0 %v1251
    %1687 = vmatpush2.msra.mxu0 %v1250
    %1688 = vmatprep.subr.mxu0 %v1243
    %1689 = vmatpush2.msra.mxu0 %v1242
    %1690 = vmatprep.subr.mxu0 %v1235
    %1691 = vmatpush2.msra.mxu0 %v1234
    %1692 = vmatprep.subr.mxu0 %v1227
    %1693 = vmatpush2.msra.mxu0 %v1226
    %1694 = vmatprep.subr.mxu0 %v1219
    %1695 = vmatpush2.msra.mxu0 %v1218
    %1696 = vmatprep.subr.mxu0 %v1211
    %1697 = vmatpush2.msra.mxu0 %v1210
    %1698 = vmatprep.subr.mxu0 %v1203
    %1699 = vmatpush2.msra.mxu0 %v1202
    %1700 = vmatprep.subr.mxu0 %v1195
    %1701 = vmatpush2.msra.mxu0 %v1194
    %1702 = vmatprep.subr.mxu0 %v1187
    %1703 = vmatpush2.msra.mxu0 %v1186
    %1704 = vmatprep.subr.mxu0 %v1179
    %1705 = vmatpush2.msra.mxu0 %v1178
    %1706 = vmatprep.subr.mxu0 %v1171
    %1707 = vmatpush2.msra.mxu0 %v1170
    %1708 = vmatprep.subr.mxu0 %v1163
    %1709 = vmatpush2.msra.mxu0 %v1162
    %1710 = vmatprep.subr.mxu0 %v1155
    %1711 = vmatpush2.msra.mxu0 %v1154
    %1712 = vmatprep.subr.mxu0 %v1147
    %1713 = vmatpush2.msra.mxu0 %v1146
    %1714 = vmatprep.subr.mxu0 %v1139
    %1715 = vmatpush2.msra.mxu0 %v1138
    %1716 = vmatprep.subr.mxu0 %v1131
    %1717 = vmatpush2.msra.mxu0 %v1130
    %1718 = vmatprep.mubr.f32.mxu0 %v997
    %1719 = vmatmul.mubr.f32.gmra.mxu0 %v996
    %v1720 = vpop.f32.mrf.mxu0
    %v1721 = vadd.f32 0.0, %v1720
    %v1722 = vpop.f32.mrf.mxu0
    %v1723 = vadd.f32 0.0, %v1722
    %1724 = vdwg.mxu0
    %1725 = vmatprep.subr.mxu0 %v1379
    %1726 = vmatpush1.msra.mxu0 %v1378
    %1727 = vmatprep.subr.mxu0 %v1371
    %1728 = vmatpush1.msra.mxu0 %v1370
    %1729 = vmatprep.subr.mxu0 %v1363
    %1730 = vmatpush1.msra.mxu0 %v1362
    %1731 = vmatprep.subr.mxu0 %v1355
    %1732 = vmatpush1.msra.mxu0 %v1354
    %1733 = vmatprep.subr.mxu0 %v1347
    %1734 = vmatpush1.msra.mxu0 %v1346
    %1735 = vmatprep.subr.mxu0 %v1339
    %1736 = vmatpush1.msra.mxu0 %v1338
    %1737 = vmatprep.subr.mxu0 %v1331
    %1738 = vmatpush1.msra.mxu0 %v1330
    %1739 = vmatprep.subr.mxu0 %v1323
    %1740 = vmatpush1.msra.mxu0 %v1322
    %1741 = vmatprep.subr.mxu0 %v1315
    %1742 = vmatpush1.msra.mxu0 %v1314
    %1743 = vmatprep.subr.mxu0 %v1307
    %1744 = vmatpush1.msra.mxu0 %v1306
    %1745 = vmatprep.subr.mxu0 %v1299
    %1746 = vmatpush1.msra.mxu0 %v1298
    %1747 = vmatprep.subr.mxu0 %v1291
    %1748 = vmatpush1.msra.mxu0 %v1290
    %1749 = vmatprep.subr.mxu0 %v1283
    %1750 = vmatpush1.msra.mxu0 %v1282
    %1751 = vmatprep.subr.mxu0 %v1275
    %1752 = vmatpush1.msra.mxu0 %v1274
    %1753 = vmatprep.subr.mxu0 %v1267
    %1754 = vmatpush1.msra.mxu0 %v1266
    %1755 = vmatprep.subr.mxu0 %v1259
    %1756 = vmatpush1.msra.mxu0 %v1258
    %1757 = vmatprep.subr.mxu0 %v1507
    %1758 = vmatpush2.msra.mxu0 %v1506
    %1759 = vmatprep.subr.mxu0 %v1499
    %1760 = vmatpush2.msra.mxu0 %v1498
    %1761 = vmatprep.subr.mxu0 %v1491
    %1762 = vmatpush2.msra.mxu0 %v1490
    %1763 = vmatprep.subr.mxu0 %v1483
    %1764 = vmatpush2.msra.mxu0 %v1482
    %1765 = vmatprep.subr.mxu0 %v1475
    %1766 = vmatpush2.msra.mxu0 %v1474
    %1767 = vmatprep.subr.mxu0 %v1467
    %1768 = vmatpush2.msra.mxu0 %v1466
    %1769 = vmatprep.subr.mxu0 %v1459
    %1770 = vmatpush2.msra.mxu0 %v1458
    %1771 = vmatprep.subr.mxu0 %v1451
    %1772 = vmatpush2.msra.mxu0 %v1450
    %1773 = vmatprep.subr.mxu0 %v1443
    %1774 = vmatpush2.msra.mxu0 %v1442
    %1775 = vmatprep.subr.mxu0 %v1435
    %1776 = vmatpush2.msra.mxu0 %v1434
    %1777 = vmatprep.subr.mxu0 %v1427
    %1778 = vmatpush2.msra.mxu0 %v1426
    %1779 = vmatprep.subr.mxu0 %v1419
    %1780 = vmatpush2.msra.mxu0 %v1418
    %1781 = vmatprep.subr.mxu0 %v1411
    %1782 = vmatpush2.msra.mxu0 %v1410
    %1783 = vmatprep.subr.mxu0 %v1403
    %1784 = vmatpush2.msra.mxu0 %v1402
    %1785 = vmatprep.subr.mxu0 %v1395
    %1786 = vmatpush2.msra.mxu0 %v1394
    %1787 = vmatprep.subr.mxu0 %v1387
    %1788 = vmatpush2.msra.mxu0 %v1386
    %1789 = vmatprep.mubr.f32.mxu0 %v999
    %1790 = vmatmul.mubr.f32.gmra.mxu0 %v998
    %v1791 = vpop.f32.mrf.mxu0
    %v1792 = vadd.f32 %v1721, %v1791
    %v1793 = vpop.f32.mrf.mxu0
    %v1794 = vadd.f32 %v1723, %v1793
    %1795 = vdwg.mxu0
    %1796 = vmatprep.subr.mxu0 %v1125
    %1797 = vmatpush1.msra.mxu0 %v1124
    %1798 = vmatprep.subr.mxu0 %v1117
    %1799 = vmatpush1.msra.mxu0 %v1116
    %1800 = vmatprep.subr.mxu0 %v1109
    %1801 = vmatpush1.msra.mxu0 %v1108
    %1802 = vmatprep.subr.mxu0 %v1101
    %1803 = vmatpush1.msra.mxu0 %v1100
    %1804 = vmatprep.subr.mxu0 %v1093
    %1805 = vmatpush1.msra.mxu0 %v1092
    %1806 = vmatprep.subr.mxu0 %v1085
    %1807 = vmatpush1.msra.mxu0 %v1084
    %1808 = vmatprep.subr.mxu0 %v1077
    %1809 = vmatpush1.msra.mxu0 %v1076
    %1810 = vmatprep.subr.mxu0 %v1069
    %1811 = vmatpush1.msra.mxu0 %v1068
    %1812 = vmatprep.subr.mxu0 %v1061
    %1813 = vmatpush1.msra.mxu0 %v1060
    %1814 = vmatprep.subr.mxu0 %v1053
    %1815 = vmatpush1.msra.mxu0 %v1052
    %1816 = vmatprep.subr.mxu0 %v1045
    %1817 = vmatpush1.msra.mxu0 %v1044
    %1818 = vmatprep.subr.mxu0 %v1037
    %1819 = vmatpush1.msra.mxu0 %v1036
    %1820 = vmatprep.subr.mxu0 %v1029
    %1821 = vmatpush1.msra.mxu0 %v1028
    %1822 = vmatprep.subr.mxu0 %v1021
    %1823 = vmatpush1.msra.mxu0 %v1020
    %1824 = vmatprep.subr.mxu0 %v1013
    %1825 = vmatpush1.msra.mxu0 %v1012
    %1826 = vmatprep.subr.mxu0 %v1005
    %1827 = vmatpush1.msra.mxu0 %v1004
    %1828 = vmatprep.subr.mxu0 %v1253
    %1829 = vmatpush2.msra.mxu0 %v1252
    %1830 = vmatprep.subr.mxu0 %v1245
    %1831 = vmatpush2.msra.mxu0 %v1244
    %1832 = vmatprep.subr.mxu0 %v1237
    %1833 = vmatpush2.msra.mxu0 %v1236
    %1834 = vmatprep.subr.mxu0 %v1229
    %1835 = vmatpush2.msra.mxu0 %v1228
    %1836 = vmatprep.subr.mxu0 %v1221
    %1837 = vmatpush2.msra.mxu0 %v1220
    %1838 = vmatprep.subr.mxu0 %v1213
    %1839 = vmatpush2.msra.mxu0 %v1212
    %1840 = vmatprep.subr.mxu0 %v1205
    %1841 = vmatpush2.msra.mxu0 %v1204
    %1842 = vmatprep.subr.mxu0 %v1197
    %1843 = vmatpush2.msra.mxu0 %v1196
    %1844 = vmatprep.subr.mxu0 %v1189
    %1845 = vmatpush2.msra.mxu0 %v1188
    %1846 = vmatprep.subr.mxu0 %v1181
    %1847 = vmatpush2.msra.mxu0 %v1180
    %1848 = vmatprep.subr.mxu0 %v1173
    %1849 = vmatpush2.msra.mxu0 %v1172
    %1850 = vmatprep.subr.mxu0 %v1165
    %1851 = vmatpush2.msra.mxu0 %v1164
    %1852 = vmatprep.subr.mxu0 %v1157
    %1853 = vmatpush2.msra.mxu0 %v1156
    %1854 = vmatprep.subr.mxu0 %v1149
    %1855 = vmatpush2.msra.mxu0 %v1148
    %1856 = vmatprep.subr.mxu0 %v1141
    %1857 = vmatpush2.msra.mxu0 %v1140
    %1858 = vmatprep.subr.mxu0 %v1133
    %1859 = vmatpush2.msra.mxu0 %v1132
    %1860 = vmatprep.mubr.f32.mxu0 %v997
    %1861 = vmatmul.mubr.f32.gmra.mxu0 %v996
    %v1862 = vpop.f32.mrf.mxu0
    %v1863 = vadd.f32 0.0, %v1862
    %v1864 = vpop.f32.mrf.mxu0
    %v1865 = vadd.f32 0.0, %v1864
    %1866 = vdwg.mxu0
    %1867 = vmatprep.subr.mxu0 %v1381
    %1868 = vmatpush1.msra.mxu0 %v1380
    %1869 = vmatprep.subr.mxu0 %v1373
    %1870 = vmatpush1.msra.mxu0 %v1372
    %1871 = vmatprep.subr.mxu0 %v1365
    %1872 = vmatpush1.msra.mxu0 %v1364
    %1873 = vmatprep.subr.mxu0 %v1357
    %1874 = vmatpush1.msra.mxu0 %v1356
    %1875 = vmatprep.subr.mxu0 %v1349
    %1876 = vmatpush1.msra.mxu0 %v1348
    %1877 = vmatprep.subr.mxu0 %v1341
    %1878 = vmatpush1.msra.mxu0 %v1340
    %1879 = vmatprep.subr.mxu0 %v1333
    %1880 = vmatpush1.msra.mxu0 %v1332
    %1881 = vmatprep.subr.mxu0 %v1325
    %1882 = vmatpush1.msra.mxu0 %v1324
    %1883 = vmatprep.subr.mxu0 %v1317
    %1884 = vmatpush1.msra.mxu0 %v1316
    %1885 = vmatprep.subr.mxu0 %v1309
    %1886 = vmatpush1.msra.mxu0 %v1308
    %1887 = vmatprep.subr.mxu0 %v1301
    %1888 = vmatpush1.msra.mxu0 %v1300
    %1889 = vmatprep.subr.mxu0 %v1293
    %1890 = vmatpush1.msra.mxu0 %v1292
    %1891 = vmatprep.subr.mxu0 %v1285
    %1892 = vmatpush1.msra.mxu0 %v1284
    %1893 = vmatprep.subr.mxu0 %v1277
    %1894 = vmatpush1.msra.mxu0 %v1276
    %1895 = vmatprep.subr.mxu0 %v1269
    %1896 = vmatpush1.msra.mxu0 %v1268
    %1897 = vmatprep.subr.mxu0 %v1261
    %1898 = vmatpush1.msra.mxu0 %v1260
    %1899 = vmatprep.subr.mxu0 %v1509
    %1900 = vmatpush2.msra.mxu0 %v1508
    %1901 = vmatprep.subr.mxu0 %v1501
    %1902 = vmatpush2.msra.mxu0 %v1500
    %1903 = vmatprep.subr.mxu0 %v1493
    %1904 = vmatpush2.msra.mxu0 %v1492
    %1905 = vmatprep.subr.mxu0 %v1485
    %1906 = vmatpush2.msra.mxu0 %v1484
    %1907 = vmatprep.subr.mxu0 %v1477
    %1908 = vmatpush2.msra.mxu0 %v1476
    %1909 = vmatprep.subr.mxu0 %v1469
    %1910 = vmatpush2.msra.mxu0 %v1468
    %1911 = vmatprep.subr.mxu0 %v1461
    %1912 = vmatpush2.msra.mxu0 %v1460
    %1913 = vmatprep.subr.mxu0 %v1453
    %1914 = vmatpush2.msra.mxu0 %v1452
    %1915 = vmatprep.subr.mxu0 %v1445
    %1916 = vmatpush2.msra.mxu0 %v1444
    %1917 = vmatprep.subr.mxu0 %v1437
    %1918 = vmatpush2.msra.mxu0 %v1436
    %1919 = vmatprep.subr.mxu0 %v1429
    %1920 = vmatpush2.msra.mxu0 %v1428
    %1921 = vmatprep.subr.mxu0 %v1421
    %1922 = vmatpush2.msra.mxu0 %v1420
    %1923 = vmatprep.subr.mxu0 %v1413
    %1924 = vmatpush2.msra.mxu0 %v1412
    %1925 = vmatprep.subr.mxu0 %v1405
    %1926 = vmatpush2.msra.mxu0 %v1404
    %1927 = vmatprep.subr.mxu0 %v1397
    %1928 = vmatpush2.msra.mxu0 %v1396
    %1929 = vmatprep.subr.mxu0 %v1389
    %1930 = vmatpush2.msra.mxu0 %v1388
    %1931 = vmatprep.mubr.f32.mxu0 %v999
    %1932 = vmatmul.mubr.f32.gmra.mxu0 %v998
    %v1933 = vpop.f32.mrf.mxu0
    %v1934 = vadd.f32 %v1863, %v1933
    %v1935 = vpop.f32.mrf.mxu0
    %v1936 = vadd.f32 %v1865, %v1935
    %1937 = vdwg.mxu0
    %1938 = vmatprep.subr.mxu0 %v1127
    %1939 = vmatpush1.msra.mxu0 %v1126
    %1940 = vmatprep.subr.mxu0 %v1119
    %1941 = vmatpush1.msra.mxu0 %v1118
    %1942 = vmatprep.subr.mxu0 %v1111
    %1943 = vmatpush1.msra.mxu0 %v1110
    %1944 = vmatprep.subr.mxu0 %v1103
    %1945 = vmatpush1.msra.mxu0 %v1102
    %1946 = vmatprep.subr.mxu0 %v1095
    %1947 = vmatpush1.msra.mxu0 %v1094
    %1948 = vmatprep.subr.mxu0 %v1087
    %1949 = vmatpush1.msra.mxu0 %v1086
    %1950 = vmatprep.subr.mxu0 %v1079
    %1951 = vmatpush1.msra.mxu0 %v1078
    %1952 = vmatprep.subr.mxu0 %v1071
    %1953 = vmatpush1.msra.mxu0 %v1070
    %1954 = vmatprep.subr.mxu0 %v1063
    %1955 = vmatpush1.msra.mxu0 %v1062
    %1956 = vmatprep.subr.mxu0 %v1055
    %1957 = vmatpush1.msra.mxu0 %v1054
    %1958 = vmatprep.subr.mxu0 %v1047
    %1959 = vmatpush1.msra.mxu0 %v1046
    %1960 = vmatprep.subr.mxu0 %v1039
    %1961 = vmatpush1.msra.mxu0 %v1038
    %1962 = vmatprep.subr.mxu0 %v1031
    %1963 = vmatpush1.msra.mxu0 %v1030
    %1964 = vmatprep.subr.mxu0 %v1023
    %1965 = vmatpush1.msra.mxu0 %v1022
    %1966 = vmatprep.subr.mxu0 %v1015
    %1967 = vmatpush1.msra.mxu0 %v1014
    %1968 = vmatprep.subr.mxu0 %v1007
    %1969 = vmatpush1.msra.mxu0 %v1006
    %1970 = vmatprep.subr.mxu0 %v1255
    %1971 = vmatpush2.msra.mxu0 %v1254
    %1972 = vmatprep.subr.mxu0 %v1247
    %1973 = vmatpush2.msra.mxu0 %v1246
    %1974 = vmatprep.subr.mxu0 %v1239
    %1975 = vmatpush2.msra.mxu0 %v1238
    %1976 = vmatprep.subr.mxu0 %v1231
    %1977 = vmatpush2.msra.mxu0 %v1230
    %1978 = vmatprep.subr.mxu0 %v1223
    %1979 = vmatpush2.msra.mxu0 %v1222
    %1980 = vmatprep.subr.mxu0 %v1215
    %1981 = vmatpush2.msra.mxu0 %v1214
    %1982 = vmatprep.subr.mxu0 %v1207
    %1983 = vmatpush2.msra.mxu0 %v1206
    %1984 = vmatprep.subr.mxu0 %v1199
    %1985 = vmatpush2.msra.mxu0 %v1198
    %1986 = vmatprep.subr.mxu0 %v1191
    %1987 = vmatpush2.msra.mxu0 %v1190
    %1988 = vmatprep.subr.mxu0 %v1183
    %1989 = vmatpush2.msra.mxu0 %v1182
    %1990 = vmatprep.subr.mxu0 %v1175
    %1991 = vmatpush2.msra.mxu0 %v1174
    %1992 = vmatprep.subr.mxu0 %v1167
    %1993 = vmatpush2.msra.mxu0 %v1166
    %1994 = vmatprep.subr.mxu0 %v1159
    %1995 = vmatpush2.msra.mxu0 %v1158
    %1996 = vmatprep.subr.mxu0 %v1151
    %1997 = vmatpush2.msra.mxu0 %v1150
    %1998 = vmatprep.subr.mxu0 %v1143
    %1999 = vmatpush2.msra.mxu0 %v1142
    %2000 = vmatprep.subr.mxu0 %v1135
    %2001 = vmatpush2.msra.mxu0 %v1134
    %2002 = vmatprep.mubr.f32.mxu0 %v997
    %2003 = vmatmul.mubr.f32.gmra.mxu0 %v996
    %v2004 = vpop.f32.mrf.mxu0
    %v2005 = vadd.f32 0.0, %v2004
    %v2006 = vpop.f32.mrf.mxu0
    %v2007 = vadd.f32 0.0, %v2006
    %2008 = vdwg.mxu0
    %2009 = vmatprep.subr.mxu0 %v1383
    %2010 = vmatpush1.msra.mxu0 %v1382
    %2011 = vmatprep.subr.mxu0 %v1375
    %2012 = vmatpush1.msra.mxu0 %v1374
    %2013 = vmatprep.subr.mxu0 %v1367
    %2014 = vmatpush1.msra.mxu0 %v1366
    %2015 = vmatprep.subr.mxu0 %v1359
    %2016 = vmatpush1.msra.mxu0 %v1358
    %2017 = vmatprep.subr.mxu0 %v1351
    %2018 = vmatpush1.msra.mxu0 %v1350
    %2019 = vmatprep.subr.mxu0 %v1343
    %2020 = vmatpush1.msra.mxu0 %v1342
    %2021 = vmatprep.subr.mxu0 %v1335
    %2022 = vmatpush1.msra.mxu0 %v1334
    %2023 = vmatprep.subr.mxu0 %v1327
    %2024 = vmatpush1.msra.mxu0 %v1326
    %2025 = vmatprep.subr.mxu0 %v1319
    %2026 = vmatpush1.msra.mxu0 %v1318
    %2027 = vmatprep.subr.mxu0 %v1311
    %2028 = vmatpush1.msra.mxu0 %v1310
    %2029 = vmatprep.subr.mxu0 %v1303
    %2030 = vmatpush1.msra.mxu0 %v1302
    %2031 = vmatprep.subr.mxu0 %v1295
    %2032 = vmatpush1.msra.mxu0 %v1294
    %2033 = vmatprep.subr.mxu0 %v1287
    %2034 = vmatpush1.msra.mxu0 %v1286
    %2035 = vmatprep.subr.mxu0 %v1279
    %2036 = vmatpush1.msra.mxu0 %v1278
    %2037 = vmatprep.subr.mxu0 %v1271
    %2038 = vmatpush1.msra.mxu0 %v1270
    %2039 = vmatprep.subr.mxu0 %v1263
    %2040 = vmatpush1.msra.mxu0 %v1262
    %2041 = vmatprep.subr.mxu0 %v1511
    %2042 = vmatpush2.msra.mxu0 %v1510
    %2043 = vmatprep.subr.mxu0 %v1503
    %2044 = vmatpush2.msra.mxu0 %v1502
    %2045 = vmatprep.subr.mxu0 %v1495
    %2046 = vmatpush2.msra.mxu0 %v1494
    %2047 = vmatprep.subr.mxu0 %v1487
    %2048 = vmatpush2.msra.mxu0 %v1486
    %2049 = vmatprep.subr.mxu0 %v1479
    %2050 = vmatpush2.msra.mxu0 %v1478
    %2051 = vmatprep.subr.mxu0 %v1471
    %2052 = vmatpush2.msra.mxu0 %v1470
    %2053 = vmatprep.subr.mxu0 %v1463
    %2054 = vmatpush2.msra.mxu0 %v1462
    %2055 = vmatprep.subr.mxu0 %v1455
    %2056 = vmatpush2.msra.mxu0 %v1454
    %2057 = vmatprep.subr.mxu0 %v1447
    %2058 = vmatpush2.msra.mxu0 %v1446
    %2059 = vmatprep.subr.mxu0 %v1439
    %2060 = vmatpush2.msra.mxu0 %v1438
    %2061 = vmatprep.subr.mxu0 %v1431
    %2062 = vmatpush2.msra.mxu0 %v1430
    %2063 = vmatprep.subr.mxu0 %v1423
    %2064 = vmatpush2.msra.mxu0 %v1422
    %2065 = vmatprep.subr.mxu0 %v1415
    %2066 = vmatpush2.msra.mxu0 %v1414
    %2067 = vmatprep.subr.mxu0 %v1407
    %2068 = vmatpush2.msra.mxu0 %v1406
    %2069 = vmatprep.subr.mxu0 %v1399
    %2070 = vmatpush2.msra.mxu0 %v1398
    %2071 = vmatprep.subr.mxu0 %v1391
    %2072 = vmatpush2.msra.mxu0 %v1390
    %2073 = vmatprep.mubr.f32.mxu0 %v999
    %2074 = vmatmul.mubr.f32.gmra.mxu0 %v998
    %v2075 = vpop.f32.mrf.mxu0
    %v2076 = vadd.f32 %v2005, %v2075
    %v2077 = vpop.f32.mrf.mxu0
    %v2078 = vadd.f32 %v2007, %v2077
    %2079 = vdwg.mxu0
    %v2080 = vrot.slane %v1650, 4
    %v2081 = vadd.f32 %v1650, %v2080
    %v2082 = vrot.slane %v2081, 2
    %v2083 = vadd.f32 %v2081, %v2082
    %v2084 = vrot.slane %v2083, 1
    %v2085 = vadd.f32 %v2083, %v2084
    %v2086 = vrot.slane %v1652, 4
    %v2087 = vadd.f32 %v1652, %v2086
    %v2088 = vrot.slane %v2087, 2
    %v2089 = vadd.f32 %v2087, %v2088
    %v2090 = vrot.slane %v2089, 1
    %v2091 = vadd.f32 %v2089, %v2090
    %v2092 = vrot.slane %v1792, 4
    %v2093 = vadd.f32 %v1792, %v2092
    %v2094 = vrot.slane %v2093, 2
    %v2095 = vadd.f32 %v2093, %v2094
    %v2096 = vrot.slane %v2095, 1
    %v2097 = vadd.f32 %v2095, %v2096
    %v2098 = vrot.slane %v1794, 4
    %v2099 = vadd.f32 %v1794, %v2098
    %v2100 = vrot.slane %v2099, 2
    %v2101 = vadd.f32 %v2099, %v2100
    %v2102 = vrot.slane %v2101, 1
    %v2103 = vadd.f32 %v2101, %v2102
    %v2104 = vrot.slane %v1934, 4
    %v2105 = vadd.f32 %v1934, %v2104
    %v2106 = vrot.slane %v2105, 2
    %v2107 = vadd.f32 %v2105, %v2106
    %v2108 = vrot.slane %v2107, 1
    %v2109 = vadd.f32 %v2107, %v2108
    %v2110 = vrot.slane %v1936, 4
    %v2111 = vadd.f32 %v1936, %v2110
    %v2112 = vrot.slane %v2111, 2
    %v2113 = vadd.f32 %v2111, %v2112
    %v2114 = vrot.slane %v2113, 1
    %v2115 = vadd.f32 %v2113, %v2114
    %v2116 = vrot.slane %v2076, 4
    %v2117 = vadd.f32 %v2076, %v2116
    %v2118 = vrot.slane %v2117, 2
    %v2119 = vadd.f32 %v2117, %v2118
    %v2120 = vrot.slane %v2119, 1
    %v2121 = vadd.f32 %v2119, %v2120
    %v2122 = vrot.slane %v2078, 4
    %v2123 = vadd.f32 %v2078, %v2122
    %v2124 = vrot.slane %v2123, 2
    %v2125 = vadd.f32 %v2123, %v2124
    %v2126 = vrot.slane %v2125, 1
    %v2127 = vadd.f32 %v2125, %v2126
    %v2128 = vmul.f32 %v2085, %v431
    %v2129 = vmul.f32 %v2091, %v431
    %v2130 = vmul.f32 %v2097, %v431
    %v2131 = vmul.f32 %v2103, %v431
    %v2132 = vmul.f32 %v2109, %v431
    %v2133 = vmul.f32 %v2115, %v431
    %v2134 = vmul.f32 %v2121, %v431
    %v2135 = vmul.f32 %v2127, %v431
    %v2136 = vmul.f32 %v1650, %v1650
    %v2137 = vmul.f32 %v1652, %v1652
    %v2138 = vmul.f32 %v1792, %v1792
    %v2139 = vmul.f32 %v1794, %v1794
    %v2140 = vmul.f32 %v1934, %v1934
    %v2141 = vmul.f32 %v1936, %v1936
    %v2142 = vmul.f32 %v2076, %v2076
    %v2143 = vmul.f32 %v2078, %v2078
    %v2144 = vrot.slane %v2136, 4
    %v2145 = vadd.f32 %v2136, %v2144
    %v2146 = vrot.slane %v2145, 2
    %v2147 = vadd.f32 %v2145, %v2146
    %v2148 = vrot.slane %v2147, 1
    %v2149 = vadd.f32 %v2147, %v2148
    %v2150 = vrot.slane %v2137, 4
    %v2151 = vadd.f32 %v2137, %v2150
    %v2152 = vrot.slane %v2151, 2
    %v2153 = vadd.f32 %v2151, %v2152
    %v2154 = vrot.slane %v2153, 1
    %v2155 = vadd.f32 %v2153, %v2154
    %v2156 = vrot.slane %v2138, 4
    %v2157 = vadd.f32 %v2138, %v2156
    %v2158 = vrot.slane %v2157, 2
    %v2159 = vadd.f32 %v2157, %v2158
    %v2160 = vrot.slane %v2159, 1
    %v2161 = vadd.f32 %v2159, %v2160
    %v2162 = vrot.slane %v2139, 4
    %v2163 = vadd.f32 %v2139, %v2162
    %v2164 = vrot.slane %v2163, 2
    %v2165 = vadd.f32 %v2163, %v2164
    %v2166 = vrot.slane %v2165, 1
    %v2167 = vadd.f32 %v2165, %v2166
    %v2168 = vrot.slane %v2140, 4
    %v2169 = vadd.f32 %v2140, %v2168
    %v2170 = vrot.slane %v2169, 2
    %v2171 = vadd.f32 %v2169, %v2170
    %v2172 = vrot.slane %v2171, 1
    %v2173 = vadd.f32 %v2171, %v2172
    %v2174 = vrot.slane %v2141, 4
    %v2175 = vadd.f32 %v2141, %v2174
    %v2176 = vrot.slane %v2175, 2
    %v2177 = vadd.f32 %v2175, %v2176
    %v2178 = vrot.slane %v2177, 1
    %v2179 = vadd.f32 %v2177, %v2178
    %v2180 = vrot.slane %v2142, 4
    %v2181 = vadd.f32 %v2142, %v2180
    %v2182 = vrot.slane %v2181, 2
    %v2183 = vadd.f32 %v2181, %v2182
    %v2184 = vrot.slane %v2183, 1
    %v2185 = vadd.f32 %v2183, %v2184
    %v2186 = vrot.slane %v2143, 4
    %v2187 = vadd.f32 %v2143, %v2186
    %v2188 = vrot.slane %v2187, 2
    %v2189 = vadd.f32 %v2187, %v2188
    %v2190 = vrot.slane %v2189, 1
    %v2191 = vadd.f32 %v2189, %v2190
    %v2192 = vmul.f32 %v2149, %v431
    %v2193 = vmul.f32 %v2155, %v431
    %v2194 = vmul.f32 %v2161, %v431
    %v2195 = vmul.f32 %v2167, %v431
    %v2196 = vmul.f32 %v2173, %v431
    %v2197 = vmul.f32 %v2179, %v431
    %v2198 = vmul.f32 %v2185, %v431
    %v2199 = vmul.f32 %v2191, %v431
    %v2200 = vmul.f32 %v2128, %v2128
    %v2201 = vmul.f32 %v2129, %v2129
    %v2202 = vmul.f32 %v2130, %v2130
    %v2203 = vmul.f32 %v2131, %v2131
    %v2204 = vmul.f32 %v2132, %v2132
    %v2205 = vmul.f32 %v2133, %v2133
    %v2206 = vmul.f32 %v2134, %v2134
    %v2207 = vmul.f32 %v2135, %v2135
    %v2208 = vsub.f32 %v2192, %v2200
    %v2209 = vsub.f32 %v2193, %v2201
    %v2210 = vsub.f32 %v2194, %v2202
    %v2211 = vsub.f32 %v2195, %v2203
    %v2212 = vsub.f32 %v2196, %v2204
    %v2213 = vsub.f32 %v2197, %v2205
    %v2214 = vsub.f32 %v2198, %v2206
    %v2215 = vsub.f32 %v2199, %v2207
    %v2216 = vld [vmem:[#allocation19] sm:$0xff]
    %v2217 = vadd.f32 %v2208, 0.8
    %v2218 = vadd.f32 %v2209, 0.8
    %v2219 = vadd.f32 %v2210, 0.8
    %v2220 = vadd.f32 %v2211, 0.8
    %v2221 = vadd.f32 %v2212, 0.8
    %v2222 = vadd.f32 %v2213, 0.8
    %v2223 = vadd.f32 %v2214, 0.8
    %v2224 = vadd.f32 %v2215, 0.8
    %v2225 = vrsqrt.pop %v2217
    %v2226 = vrsqrt.pop %v2218
    %v2227 = vrsqrt.pop %v2219
    %v2228 = vrsqrt.pop %v2220
    %v2229 = vrsqrt.pop %v2221
    %v2230 = vrsqrt.pop %v2222
    %v2231 = vrsqrt.pop %v2223
    %v2232 = vrsqrt.pop %v2224
    %v2241 = vcombine.low %v2225, %v2226
    %v2242 = vcombine.low %v2227, %v2228
    %v2243 = vcombine.low %v2229, %v2230
    %v2244 = vcombine.low %v2231, %v2232
    %v2246 = vunpack.c.l.s4 1966171168
    %v2247 = vunpack.c.0.s8 %v2246
    %v2248 = vlaneseq
    %v2249 = vshrl.u32 %v2248, 7
    %v2250 = vsub.s32 %v2247, %v2249
    %v2251 = vrot.slane %v2241, %v2250
    %v2253 = vunpack.c.l.s4 1966171168
    %v2254 = vunpack.c.0.s8 %v2253
    %v2255 = vlaneseq
    %v2256 = vshrl.u32 %v2255, 7
    %v2257 = vsub.s32 %v2254, %v2256
    %v2258 = vrot.slane %v2242, %v2257
    %v2260 = vunpack.c.l.s4 1966171168
    %v2261 = vunpack.c.0.s8 %v2260
    %v2262 = vlaneseq
    %v2263 = vshrl.u32 %v2262, 7
    %v2264 = vsub.s32 %v2261, %v2263
    %v2265 = vrot.slane %v2243, %v2264
    %v2267 = vunpack.c.l.s4 1966171168
    %v2268 = vunpack.c.0.s8 %v2267
    %v2269 = vlaneseq
    %v2270 = vshrl.u32 %v2269, 7
    %v2271 = vsub.s32 %v2268, %v2270
    %v2272 = vrot.slane %v2244, %v2271
    %v2273 = vcombine.low %v2251, %v2258
    %v2274 = vcombine.low %v2265, %v2272
    %v2276 = vunpack.c.l.s4 1966171168
    %v2277 = vunpack.c.0.s8 %v2276
    %v2278 = vlaneseq
    %v2279 = vshrl.u32 %v2278, 7
    %v2280 = vsub.s32 %v2277, %v2279
    %v2281 = vrot.slane %v2273, %v2280
    %v2283 = vunpack.c.l.s4 1966171168
    %v2284 = vunpack.c.0.s8 %v2283
    %v2285 = vlaneseq
    %v2286 = vshrl.u32 %v2285, 7
    %v2287 = vsub.s32 %v2284, %v2286
    %v2288 = vrot.slane %v2274, %v2287
    %v2289 = vcombine.low %v2281, %v2288
    %v2291 = vmul.f32 %v2216, %v2289
    %v2292 = vld [vmem:[#allocation20] sm:$0xff]
    %v2294 = vlaneseq
    %v2295 = vshrl.u32 %v2294, 7
    %v2296 = vsub.s32 0, %v2295
    %v2297 = vrot.slane %v2291, %v2296
    %v2298 = vlaneseq
    %v2299 = vshrl.u32 %v2298, 7
    %v2300 = vsub.s32 1, %v2299
    %v2301 = vrot.slane %v2291, %v2300
    %v2302 = vlaneseq
    %v2303 = vshrl.u32 %v2302, 7
    %v2304 = vsub.s32 2, %v2303
    %v2305 = vrot.slane %v2291, %v2304
    %v2306 = vlaneseq
    %v2307 = vshrl.u32 %v2306, 7
    %v2308 = vsub.s32 3, %v2307
    %v2309 = vrot.slane %v2291, %v2308
    %v2310 = vlaneseq
    %v2311 = vshrl.u32 %v2310, 7
    %v2312 = vsub.s32 4, %v2311
    %v2313 = vrot.slane %v2291, %v2312
    %v2314 = vlaneseq
    %v2315 = vshrl.u32 %v2314, 7
    %v2316 = vsub.s32 5, %v2315
    %v2317 = vrot.slane %v2291, %v2316
    %v2318 = vlaneseq
    %v2319 = vshrl.u32 %v2318, 7
    %v2320 = vsub.s32 6, %v2319
    %v2321 = vrot.slane %v2291, %v2320
    %v2322 = vlaneseq
    %v2323 = vshrl.u32 %v2322, 7
    %v2324 = vsub.s32 7, %v2323
    %v2325 = vrot.slane %v2291, %v2324
    %v2334 = vmul.f32 %v2128, %v2297
    %v2335 = vmul.f32 %v2129, %v2301
    %v2336 = vmul.f32 %v2130, %v2305
    %v2337 = vmul.f32 %v2131, %v2309
    %v2338 = vmul.f32 %v2132, %v2313
    %v2339 = vmul.f32 %v2133, %v2317
    %v2340 = vmul.f32 %v2134, %v2321
    %v2341 = vmul.f32 %v2135, %v2325
    %v2350 = vcombine.low %v2334, %v2335
    %v2351 = vcombine.low %v2336, %v2337
    %v2352 = vcombine.low %v2338, %v2339
    %v2353 = vcombine.low %v2340, %v2341
    %v2355 = vunpack.c.l.s4 1966171168
    %v2356 = vunpack.c.0.s8 %v2355
    %v2357 = vlaneseq
    %v2358 = vshrl.u32 %v2357, 7
    %v2359 = vsub.s32 %v2356, %v2358
    %v2360 = vrot.slane %v2350, %v2359
    %v2362 = vunpack.c.l.s4 1966171168
    %v2363 = vunpack.c.0.s8 %v2362
    %v2364 = vlaneseq
    %v2365 = vshrl.u32 %v2364, 7
    %v2366 = vsub.s32 %v2363, %v2365
    %v2367 = vrot.slane %v2351, %v2366
    %v2369 = vunpack.c.l.s4 1966171168
    %v2370 = vunpack.c.0.s8 %v2369
    %v2371 = vlaneseq
    %v2372 = vshrl.u32 %v2371, 7
    %v2373 = vsub.s32 %v2370, %v2372
    %v2374 = vrot.slane %v2352, %v2373
    %v2376 = vunpack.c.l.s4 1966171168
    %v2377 = vunpack.c.0.s8 %v2376
    %v2378 = vlaneseq
    %v2379 = vshrl.u32 %v2378, 7
    %v2380 = vsub.s32 %v2377, %v2379
    %v2381 = vrot.slane %v2353, %v2380
    %v2382 = vcombine.low %v2360, %v2367
    %v2383 = vcombine.low %v2374, %v2381
    %v2385 = vunpack.c.l.s4 1966171168
    %v2386 = vunpack.c.0.s8 %v2385
    %v2387 = vlaneseq
    %v2388 = vshrl.u32 %v2387, 7
    %v2389 = vsub.s32 %v2386, %v2388
    %v2390 = vrot.slane %v2382, %v2389
    %v2392 = vunpack.c.l.s4 1966171168
    %v2393 = vunpack.c.0.s8 %v2392
    %v2394 = vlaneseq
    %v2395 = vshrl.u32 %v2394, 7
    %v2396 = vsub.s32 %v2393, %v2395
    %v2397 = vrot.slane %v2383, %v2396
    %v2398 = vcombine.low %v2390, %v2397
    %v2400 = vsub.f32 %v2292, %v2398
    %v2401 = vmul.f32 %v1650, %v2297
    %v2402 = vmul.f32 %v1652, %v2301
    %v2403 = vmul.f32 %v1792, %v2305
    %v2404 = vmul.f32 %v1794, %v2309
    %v2405 = vmul.f32 %v1934, %v2313
    %v2406 = vmul.f32 %v1936, %v2317
    %v2407 = vmul.f32 %v2076, %v2321
    %v2408 = vmul.f32 %v2078, %v2325
    %v2410 = vlaneseq
    %v2411 = vshrl.u32 %v2410, 7
    %v2412 = vsub.s32 0, %v2411
    %v2413 = vrot.slane %v2400, %v2412
    %v2414 = vlaneseq
    %v2415 = vshrl.u32 %v2414, 7
    %v2416 = vsub.s32 1, %v2415
    %v2417 = vrot.slane %v2400, %v2416
    %v2418 = vlaneseq
    %v2419 = vshrl.u32 %v2418, 7
    %v2420 = vsub.s32 2, %v2419
    %v2421 = vrot.slane %v2400, %v2420
    %v2422 = vlaneseq
    %v2423 = vshrl.u32 %v2422, 7
    %v2424 = vsub.s32 3, %v2423
    %v2425 = vrot.slane %v2400, %v2424
    %v2426 = vlaneseq
    %v2427 = vshrl.u32 %v2426, 7
    %v2428 = vsub.s32 4, %v2427
    %v2429 = vrot.slane %v2400, %v2428
    %v2430 = vlaneseq
    %v2431 = vshrl.u32 %v2430, 7
    %v2432 = vsub.s32 5, %v2431
    %v2433 = vrot.slane %v2400, %v2432
    %v2434 = vlaneseq
    %v2435 = vshrl.u32 %v2434, 7
    %v2436 = vsub.s32 6, %v2435
    %v2437 = vrot.slane %v2400, %v2436
    %v2438 = vlaneseq
    %v2439 = vshrl.u32 %v2438, 7
    %v2440 = vsub.s32 7, %v2439
    %v2441 = vrot.slane %v2400, %v2440
    %v2450 = vadd.f32 %v2401, %v2413
    %v2451 = vadd.f32 %v2402, %v2417
    %v2452 = vadd.f32 %v2403, %v2421
    %v2453 = vadd.f32 %v2404, %v2425
    %v2454 = vadd.f32 %v2405, %v2429
    %v2455 = vadd.f32 %v2406, %v2433
    %v2456 = vadd.f32 %v2407, %v2437
    %v2457 = vadd.f32 %v2408, %v2441
    %v2458 = vmul.f32 %v2450, 0.2
    %v2459 = vmul.f32 %v2451, 0.2
    %v2460 = vmul.f32 %v2452, 0.2
    %v2461 = vmul.f32 %v2453, 0.2
    %v2462 = vmul.f32 %v2454, 0.2
    %v2463 = vmul.f32 %v2455, 0.2
    %v2464 = vmul.f32 %v2456, 0.2
    %v2465 = vmul.f32 %v2457, 0.2
    %v2466 = vmax.f32 %v2450, %v2458
    %v2467 = vmax.f32 %v2451, %v2459
    %v2468 = vmax.f32 %v2452, %v2460
    %v2469 = vmax.f32 %v2453, %v2461
    %v2470 = vmax.f32 %v2454, %v2462
    %v2471 = vmax.f32 %v2455, %v2463
    %v2472 = vmax.f32 %v2456, %v2464
    %v2473 = vmax.f32 %v2457, %v2465
    %v2474 = vld [vmem:[#allocation22] sm:$0xff]
    %v2475 = vld [vmem:[#allocation22 + $0x8] sm:$0xff]
    %v2476 = vld [vmem:[#allocation22 + $0x10] sm:$0xff]
    %v2477 = vld [vmem:[#allocation22 + $0x18] sm:$0xff]
    %v2478 = vld [vmem:[#allocation22 + $0x20] sm:$0xff]
    %v2479 = vld [vmem:[#allocation22 + $0x28] sm:$0xff]
    %v2480 = vld [vmem:[#allocation22 + $0x30] sm:$0xff]
    %v2481 = vld [vmem:[#allocation22 + $0x38] sm:$0xff]
    %v2482 = vld [vmem:[#allocation22 + $0x40] sm:$0xff]
    %v2483 = vld [vmem:[#allocation22 + $0x48] sm:$0xff]
    %v2484 = vld [vmem:[#allocation22 + $0x50] sm:$0xff]
    %v2485 = vld [vmem:[#allocation22 + $0x58] sm:$0xff]
    %v2486 = vld [vmem:[#allocation22 + $0x60] sm:$0xff]
    %v2487 = vld [vmem:[#allocation22 + $0x68] sm:$0xff]
    %v2488 = vld [vmem:[#allocation22 + $0x70] sm:$0xff]
    %v2489 = vld [vmem:[#allocation22 + $0x78] sm:$0xff]
    %v2490 = vld [vmem:[#allocation22 + $0x80] sm:$0xff]
    %v2491 = vld [vmem:[#allocation22 + $0x88] sm:$0xff]
    %v2492 = vld [vmem:[#allocation22 + $0x90] sm:$0xff]
    %v2493 = vld [vmem:[#allocation22 + $0x98] sm:$0xff]
    %v2494 = vld [vmem:[#allocation22 + $0xa0] sm:$0xff]
    %v2495 = vld [vmem:[#allocation22 + $0xa8] sm:$0xff]
    %v2496 = vld [vmem:[#allocation22 + $0xb0] sm:$0xff]
    %v2497 = vld [vmem:[#allocation22 + $0xb8] sm:$0xff]
    %v2498 = vld [vmem:[#allocation22 + $0xc0] sm:$0xff]
    %v2499 = vld [vmem:[#allocation22 + $0xc8] sm:$0xff]
    %v2500 = vld [vmem:[#allocation22 + $0xd0] sm:$0xff]
    %v2501 = vld [vmem:[#allocation22 + $0xd8] sm:$0xff]
    %v2502 = vld [vmem:[#allocation22 + $0xe0] sm:$0xff]
    %v2503 = vld [vmem:[#allocation22 + $0xe8] sm:$0xff]
    %v2504 = vld [vmem:[#allocation22 + $0xf0] sm:$0xff]
    %v2505 = vld [vmem:[#allocation22 + $0xf8] sm:$0xff]
    %v2506 = vld [vmem:[#allocation22 + $0x100] sm:$0xff]
    %v2507 = vld [vmem:[#allocation22 + $0x108] sm:$0xff]
    %v2508 = vld [vmem:[#allocation22 + $0x110] sm:$0xff]
    %v2509 = vld [vmem:[#allocation22 + $0x118] sm:$0xff]
    %v2510 = vld [vmem:[#allocation22 + $0x120] sm:$0xff]
    %v2511 = vld [vmem:[#allocation22 + $0x128] sm:$0xff]
    %v2512 = vld [vmem:[#allocation22 + $0x130] sm:$0xff]
    %v2513 = vld [vmem:[#allocation22 + $0x138] sm:$0xff]
    %v2514 = vld [vmem:[#allocation22 + $0x140] sm:$0xff]
    %v2515 = vld [vmem:[#allocation22 + $0x148] sm:$0xff]
    %v2516 = vld [vmem:[#allocation22 + $0x150] sm:$0xff]
    %v2517 = vld [vmem:[#allocation22 + $0x158] sm:$0xff]
    %v2518 = vld [vmem:[#allocation22 + $0x160] sm:$0xff]
    %v2519 = vld [vmem:[#allocation22 + $0x168] sm:$0xff]
    %v2520 = vld [vmem:[#allocation22 + $0x170] sm:$0xff]
    %v2521 = vld [vmem:[#allocation22 + $0x178] sm:$0xff]
    %v2522 = vld [vmem:[#allocation22 + $0x180] sm:$0xff]
    %v2523 = vld [vmem:[#allocation22 + $0x188] sm:$0xff]
    %v2524 = vld [vmem:[#allocation22 + $0x190] sm:$0xff]
    %v2525 = vld [vmem:[#allocation22 + $0x198] sm:$0xff]
    %v2526 = vld [vmem:[#allocation22 + $0x1a0] sm:$0xff]
    %v2527 = vld [vmem:[#allocation22 + $0x1a8] sm:$0xff]
    %v2528 = vld [vmem:[#allocation22 + $0x1b0] sm:$0xff]
    %v2529 = vld [vmem:[#allocation22 + $0x1b8] sm:$0xff]
    %v2530 = vld [vmem:[#allocation22 + $0x1c0] sm:$0xff]
    %v2531 = vld [vmem:[#allocation22 + $0x1c8] sm:$0xff]
    %v2532 = vld [vmem:[#allocation22 + $0x1d0] sm:$0xff]
    %v2533 = vld [vmem:[#allocation22 + $0x1d8] sm:$0xff]
    %v2534 = vld [vmem:[#allocation22 + $0x1e0] sm:$0xff]
    %v2535 = vld [vmem:[#allocation22 + $0x1e8] sm:$0xff]
    %v2536 = vld [vmem:[#allocation22 + $0x1f0] sm:$0xff]
    %v2537 = vld [vmem:[#allocation22 + $0x1f8] sm:$0xff]
    %v2538 = vld [vmem:[#allocation22 + $0x200] sm:$0xff]
    %v2539 = vld [vmem:[#allocation22 + $0x208] sm:$0xff]
    %v2540 = vld [vmem:[#allocation22 + $0x210] sm:$0xff]
    %v2541 = vld [vmem:[#allocation22 + $0x218] sm:$0xff]
    %v2542 = vld [vmem:[#allocation22 + $0x220] sm:$0xff]
    %v2543 = vld [vmem:[#allocation22 + $0x228] sm:$0xff]
    %v2544 = vld [vmem:[#allocation22 + $0x230] sm:$0xff]
    %v2545 = vld [vmem:[#allocation22 + $0x238] sm:$0xff]
    %v2546 = vld [vmem:[#allocation22 + $0x240] sm:$0xff]
    %v2547 = vld [vmem:[#allocation22 + $0x248] sm:$0xff]
    %v2548 = vld [vmem:[#allocation22 + $0x250] sm:$0xff]
    %v2549 = vld [vmem:[#allocation22 + $0x258] sm:$0xff]
    %v2550 = vld [vmem:[#allocation22 + $0x260] sm:$0xff]
    %v2551 = vld [vmem:[#allocation22 + $0x268] sm:$0xff]
    %v2552 = vld [vmem:[#allocation22 + $0x270] sm:$0xff]
    %v2553 = vld [vmem:[#allocation22 + $0x278] sm:$0xff]
    %v2554 = vld [vmem:[#allocation22 + $0x280] sm:$0xff]
    %v2555 = vld [vmem:[#allocation22 + $0x288] sm:$0xff]
    %v2556 = vld [vmem:[#allocation22 + $0x290] sm:$0xff]
    %v2557 = vld [vmem:[#allocation22 + $0x298] sm:$0xff]
    %v2558 = vld [vmem:[#allocation22 + $0x2a0] sm:$0xff]
    %v2559 = vld [vmem:[#allocation22 + $0x2a8] sm:$0xff]
    %v2560 = vld [vmem:[#allocation22 + $0x2b0] sm:$0xff]
    %v2561 = vld [vmem:[#allocation22 + $0x2b8] sm:$0xff]
    %v2562 = vld [vmem:[#allocation22 + $0x2c0] sm:$0xff]
    %v2563 = vld [vmem:[#allocation22 + $0x2c8] sm:$0xff]
    %v2564 = vld [vmem:[#allocation22 + $0x2d0] sm:$0xff]
    %v2565 = vld [vmem:[#allocation22 + $0x2d8] sm:$0xff]
    %v2566 = vld [vmem:[#allocation22 + $0x2e0] sm:$0xff]
    %v2567 = vld [vmem:[#allocation22 + $0x2e8] sm:$0xff]
    %v2568 = vld [vmem:[#allocation22 + $0x2f0] sm:$0xff]
    %v2569 = vld [vmem:[#allocation22 + $0x2f8] sm:$0xff]
    %v2570 = vld [vmem:[#allocation22 + $0x300] sm:$0xff]
    %v2571 = vld [vmem:[#allocation22 + $0x308] sm:$0xff]
    %v2572 = vld [vmem:[#allocation22 + $0x310] sm:$0xff]
    %v2573 = vld [vmem:[#allocation22 + $0x318] sm:$0xff]
    %v2574 = vld [vmem:[#allocation22 + $0x320] sm:$0xff]
    %v2575 = vld [vmem:[#allocation22 + $0x328] sm:$0xff]
    %v2576 = vld [vmem:[#allocation22 + $0x330] sm:$0xff]
    %v2577 = vld [vmem:[#allocation22 + $0x338] sm:$0xff]
    %v2578 = vld [vmem:[#allocation22 + $0x340] sm:$0xff]
    %v2579 = vld [vmem:[#allocation22 + $0x348] sm:$0xff]
    %v2580 = vld [vmem:[#allocation22 + $0x350] sm:$0xff]
    %v2581 = vld [vmem:[#allocation22 + $0x358] sm:$0xff]
    %v2582 = vld [vmem:[#allocation22 + $0x360] sm:$0xff]
    %v2583 = vld [vmem:[#allocation22 + $0x368] sm:$0xff]
    %v2584 = vld [vmem:[#allocation22 + $0x370] sm:$0xff]
    %v2585 = vld [vmem:[#allocation22 + $0x378] sm:$0xff]
    %v2586 = vld [vmem:[#allocation22 + $0x380] sm:$0xff]
    %v2587 = vld [vmem:[#allocation22 + $0x388] sm:$0xff]
    %v2588 = vld [vmem:[#allocation22 + $0x390] sm:$0xff]
    %v2589 = vld [vmem:[#allocation22 + $0x398] sm:$0xff]
    %v2590 = vld [vmem:[#allocation22 + $0x3a0] sm:$0xff]
    %v2591 = vld [vmem:[#allocation22 + $0x3a8] sm:$0xff]
    %v2592 = vld [vmem:[#allocation22 + $0x3b0] sm:$0xff]
    %v2593 = vld [vmem:[#allocation22 + $0x3b8] sm:$0xff]
    %v2594 = vld [vmem:[#allocation22 + $0x3c0] sm:$0xff]
    %v2595 = vld [vmem:[#allocation22 + $0x3c8] sm:$0xff]
    %v2596 = vld [vmem:[#allocation22 + $0x3d0] sm:$0xff]
    %v2597 = vld [vmem:[#allocation22 + $0x3d8] sm:$0xff]
    %v2598 = vld [vmem:[#allocation22 + $0x3e0] sm:$0xff]
    %v2599 = vld [vmem:[#allocation22 + $0x3e8] sm:$0xff]
    %v2600 = vld [vmem:[#allocation22 + $0x3f0] sm:$0xff]
    %v2601 = vld [vmem:[#allocation22 + $0x3f8] sm:$0xff]
    %v2602 = vld [vmem:[#allocation23] sm:$0x1]
    %v2604 = vlaneseq
    %v2605 = vshrl.u32 %v2604, 7
    %v2606 = vsub.s32 0, %v2605
    %v2607 = vrot.slane %v2602, %v2606
    %2609 = vmatprep.subr.mxu0 0.0
    %2610 = vmatpush1.msra.mxu0 %v2489
    %2611 = vmatprep.subr.mxu0 0.0
    %2612 = vmatpush1.msra.mxu0 %v2488
    %2613 = vmatprep.subr.mxu0 0.0
    %2614 = vmatpush1.msra.mxu0 %v2487
    %2615 = vmatprep.subr.mxu0 0.0
    %2616 = vmatpush1.msra.mxu0 %v2486
    %2617 = vmatprep.subr.mxu0 0.0
    %2618 = vmatpush1.msra.mxu0 %v2485
    %2619 = vmatprep.subr.mxu0 0.0
    %2620 = vmatpush1.msra.mxu0 %v2484
    %2621 = vmatprep.subr.mxu0 0.0
    %2622 = vmatpush1.msra.mxu0 %v2483
    %2623 = vmatprep.subr.mxu0 0.0
    %2624 = vmatpush1.msra.mxu0 %v2482
    %2625 = vmatprep.subr.mxu0 0.0
    %2626 = vmatpush1.msra.mxu0 %v2481
    %2627 = vmatprep.subr.mxu0 0.0
    %2628 = vmatpush1.msra.mxu0 %v2480
    %2629 = vmatprep.subr.mxu0 0.0
    %2630 = vmatpush1.msra.mxu0 %v2479
    %2631 = vmatprep.subr.mxu0 0.0
    %2632 = vmatpush1.msra.mxu0 %v2478
    %2633 = vmatprep.subr.mxu0 0.0
    %2634 = vmatpush1.msra.mxu0 %v2477
    %2635 = vmatprep.subr.mxu0 0.0
    %2636 = vmatpush1.msra.mxu0 %v2476
    %2637 = vmatprep.subr.mxu0 0.0
    %2638 = vmatpush1.msra.mxu0 %v2475
    %2639 = vmatprep.subr.mxu0 0.0
    %2640 = vmatpush1.msra.mxu0 %v2474
    %2641 = vmatprep.subr.mxu0 0.0
    %2642 = vmatpush2.msra.mxu0 %v2505
    %2643 = vmatprep.subr.mxu0 0.0
    %2644 = vmatpush2.msra.mxu0 %v2504
    %2645 = vmatprep.subr.mxu0 0.0
    %2646 = vmatpush2.msra.mxu0 %v2503
    %2647 = vmatprep.subr.mxu0 0.0
    %2648 = vmatpush2.msra.mxu0 %v2502
    %2649 = vmatprep.subr.mxu0 0.0
    %2650 = vmatpush2.msra.mxu0 %v2501
    %2651 = vmatprep.subr.mxu0 0.0
    %2652 = vmatpush2.msra.mxu0 %v2500
    %2653 = vmatprep.subr.mxu0 0.0
    %2654 = vmatpush2.msra.mxu0 %v2499
    %2655 = vmatprep.subr.mxu0 0.0
    %2656 = vmatpush2.msra.mxu0 %v2498
    %2657 = vmatprep.subr.mxu0 0.0
    %2658 = vmatpush2.msra.mxu0 %v2497
    %2659 = vmatprep.subr.mxu0 0.0
    %2660 = vmatpush2.msra.mxu0 %v2496
    %2661 = vmatprep.subr.mxu0 0.0
    %2662 = vmatpush2.msra.mxu0 %v2495
    %2663 = vmatprep.subr.mxu0 0.0
    %2664 = vmatpush2.msra.mxu0 %v2494
    %2665 = vmatprep.subr.mxu0 0.0
    %2666 = vmatpush2.msra.mxu0 %v2493
    %2667 = vmatprep.subr.mxu0 0.0
    %2668 = vmatpush2.msra.mxu0 %v2492
    %2669 = vmatprep.subr.mxu0 0.0
    %2670 = vmatpush2.msra.mxu0 %v2491
    %2671 = vmatprep.subr.mxu0 0.0
    %2672 = vmatpush2.msra.mxu0 %v2490
    %2673 = vmatprep.mubr.f32.mxu0 %v2467
    %2674 = vmatmul.mubr.f32.gmra.mxu0 %v2466
    %v2675 = vpop.f32.mrf.mxu0
    %v2676 = vadd.f32 %v2607, %v2675
    %v2677 = vpop.f32.mrf.mxu0
    %2678 = vdwg.mxu0
    %2679 = vmatprep.subr.mxu0 0.0
    %2680 = vmatpush1.msra.mxu0 %v2521
    %2681 = vmatprep.subr.mxu0 0.0
    %2682 = vmatpush1.msra.mxu0 %v2520
    %2683 = vmatprep.subr.mxu0 0.0
    %2684 = vmatpush1.msra.mxu0 %v2519
    %2685 = vmatprep.subr.mxu0 0.0
    %2686 = vmatpush1.msra.mxu0 %v2518
    %2687 = vmatprep.subr.mxu0 0.0
    %2688 = vmatpush1.msra.mxu0 %v2517
    %2689 = vmatprep.subr.mxu0 0.0
    %2690 = vmatpush1.msra.mxu0 %v2516
    %2691 = vmatprep.subr.mxu0 0.0
    %2692 = vmatpush1.msra.mxu0 %v2515
    %2693 = vmatprep.subr.mxu0 0.0
    %2694 = vmatpush1.msra.mxu0 %v2514
    %2695 = vmatprep.subr.mxu0 0.0
    %2696 = vmatpush1.msra.mxu0 %v2513
    %2697 = vmatprep.subr.mxu0 0.0
    %2698 = vmatpush1.msra.mxu0 %v2512
    %2699 = vmatprep.subr.mxu0 0.0
    %2700 = vmatpush1.msra.mxu0 %v2511
    %2701 = vmatprep.subr.mxu0 0.0
    %2702 = vmatpush1.msra.mxu0 %v2510
    %2703 = vmatprep.subr.mxu0 0.0
    %2704 = vmatpush1.msra.mxu0 %v2509
    %2705 = vmatprep.subr.mxu0 0.0
    %2706 = vmatpush1.msra.mxu0 %v2508
    %2707 = vmatprep.subr.mxu0 0.0
    %2708 = vmatpush1.msra.mxu0 %v2507
    %2709 = vmatprep.subr.mxu0 0.0
    %2710 = vmatpush1.msra.mxu0 %v2506
    %2711 = vmatprep.subr.mxu0 0.0
    %2712 = vmatpush2.msra.mxu0 %v2537
    %2713 = vmatprep.subr.mxu0 0.0
    %2714 = vmatpush2.msra.mxu0 %v2536
    %2715 = vmatprep.subr.mxu0 0.0
    %2716 = vmatpush2.msra.mxu0 %v2535
    %2717 = vmatprep.subr.mxu0 0.0
    %2718 = vmatpush2.msra.mxu0 %v2534
    %2719 = vmatprep.subr.mxu0 0.0
    %2720 = vmatpush2.msra.mxu0 %v2533
    %2721 = vmatprep.subr.mxu0 0.0
    %2722 = vmatpush2.msra.mxu0 %v2532
    %2723 = vmatprep.subr.mxu0 0.0
    %2724 = vmatpush2.msra.mxu0 %v2531
    %2725 = vmatprep.subr.mxu0 0.0
    %2726 = vmatpush2.msra.mxu0 %v2530
    %2727 = vmatprep.subr.mxu0 0.0
    %2728 = vmatpush2.msra.mxu0 %v2529
    %2729 = vmatprep.subr.mxu0 0.0
    %2730 = vmatpush2.msra.mxu0 %v2528
    %2731 = vmatprep.subr.mxu0 0.0
    %2732 = vmatpush2.msra.mxu0 %v2527
    %2733 = vmatprep.subr.mxu0 0.0
    %2734 = vmatpush2.msra.mxu0 %v2526
    %2735 = vmatprep.subr.mxu0 0.0
    %2736 = vmatpush2.msra.mxu0 %v2525
    %2737 = vmatprep.subr.mxu0 0.0
    %2738 = vmatpush2.msra.mxu0 %v2524
    %2739 = vmatprep.subr.mxu0 0.0
    %2740 = vmatpush2.msra.mxu0 %v2523
    %2741 = vmatprep.subr.mxu0 0.0
    %2742 = vmatpush2.msra.mxu0 %v2522
    %2743 = vmatprep.mubr.f32.mxu0 %v2469
    %2744 = vmatmul.mubr.f32.gmra.mxu0 %v2468
    %v2745 = vpop.f32.mrf.mxu0
    %v2746 = vadd.f32 %v2676, %v2745
    %v2747 = vpop.f32.mrf.mxu0
    %2748 = vdwg.mxu0
    %2749 = vmatprep.subr.mxu0 0.0
    %2750 = vmatpush1.msra.mxu0 %v2553
    %2751 = vmatprep.subr.mxu0 0.0
    %2752 = vmatpush1.msra.mxu0 %v2552
    %2753 = vmatprep.subr.mxu0 0.0
    %2754 = vmatpush1.msra.mxu0 %v2551
    %2755 = vmatprep.subr.mxu0 0.0
    %2756 = vmatpush1.msra.mxu0 %v2550
    %2757 = vmatprep.subr.mxu0 0.0
    %2758 = vmatpush1.msra.mxu0 %v2549
    %2759 = vmatprep.subr.mxu0 0.0
    %2760 = vmatpush1.msra.mxu0 %v2548
    %2761 = vmatprep.subr.mxu0 0.0
    %2762 = vmatpush1.msra.mxu0 %v2547
    %2763 = vmatprep.subr.mxu0 0.0
    %2764 = vmatpush1.msra.mxu0 %v2546
    %2765 = vmatprep.subr.mxu0 0.0
    %2766 = vmatpush1.msra.mxu0 %v2545
    %2767 = vmatprep.subr.mxu0 0.0
    %2768 = vmatpush1.msra.mxu0 %v2544
    %2769 = vmatprep.subr.mxu0 0.0
    %2770 = vmatpush1.msra.mxu0 %v2543
    %2771 = vmatprep.subr.mxu0 0.0
    %2772 = vmatpush1.msra.mxu0 %v2542
    %2773 = vmatprep.subr.mxu0 0.0
    %2774 = vmatpush1.msra.mxu0 %v2541
    %2775 = vmatprep.subr.mxu0 0.0
    %2776 = vmatpush1.msra.mxu0 %v2540
    %2777 = vmatprep.subr.mxu0 0.0
    %2778 = vmatpush1.msra.mxu0 %v2539
    %2779 = vmatprep.subr.mxu0 0.0
    %2780 = vmatpush1.msra.mxu0 %v2538
    %2781 = vmatprep.subr.mxu0 0.0
    %2782 = vmatpush2.msra.mxu0 %v2569
    %2783 = vmatprep.subr.mxu0 0.0
    %2784 = vmatpush2.msra.mxu0 %v2568
    %2785 = vmatprep.subr.mxu0 0.0
    %2786 = vmatpush2.msra.mxu0 %v2567
    %2787 = vmatprep.subr.mxu0 0.0
    %2788 = vmatpush2.msra.mxu0 %v2566
    %2789 = vmatprep.subr.mxu0 0.0
    %2790 = vmatpush2.msra.mxu0 %v2565
    %2791 = vmatprep.subr.mxu0 0.0
    %2792 = vmatpush2.msra.mxu0 %v2564
    %2793 = vmatprep.subr.mxu0 0.0
    %2794 = vmatpush2.msra.mxu0 %v2563
    %2795 = vmatprep.subr.mxu0 0.0
    %2796 = vmatpush2.msra.mxu0 %v2562
    %2797 = vmatprep.subr.mxu0 0.0
    %2798 = vmatpush2.msra.mxu0 %v2561
    %2799 = vmatprep.subr.mxu0 0.0
    %2800 = vmatpush2.msra.mxu0 %v2560
    %2801 = vmatprep.subr.mxu0 0.0
    %2802 = vmatpush2.msra.mxu0 %v2559
    %2803 = vmatprep.subr.mxu0 0.0
    %2804 = vmatpush2.msra.mxu0 %v2558
    %2805 = vmatprep.subr.mxu0 0.0
    %2806 = vmatpush2.msra.mxu0 %v2557
    %2807 = vmatprep.subr.mxu0 0.0
    %2808 = vmatpush2.msra.mxu0 %v2556
    %2809 = vmatprep.subr.mxu0 0.0
    %2810 = vmatpush2.msra.mxu0 %v2555
    %2811 = vmatprep.subr.mxu0 0.0
    %2812 = vmatpush2.msra.mxu0 %v2554
    %2813 = vmatprep.mubr.f32.mxu0 %v2471
    %2814 = vmatmul.mubr.f32.gmra.mxu0 %v2470
    %v2815 = vpop.f32.mrf.mxu0
    %v2816 = vadd.f32 %v2746, %v2815
    %v2817 = vpop.f32.mrf.mxu0
    %2818 = vdwg.mxu0
    %2819 = vmatprep.subr.mxu0 0.0
    %2820 = vmatpush1.msra.mxu0 %v2585
    %2821 = vmatprep.subr.mxu0 0.0
    %2822 = vmatpush1.msra.mxu0 %v2584
    %2823 = vmatprep.subr.mxu0 0.0
    %2824 = vmatpush1.msra.mxu0 %v2583
    %2825 = vmatprep.subr.mxu0 0.0
    %2826 = vmatpush1.msra.mxu0 %v2582
    %2827 = vmatprep.subr.mxu0 0.0
    %2828 = vmatpush1.msra.mxu0 %v2581
    %2829 = vmatprep.subr.mxu0 0.0
    %2830 = vmatpush1.msra.mxu0 %v2580
    %2831 = vmatprep.subr.mxu0 0.0
    %2832 = vmatpush1.msra.mxu0 %v2579
    %2833 = vmatprep.subr.mxu0 0.0
    %2834 = vmatpush1.msra.mxu0 %v2578
    %2835 = vmatprep.subr.mxu0 0.0
    %2836 = vmatpush1.msra.mxu0 %v2577
    %2837 = vmatprep.subr.mxu0 0.0
    %2838 = vmatpush1.msra.mxu0 %v2576
    %2839 = vmatprep.subr.mxu0 0.0
    %2840 = vmatpush1.msra.mxu0 %v2575
    %2841 = vmatprep.subr.mxu0 0.0
    %2842 = vmatpush1.msra.mxu0 %v2574
    %2843 = vmatprep.subr.mxu0 0.0
    %2844 = vmatpush1.msra.mxu0 %v2573
    %2845 = vmatprep.subr.mxu0 0.0
    %2846 = vmatpush1.msra.mxu0 %v2572
    %2847 = vmatprep.subr.mxu0 0.0
    %2848 = vmatpush1.msra.mxu0 %v2571
    %2849 = vmatprep.subr.mxu0 0.0
    %2850 = vmatpush1.msra.mxu0 %v2570
    %2851 = vmatprep.subr.mxu0 0.0
    %2852 = vmatpush2.msra.mxu0 %v2601
    %2853 = vmatprep.subr.mxu0 0.0
    %2854 = vmatpush2.msra.mxu0 %v2600
    %2855 = vmatprep.subr.mxu0 0.0
    %2856 = vmatpush2.msra.mxu0 %v2599
    %2857 = vmatprep.subr.mxu0 0.0
    %2858 = vmatpush2.msra.mxu0 %v2598
    %2859 = vmatprep.subr.mxu0 0.0
    %2860 = vmatpush2.msra.mxu0 %v2597
    %2861 = vmatprep.subr.mxu0 0.0
    %2862 = vmatpush2.msra.mxu0 %v2596
    %2863 = vmatprep.subr.mxu0 0.0
    %2864 = vmatpush2.msra.mxu0 %v2595
    %2865 = vmatprep.subr.mxu0 0.0
    %2866 = vmatpush2.msra.mxu0 %v2594
    %2867 = vmatprep.subr.mxu0 0.0
    %2868 = vmatpush2.msra.mxu0 %v2593
    %2869 = vmatprep.subr.mxu0 0.0
    %2870 = vmatpush2.msra.mxu0 %v2592
    %2871 = vmatprep.subr.mxu0 0.0
    %2872 = vmatpush2.msra.mxu0 %v2591
    %2873 = vmatprep.subr.mxu0 0.0
    %2874 = vmatpush2.msra.mxu0 %v2590
    %2875 = vmatprep.subr.mxu0 0.0
    %2876 = vmatpush2.msra.mxu0 %v2589
    %2877 = vmatprep.subr.mxu0 0.0
    %2878 = vmatpush2.msra.mxu0 %v2588
    %2879 = vmatprep.subr.mxu0 0.0
    %2880 = vmatpush2.msra.mxu0 %v2587
    %2881 = vmatprep.subr.mxu0 0.0
    %2882 = vmatpush2.msra.mxu0 %v2586
    %2883 = vmatprep.mubr.f32.mxu0 %v2473
    %2884 = vmatmul.mubr.f32.gmra.mxu0 %v2472
    %v2885 = vpop.f32.mrf.mxu0
    %v2886 = vadd.f32 %v2816, %v2885
    %v2887 = vpop.f32.mrf.mxu0
    %2888 = vdwg.mxu0
    %2889 = vst [vmem:[#allocation25] sm:$0xff] %v2886
    // Predicated region
    $region114: #{generator_pallas.1} parent=1 // pred_check
      _
    $region115: #{generator_pallas.1} parent=1 // pred_check_branch
      %2891 = sbr.rel (0) target = $region117
    $region116: #{generator_pallas.1} parent=1 // pred_region
      %s2893 = ssub.s32 128, 128
      %2894 = vsyncadd [#allocation4], %s2893
      %s2896 = sshll.u32 [#allocation25], 4
      %s2897 = int_to_ptr.vmem [resolvable:$true] %s2896
      %2899 = dma.vmem_to_hbm [thread:$0]  %s2897, 128, %s14, [#allocation4]
    $region117: #{generator_pallas.1} parent=1 // pred_fallthru
      _
    // Predicated region
    $region118: #{generator_pallas.1} parent=1 // pred_check
      _
    $region119: #{generator_pallas.1} parent=1 // pred_check_branch
      %2901 = sbr.rel (0) target = $region121
    $region120: #{generator_pallas.1} parent=1 // pred_region
      %2902 = dma.done [#allocation4], 128
    $region121: #{generator_pallas.1} parent=1 // pred_fallthru
      _
    %2903 = vsyncpa [#allocation3], 1
    %2904 = vsyncpa [#allocation6], 1
    %2905 = vsyncpa [#allocation9], 1
    %2906 = vsyncpa [#allocation12], 1
    %2907 = vsyncpa [#allocation15], 1
    %2908 = vsyncpa [#allocation18], 1
    %2909 = vsyncpa [#allocation21], 1
    %2910 = vsyncpa [#allocation24], 1
    %2911 = vsyncpa [#allocation4], 1

</llo_original>
